<compile_context>
chip_gen: v7x
topology: tpu7x:2x2x1
jax: 0.10.0
libtpu: 0.0.40
codegen_flags: <defaults>
</compile_context>

<pallas_src>
import functools

import jax
import jax.numpy as jnp
from jax.experimental import pallas as pl
from jax.experimental.pallas import tpu as pltpu


# ----------------------------- fused kernel ----------------------------------


def _spatial_transformer_kernel(
    x_ref,                                            # (1, N, C) original tokens
    gn_g_ref, gn_b_ref, gmat_ref, gmatT_ref,          # GroupNorm params / group map
    pin_w_ref, pin_b_ref,                             # proj_in (1x1 conv)
    ln1_g_ref, ln1_b_ref, a1_wq_ref, a1_wk_ref, a1_wv_ref, a1_wo_ref, a1_bo_ref,
    ln2_g_ref, ln2_b_ref, a2_wq_ref, a2_wk_ref, a2_wv_ref, a2_wo_ref, a2_bo_ref,
    ln3_g_ref, ln3_b_ref, ff_w1_ref, ff_b1_ref, ff_w2_ref, ff_b2_ref,
    pout_w_ref, pout_b_ref,                           # proj_out (zero-init 1x1 conv)
    o_ref,                                            # (1, N, C) output
    attn_scratch,                                     # VMEM (N, inner) bf16
    *, heads, dim_head, ch_per_group, gn_eps, ln_eps):
  f32 = jnp.float32
  bf16 = jnp.bfloat16

  x_in = x_ref[0]                                     # (N, C) f32
  n = x_in.shape[0]

  # ---- GroupNorm(32, C): two-pass centered statistics, all f32 --------------
  gmat = gmat_ref[...]                                # (C, G) one-hot group map
  gmat_t = gmatT_ref[...]                             # (G, C)
  cnt = jnp.float32(n * ch_per_group)
  csum = jnp.sum(x_in, axis=0, keepdims=True)         # (1, C)
  mean_g = jnp.dot(csum, gmat, preferred_element_type=f32) / cnt      # (1, G)
  mean_c = jnp.dot(mean_g, gmat_t, preferred_element_type=f32)        # (1, C)
  xc = x_in - mean_c
  csq = jnp.sum(xc * xc, axis=0, keepdims=True)
  var_g = jnp.dot(csq, gmat, preferred_element_type=f32) / cnt
  inv_c = jnp.dot(jax.lax.rsqrt(var_g + gn_eps), gmat_t,
                  preferred_element_type=f32)
  xn = xc * inv_c * gn_g_ref[...] + gn_b_ref[...]

  # ---- proj_in (1x1 conv == channel matmul): bf16 operands, f32 accumulate --
  x = (jnp.dot(xn.astype(bf16), pin_w_ref[...], preferred_element_type=f32)
       + pin_b_ref[...])                              # (N, inner) f32

  def layer_norm(h, g_ref, b_ref):
    mu = jnp.mean(h, axis=-1, keepdims=True)
    hc = h - mu
    var = jnp.mean(hc * hc, axis=-1, keepdims=True)
    return hc * jax.lax.rsqrt(var + ln_eps) * g_ref[...] + b_ref[...]

  scale = dim_head ** (-0.5)

  def self_attention(h, wq_ref, wk_ref, wv_ref, wo_ref, bo_ref):
    hb = h.astype(bf16)
    # Fold the softmax scale into q once (N*inner mults instead of N*N per head).
    q = jnp.dot(hb, wq_ref[...], preferred_element_type=f32) * scale
    k = jnp.dot(hb, wk_ref[...], preferred_element_type=f32)
    v = jnp.dot(hb, wv_ref[...], preferred_element_type=f32)
    # Static per-head loop (few heads at test size).  Each head's output is
    # written side-by-side into VMEM scratch so to_out is one full-K matmul.
    for hd in range(heads):
      sl = slice(hd * dim_head, (hd + 1) * dim_head)
      sim = jax.lax.dot_general(                       # (N, N) = q_h @ k_h^T
          q[:, sl].astype(bf16), k[:, sl].astype(bf16),
          (((1,), (1,)), ((), ())), preferred_element_type=f32)
      sim = sim - jnp.max(sim, axis=-1, keepdims=True)
      p = jnp.exp(sim)
      p = p * pl.reciprocal(jnp.sum(p, axis=-1, keepdims=True), approx=True)
      oh = jnp.dot(p.astype(bf16), v[:, sl].astype(bf16),
                   preferred_element_type=f32)         # (N, dim_head)
      attn_scratch[:, sl] = oh.astype(bf16)
    # Single (N, inner) @ (inner, inner) output projection (full-K MXU matmul).
    return (jnp.dot(attn_scratch[...], wo_ref[...], preferred_element_type=f32)
            + bo_ref[...])

  # attn1: x = attn1(norm1(x)) + x   (context=None -> self-attention)
  x = self_attention(layer_norm(x, ln1_g_ref, ln1_b_ref),
                     a1_wq_ref, a1_wk_ref, a1_wv_ref, a1_wo_ref, a1_bo_ref) + x
  # attn2: x = attn2(norm2(x), context=None) + x  (context None -> self)
  x = self_attention(layer_norm(x, ln2_g_ref, ln2_b_ref),
                     a2_wq_ref, a2_wk_ref, a2_wv_ref, a2_wo_ref, a2_bo_ref) + x

  # ---- FeedForward (GEGLU), fully fused: x = W2(val * gelu(gate)) + b2 + x --
  hn = layer_norm(x, ln3_g_ref, ln3_b_ref)
  proj = (jnp.dot(hn.astype(bf16), ff_w1_ref[...], preferred_element_type=f32)
          + ff_b1_ref[...])                            # (N, 2*ff_inner)
  ffi = proj.shape[-1] // 2
  val, gate = proj[:, :ffi], proj[:, ffi:]
  # TODO(synk): tanh-approximate GELU (EUP tanh); torch default is exact erf GELU.
  gelu = 0.5 * gate * (1.0 + jnp.tanh(
      0.7978845608028654 * (gate + 0.044715 * gate * gate * gate)))
  x = (jnp.dot((val * gelu).astype(bf16), ff_w2_ref[...],
               preferred_element_type=f32)
       + ff_b2_ref[...] + x)

  # ---- proj_out (zero-initialized 1x1 conv) + residual with original input --
  o_ref[0] = (jnp.dot(x.astype(bf16), pout_w_ref[...],
                      preferred_element_type=f32)
              + pout_b_ref[...] + x_in)


# ----------------------------- wrapper ---------------------------------------


def init_params(key, in_channels, n_heads, d_head):
  inner = n_heads * d_head
  ffi = inner * 4
  ks = jax.random.split(key, 16)
  f32 = jnp.float32

  def w(k, shape, scale=0.05):
    return jax.random.normal(k, shape, f32) * scale

  p = {}
  # GroupNorm(32, in_channels) affine params (torch init: ones / zeros)
  p["gn_gamma"] = jnp.ones((1, in_channels), f32)
  p["gn_beta"] = jnp.zeros((1, in_channels), f32)
  # proj_in: Conv2d(in_channels, inner, 1) -> (C, inner) matmul + bias
  p["proj_in_w"] = w(ks[0], (in_channels, inner))
  p["proj_in_b"] = w(ks[1], (1, inner))
  # BasicTransformerBlock (depth=1)
  p["ln1_g"] = jnp.ones((1, inner), f32); p["ln1_b"] = jnp.zeros((1, inner), f32)
  p["a1_wq"] = w(ks[2], (inner, inner)); p["a1_wk"] = w(ks[3], (inner, inner))
  p["a1_wv"] = w(ks[4], (inner, inner)); p["a1_wo"] = w(ks[5], (inner, inner))
  p["a1_bo"] = w(ks[6], (1, inner))
  p["ln2_g"] = jnp.ones((1, inner), f32); p["ln2_b"] = jnp.zeros((1, inner), f32)
  p["a2_wq"] = w(ks[7], (inner, inner)); p["a2_wk"] = w(ks[8], (inner, inner))
  p["a2_wv"] = w(ks[9], (inner, inner)); p["a2_wo"] = w(ks[10], (inner, inner))
  p["a2_bo"] = w(ks[11], (1, inner))
  p["ln3_g"] = jnp.ones((1, inner), f32); p["ln3_b"] = jnp.zeros((1, inner), f32)
  # FeedForward(glu=True): GEGLU Linear(inner, 2*ff_inner) ; Linear(ff_inner, inner)
  p["ff_w1"] = w(ks[12], (inner, 2 * ffi)); p["ff_b1"] = w(ks[13], (1, 2 * ffi))
  p["ff_w2"] = w(ks[14], (ffi, inner));     p["ff_b2"] = w(ks[15], (1, inner))
  # proj_out is zero_module(Conv2d(inner, in_channels, 1)) -> zeros, per __init__
  p["proj_out_w"] = jnp.zeros((inner, in_channels), f32)
  p["proj_out_b"] = jnp.zeros((1, in_channels), f32)
  return p


def spatial_transformer(x_nchw, p, *, n_heads, d_head, num_groups=32):
  B, C, H, W = x_nchw.shape
  N = H * W
  inner = n_heads * d_head
  ffi = inner * 4
  f32, bf16 = jnp.float32, jnp.bfloat16

  # NCHW -> (B, N, C) token layout  ('b c h w -> b (h w) c')
  x_tok = jnp.transpose(x_nchw, (0, 2, 3, 1)).reshape(B, N, C)

  # one-hot channel->group map for in-kernel group reductions
  cg = C // num_groups
  gids = jnp.arange(C) // cg
  gmat = (gids[:, None] == jnp.arange(num_groups)[None, :]).astype(f32)

  # All matmul weights are cast to bf16 once here (f32 accumulation in-kernel).
  args = [
      x_tok,
      p["gn_gamma"], p["gn_beta"], gmat, gmat.T,
      p["proj_in_w"].astype(bf16), p["proj_in_b"],
      p["ln1_g"], p["ln1_b"],
      p["a1_wq"].astype(bf16), p["a1_wk"].astype(bf16),
      p["a1_wv"].astype(bf16), p["a1_wo"].astype(bf16), p["a1_bo"],
      p["ln2_g"], p["ln2_b"],
      p["a2_wq"].astype(bf16), p["a2_wk"].astype(bf16),
      p["a2_wv"].astype(bf16), p["a2_wo"].astype(bf16), p["a2_bo"],
      p["ln3_g"], p["ln3_b"],
      p["ff_w1"].astype(bf16), p["ff_b1"],
      p["ff_w2"].astype(bf16), p["ff_b2"],
      p["proj_out_w"].astype(bf16), p["proj_out_b"],
  ]

  in_specs = [pl.BlockSpec((1, N, C), lambda b: (b, 0, 0))]
  # Broadcast weights: full-array blocks with constant index maps (their blocks
  # never change across grid steps; VMEM usage is tiny at these shapes).
  in_specs += [pl.BlockSpec(a.shape, lambda b, _nd=a.ndim: (0,) * _nd)
               for a in args[1:]]

  # Advisory cost estimate for the XLA scheduler.
  mm_flops = (2 * N * C * inner                    # proj_in
              + 2 * (3 * 2 * N * inner * inner)    # q/k/v (two attn blocks)
              + 2 * (2 * 2 * N * N * inner)        # qk^T + p@v (two attn blocks)
              + 2 * (2 * N * inner * inner)        # to_out (two attn blocks)
              + 2 * N * inner * (2 * ffi)          # GEGLU projection
              + 2 * N * ffi * inner                # ff output projection
              + 2 * N * inner * C)                 # proj_out
  weight_bytes = sum(int(a.size) * a.dtype.itemsize for a in args[1:])
  cost = pl.CostEstimate(
      flops=B * mm_flops,
      transcendentals=B * (2 * n_heads * N * N + N * ffi),
      bytes_accessed=2 * B * N * C * 4 + weight_bytes)

  kernel = functools.partial(
      _spatial_transformer_kernel,
      heads=n_heads, dim_head=d_head, ch_per_group=cg,
      gn_eps=1e-6, ln_eps=1e-5)

  out_tok = pl.pallas_call(
      kernel,
      out_shape=jax.ShapeDtypeStruct((B, N, C), f32),
      grid=(B,),
      in_specs=in_specs,
      out_specs=pl.BlockSpec((1, N, C), lambda b: (b, 0, 0)),
      scratch_shapes=[pltpu.VMEM((N, inner), bf16)],
      compiler_params=pltpu.CompilerParams(
          dimension_semantics=("parallel",),
          vmem_limit_bytes=32 * 1024 * 1024),
      cost_estimate=cost,
  )(*args)

  # (B, N, C) -> NCHW  ('b (h w) c -> b c h w')
  return jnp.transpose(out_tok.reshape(B, H, W, C), (0, 3, 1, 2))


if __name__ == "__main__":
  # GroupNorm(32, C) requires C % 32 == 0; C = inner = 128 keeps every matmul
  # output a full 128-lane store and d_head = 64 keeps MXU contractions wide.
  B, C, H, W = 2, 128, 8, 8
  n_heads, d_head = 2, 64          # inner_dim = 128

  key = jax.random.PRNGKey(0)
  kx, kp = jax.random.split(key)
  x = jax.random.normal(kx, (B, C, H, W), jnp.float32)
  params = init_params(kp, C, n_heads, d_head)

  fwd = jax.jit(functools.partial(spatial_transformer,
                                  n_heads=n_heads, d_head=d_head))
  out = fwd(x, params)
  jax.block_until_ready(out)
  assert out.shape == (B, C, H, W) and out.dtype == jnp.float32
  print("KERNEL_OK")
</pallas_src>

<mosaic_0001>
module attributes {stable_mosaic.version = 11 : i64} {
  func.func @_spatial_transformer_kernel(%arg0: i32, %arg1: memref<1x64x128xf32, #tpu.memory_space<vmem>>, %arg2: memref<1x128xf32, #tpu.memory_space<vmem>>, %arg3: memref<1x128xf32, #tpu.memory_space<vmem>>, %arg4: memref<128x32xf32, #tpu.memory_space<vmem>>, %arg5: memref<32x128xf32, #tpu.memory_space<vmem>>, %arg6: memref<128x128xbf16, #tpu.memory_space<vmem>>, %arg7: memref<1x128xf32, #tpu.memory_space<vmem>>, %arg8: memref<1x128xf32, #tpu.memory_space<vmem>>, %arg9: memref<1x128xf32, #tpu.memory_space<vmem>>, %arg10: memref<128x128xbf16, #tpu.memory_space<vmem>>, %arg11: memref<128x128xbf16, #tpu.memory_space<vmem>>, %arg12: memref<128x128xbf16, #tpu.memory_space<vmem>>, %arg13: memref<128x128xbf16, #tpu.memory_space<vmem>>, %arg14: memref<1x128xf32, #tpu.memory_space<vmem>>, %arg15: memref<1x128xf32, #tpu.memory_space<vmem>>, %arg16: memref<1x128xf32, #tpu.memory_space<vmem>>, %arg17: memref<128x128xbf16, #tpu.memory_space<vmem>>, %arg18: memref<128x128xbf16, #tpu.memory_space<vmem>>, %arg19: memref<128x128xbf16, #tpu.memory_space<vmem>>, %arg20: memref<128x128xbf16, #tpu.memory_space<vmem>>, %arg21: memref<1x128xf32, #tpu.memory_space<vmem>>, %arg22: memref<1x128xf32, #tpu.memory_space<vmem>>, %arg23: memref<1x128xf32, #tpu.memory_space<vmem>>, %arg24: memref<128x1024xbf16, #tpu.memory_space<vmem>>, %arg25: memref<1x1024xf32, #tpu.memory_space<vmem>>, %arg26: memref<512x128xbf16, #tpu.memory_space<vmem>>, %arg27: memref<1x128xf32, #tpu.memory_space<vmem>>, %arg28: memref<128x128xbf16, #tpu.memory_space<vmem>>, %arg29: memref<1x128xf32, #tpu.memory_space<vmem>>, %arg30: memref<1x64x128xf32, #tpu.memory_space<vmem>>, %arg31: memref<64x128xbf16, #tpu.memory_space<vmem>>) attributes {dimension_semantics = [#tpu.dimension_semantics<parallel>], iteration_bounds = array<i64: 2>, scalar_prefetch = 0 : i64, scratch_operands = 1 : i64, tpu.core_type = #tpu.core_type<tc>, window_params = [{transform_indices = @transform_0, window_bounds = array<i64: 1, 64, 128>}, {pipeline_mode = #tpu.pipeline_mode<synchronous>, transform_indices = @transform_1, window_bounds = array<i64: 1, 128>}, {pipeline_mode = #tpu.pipeline_mode<synchronous>, transform_indices = @transform_2, window_bounds = array<i64: 1, 128>}, {pipeline_mode = #tpu.pipeline_mode<synchronous>, transform_indices = @transform_3, window_bounds = array<i64: 128, 32>}, {pipeline_mode = #tpu.pipeline_mode<synchronous>, transform_indices = @transform_4, window_bounds = array<i64: 32, 128>}, {pipeline_mode = #tpu.pipeline_mode<synchronous>, transform_indices = @transform_5, window_bounds = array<i64: 128, 128>}, {pipeline_mode = #tpu.pipeline_mode<synchronous>, transform_indices = @transform_6, window_bounds = array<i64: 1, 128>}, {pipeline_mode = #tpu.pipeline_mode<synchronous>, transform_indices = @transform_7, window_bounds = array<i64: 1, 128>}, {pipeline_mode = #tpu.pipeline_mode<synchronous>, transform_indices = @transform_8, window_bounds = array<i64: 1, 128>}, {pipeline_mode = #tpu.pipeline_mode<synchronous>, transform_indices = @transform_9, window_bounds = array<i64: 128, 128>}, {pipeline_mode = #tpu.pipeline_mode<synchronous>, transform_indices = @transform_10, window_bounds = array<i64: 128, 128>}, {pipeline_mode = #tpu.pipeline_mode<synchronous>, transform_indices = @transform_11, window_bounds = array<i64: 128, 128>}, {pipeline_mode = #tpu.pipeline_mode<synchronous>, transform_indices = @transform_12, window_bounds = array<i64: 128, 128>}, {pipeline_mode = #tpu.pipeline_mode<synchronous>, transform_indices = @transform_13, window_bounds = array<i64: 1, 128>}, {pipeline_mode = #tpu.pipeline_mode<synchronous>, transform_indices = @transform_14, window_bounds = array<i64: 1, 128>}, {pipeline_mode = #tpu.pipeline_mode<synchronous>, transform_indices = @transform_15, window_bounds = array<i64: 1, 128>}, {pipeline_mode = #tpu.pipeline_mode<synchronous>, transform_indices = @transform_16, window_bounds = array<i64: 128, 128>}, {pipeline_mode = #tpu.pipeline_mode<synchronous>, transform_indices = @transform_17, window_bounds = array<i64: 128, 128>}, {pipeline_mode = #tpu.pipeline_mode<synchronous>, transform_indices = @transform_18, window_bounds = array<i64: 128, 128>}, {pipeline_mode = #tpu.pipeline_mode<synchronous>, transform_indices = @transform_19, window_bounds = array<i64: 128, 128>}, {pipeline_mode = #tpu.pipeline_mode<synchronous>, transform_indices = @transform_20, window_bounds = array<i64: 1, 128>}, {pipeline_mode = #tpu.pipeline_mode<synchronous>, transform_indices = @transform_21, window_bounds = array<i64: 1, 128>}, {pipeline_mode = #tpu.pipeline_mode<synchronous>, transform_indices = @transform_22, window_bounds = array<i64: 1, 128>}, {pipeline_mode = #tpu.pipeline_mode<synchronous>, transform_indices = @transform_23, window_bounds = array<i64: 128, 1024>}, {pipeline_mode = #tpu.pipeline_mode<synchronous>, transform_indices = @transform_24, window_bounds = array<i64: 1, 1024>}, {pipeline_mode = #tpu.pipeline_mode<synchronous>, transform_indices = @transform_25, window_bounds = array<i64: 512, 128>}, {pipeline_mode = #tpu.pipeline_mode<synchronous>, transform_indices = @transform_26, window_bounds = array<i64: 1, 128>}, {pipeline_mode = #tpu.pipeline_mode<synchronous>, transform_indices = @transform_27, window_bounds = array<i64: 128, 128>}, {pipeline_mode = #tpu.pipeline_mode<synchronous>, transform_indices = @transform_28, window_bounds = array<i64: 1, 128>}, {transform_indices = @transform_29, window_bounds = array<i64: 1, 64, 128>}]} {
    %c0 = arith.constant 0 : index
    %c0_0 = arith.constant 0 : index
    %c0_1 = arith.constant 0 : index
    %0 = vector.load %arg1[%c0, %c0_0, %c0_1] : memref<1x64x128xf32, #tpu.memory_space<vmem>>, vector<1x64x128xf32>
    %1 = vector.shape_cast %0 : vector<1x64x128xf32> to vector<64x128xf32>
    %c0_2 = arith.constant 0 : index
    %c0_3 = arith.constant 0 : index
    %2 = vector.load %arg4[%c0_2, %c0_3] : memref<128x32xf32, #tpu.memory_space<vmem>>, vector<128x32xf32>
    %c0_4 = arith.constant 0 : index
    %c0_5 = arith.constant 0 : index
    %3 = vector.load %arg5[%c0_4, %c0_5] : memref<32x128xf32, #tpu.memory_space<vmem>>, vector<32x128xf32>
    %cst = arith.constant dense<0.000000e+00> : vector<128xf32>
    %4 = vector.multi_reduction <add>, %1, %cst [0] : vector<64x128xf32> to vector<128xf32>
    %5 = vector.shape_cast %4 : vector<128xf32> to vector<1x128xf32>
    %cst_6 = arith.constant dense<0.000000e+00> : vector<1x32xf32>
    %6 = tpu.matmul %5, %2, %cst_6 {dimension_numbers = #tpu.dot_dimension_numbers<[1], [0], [0], [1], [0, 0, 1, 1], [], []>} : vector<1x128xf32>, vector<128x32xf32>, vector<1x32xf32> -> vector<1x32xf32>
    %cst_7 = arith.constant 2.560000e+02 : f32
    %7 = vector.broadcast %cst_7 : f32 to vector<1x32xf32>
    %8 = arith.divf %6, %7 : vector<1x32xf32>
    %cst_8 = arith.constant dense<0.000000e+00> : vector<1x128xf32>
    %9 = tpu.matmul %8, %3, %cst_8 {dimension_numbers = #tpu.dot_dimension_numbers<[1], [0], [0], [1], [0, 0, 1, 1], [], []>} : vector<1x32xf32>, vector<32x128xf32>, vector<1x128xf32> -> vector<1x128xf32>
    %10 = vector.broadcast %9 : vector<1x128xf32> to vector<64x128xf32>
    %11 = arith.subf %1, %10 : vector<64x128xf32>
    %12 = arith.mulf %11, %11 : vector<64x128xf32>
    %cst_9 = arith.constant dense<0.000000e+00> : vector<128xf32>
    %13 = vector.multi_reduction <add>, %12, %cst_9 [0] : vector<64x128xf32> to vector<128xf32>
    %14 = vector.shape_cast %13 : vector<128xf32> to vector<1x128xf32>
    %cst_10 = arith.constant dense<0.000000e+00> : vector<1x32xf32>
    %15 = tpu.matmul %14, %2, %cst_10 {dimension_numbers = #tpu.dot_dimension_numbers<[1], [0], [0], [1], [0, 0, 1, 1], [], []>} : vector<1x128xf32>, vector<128x32xf32>, vector<1x32xf32> -> vector<1x32xf32>
    %cst_11 = arith.constant 2.560000e+02 : f32
    %16 = vector.broadcast %cst_11 : f32 to vector<1x32xf32>
    %17 = arith.divf %15, %16 : vector<1x32xf32>
    %cst_12 = arith.constant 9.99999997E-7 : f32
    %18 = vector.broadcast %cst_12 : f32 to vector<1x32xf32>
    %19 = arith.addf %17, %18 : vector<1x32xf32>
    %20 = math.rsqrt %19 : vector<1x32xf32>
    %cst_13 = arith.constant dense<0.000000e+00> : vector<1x128xf32>
    %21 = tpu.matmul %20, %3, %cst_13 {dimension_numbers = #tpu.dot_dimension_numbers<[1], [0], [0], [1], [0, 0, 1, 1], [], []>} : vector<1x32xf32>, vector<32x128xf32>, vector<1x128xf32> -> vector<1x128xf32>
    %22 = vector.broadcast %21 : vector<1x128xf32> to vector<64x128xf32>
    %23 = arith.mulf %11, %22 : vector<64x128xf32>
    %c0_14 = arith.constant 0 : index
    %c0_15 = arith.constant 0 : index
    %24 = vector.load %arg2[%c0_14, %c0_15] : memref<1x128xf32, #tpu.memory_space<vmem>>, vector<1x128xf32>
    %25 = vector.broadcast %24 : vector<1x128xf32> to vector<64x128xf32>
    %26 = arith.mulf %23, %25 : vector<64x128xf32>
    %c0_16 = arith.constant 0 : index
    %c0_17 = arith.constant 0 : index
    %27 = vector.load %arg3[%c0_16, %c0_17] : memref<1x128xf32, #tpu.memory_space<vmem>>, vector<1x128xf32>
    %28 = vector.broadcast %27 : vector<1x128xf32> to vector<64x128xf32>
    %29 = arith.addf %26, %28 : vector<64x128xf32>
    %30 = arith.truncf %29 : vector<64x128xf32> to vector<64x128xbf16>
    %c0_18 = arith.constant 0 : index
    %c0_19 = arith.constant 0 : index
    %31 = vector.load %arg6[%c0_18, %c0_19] : memref<128x128xbf16, #tpu.memory_space<vmem>>, vector<128x128xbf16>
    %cst_20 = arith.constant dense<0.000000e+00> : vector<64x128xf32>
    %32 = tpu.matmul %30, %31, %cst_20 {dimension_numbers = #tpu.dot_dimension_numbers<[1], [0], [0], [1], [0, 0, 1, 1], [], []>} : vector<64x128xbf16>, vector<128x128xbf16>, vector<64x128xf32> -> vector<64x128xf32>
    %c0_21 = arith.constant 0 : index
    %c0_22 = arith.constant 0 : index
    %33 = vector.load %arg7[%c0_21, %c0_22] : memref<1x128xf32, #tpu.memory_space<vmem>>, vector<1x128xf32>
    %34 = vector.broadcast %33 : vector<1x128xf32> to vector<64x128xf32>
    %35 = arith.addf %32, %34 : vector<64x128xf32>
    %cst_23 = arith.constant dense<0.000000e+00> : vector<64xf32>
    %36 = vector.multi_reduction <add>, %35, %cst_23 [1] : vector<64x128xf32> to vector<64xf32>
    %37 = vector.shape_cast %36 : vector<64xf32> to vector<64x1xf32>
    %cst_24 = arith.constant 1.280000e+02 : f32
    %38 = vector.broadcast %cst_24 : f32 to vector<64x1xf32>
    %39 = arith.divf %37, %38 : vector<64x1xf32>
    %40 = vector.broadcast %39 : vector<64x1xf32> to vector<64x128xf32>
    %41 = arith.subf %35, %40 : vector<64x128xf32>
    %42 = arith.mulf %41, %41 : vector<64x128xf32>
    %cst_25 = arith.constant dense<0.000000e+00> : vector<64xf32>
    %43 = vector.multi_reduction <add>, %42, %cst_25 [1] : vector<64x128xf32> to vector<64xf32>
    %44 = vector.shape_cast %43 : vector<64xf32> to vector<64x1xf32>
    %cst_26 = arith.constant 1.280000e+02 : f32
    %45 = vector.broadcast %cst_26 : f32 to vector<64x1xf32>
    %46 = arith.divf %44, %45 : vector<64x1xf32>
    %cst_27 = arith.constant 9.99999974E-6 : f32
    %47 = vector.broadcast %cst_27 : f32 to vector<64x1xf32>
    %48 = arith.addf %46, %47 : vector<64x1xf32>
    %49 = math.rsqrt %48 : vector<64x1xf32>
    %50 = vector.broadcast %49 : vector<64x1xf32> to vector<64x128xf32>
    %51 = arith.mulf %41, %50 : vector<64x128xf32>
    %c0_28 = arith.constant 0 : index
    %c0_29 = arith.constant 0 : index
    %52 = vector.load %arg8[%c0_28, %c0_29] : memref<1x128xf32, #tpu.memory_space<vmem>>, vector<1x128xf32>
    %53 = vector.broadcast %52 : vector<1x128xf32> to vector<64x128xf32>
    %54 = arith.mulf %51, %53 : vector<64x128xf32>
    %c0_30 = arith.constant 0 : index
    %c0_31 = arith.constant 0 : index
    %55 = vector.load %arg9[%c0_30, %c0_31] : memref<1x128xf32, #tpu.memory_space<vmem>>, vector<1x128xf32>
    %56 = vector.broadcast %55 : vector<1x128xf32> to vector<64x128xf32>
    %57 = arith.addf %54, %56 : vector<64x128xf32>
    %58 = arith.truncf %57 : vector<64x128xf32> to vector<64x128xbf16>
    %c0_32 = arith.constant 0 : index
    %c0_33 = arith.constant 0 : index
    %59 = vector.load %arg10[%c0_32, %c0_33] : memref<128x128xbf16, #tpu.memory_space<vmem>>, vector<128x128xbf16>
    %cst_34 = arith.constant dense<0.000000e+00> : vector<64x128xf32>
    %60 = tpu.matmul %58, %59, %cst_34 {dimension_numbers = #tpu.dot_dimension_numbers<[1], [0], [0], [1], [0, 0, 1, 1], [], []>} : vector<64x128xbf16>, vector<128x128xbf16>, vector<64x128xf32> -> vector<64x128xf32>
    %cst_35 = arith.constant 1.250000e-01 : f32
    %61 = vector.broadcast %cst_35 : f32 to vector<64x128xf32>
    %62 = arith.mulf %60, %61 : vector<64x128xf32>
    %c0_36 = arith.constant 0 : index
    %c0_37 = arith.constant 0 : index
    %63 = vector.load %arg11[%c0_36, %c0_37] : memref<128x128xbf16, #tpu.memory_space<vmem>>, vector<128x128xbf16>
    %cst_38 = arith.constant dense<0.000000e+00> : vector<64x128xf32>
    %64 = tpu.matmul %58, %63, %cst_38 {dimension_numbers = #tpu.dot_dimension_numbers<[1], [0], [0], [1], [0, 0, 1, 1], [], []>} : vector<64x128xbf16>, vector<128x128xbf16>, vector<64x128xf32> -> vector<64x128xf32>
    %c0_39 = arith.constant 0 : index
    %c0_40 = arith.constant 0 : index
    %65 = vector.load %arg12[%c0_39, %c0_40] : memref<128x128xbf16, #tpu.memory_space<vmem>>, vector<128x128xbf16>
    %cst_41 = arith.constant dense<0.000000e+00> : vector<64x128xf32>
    %66 = tpu.matmul %58, %65, %cst_41 {dimension_numbers = #tpu.dot_dimension_numbers<[1], [0], [0], [1], [0, 0, 1, 1], [], []>} : vector<64x128xbf16>, vector<128x128xbf16>, vector<64x128xf32> -> vector<64x128xf32>
    %67 = vector.extract_strided_slice %62 {offsets = [0, 0], sizes = [64, 64], strides = [1, 1]} : vector<64x128xf32> to vector<64x64xf32>
    %68 = arith.truncf %67 : vector<64x64xf32> to vector<64x64xbf16>
    %69 = vector.extract_strided_slice %64 {offsets = [0, 0], sizes = [64, 64], strides = [1, 1]} : vector<64x128xf32> to vector<64x64xf32>
    %70 = arith.truncf %69 : vector<64x64xf32> to vector<64x64xbf16>
    %cst_42 = arith.constant dense<0.000000e+00> : vector<64x64xf32>
    %71 = tpu.matmul %68, %70, %cst_42 {dimension_numbers = #tpu.dot_dimension_numbers<[1], [1], [0], [0], [0, 0, 1, 0], [], []>} : vector<64x64xbf16>, vector<64x64xbf16>, vector<64x64xf32> -> vector<64x64xf32>
    %cst_43 = arith.constant dense<0xFF800000> : vector<64xf32>
    %72 = vector.multi_reduction <maximumf>, %71, %cst_43 [1] : vector<64x64xf32> to vector<64xf32>
    %73 = vector.shape_cast %72 : vector<64xf32> to vector<64x1xf32>
    %74 = vector.broadcast %73 : vector<64x1xf32> to vector<64x64xf32>
    %75 = arith.subf %71, %74 : vector<64x64xf32>
    %76 = math.exp %75 : vector<64x64xf32>
    %cst_44 = arith.constant dense<0.000000e+00> : vector<64xf32>
    %77 = vector.multi_reduction <add>, %76, %cst_44 [1] : vector<64x64xf32> to vector<64xf32>
    %78 = vector.shape_cast %77 : vector<64xf32> to vector<64x1xf32>
    %79 = tpu.reciprocal %78 {approx = true} : vector<64x1xf32> -> vector<64x1xf32>
    %80 = vector.broadcast %79 : vector<64x1xf32> to vector<64x64xf32>
    %81 = arith.mulf %76, %80 : vector<64x64xf32>
    %82 = arith.truncf %81 : vector<64x64xf32> to vector<64x64xbf16>
    %83 = vector.extract_strided_slice %66 {offsets = [0, 0], sizes = [64, 64], strides = [1, 1]} : vector<64x128xf32> to vector<64x64xf32>
    %84 = arith.truncf %83 : vector<64x64xf32> to vector<64x64xbf16>
    %cst_45 = arith.constant dense<0.000000e+00> : vector<64x64xf32>
    %85 = tpu.matmul %82, %84, %cst_45 {dimension_numbers = #tpu.dot_dimension_numbers<[1], [0], [0], [1], [0, 0, 1, 1], [], []>} : vector<64x64xbf16>, vector<64x64xbf16>, vector<64x64xf32> -> vector<64x64xf32>
    %86 = arith.truncf %85 : vector<64x64xf32> to vector<64x64xbf16>
    %c0_46 = arith.constant 0 : index
    %c0_47 = arith.constant 0 : index
    %87 = vector.load %arg31[%c0_46, %c0_47] : memref<64x128xbf16, #tpu.memory_space<vmem>>, vector<64x64xbf16>
    tpu.vector_store %arg31[%c0_46, %c0_47], %86 {strides = array<i32>} : memref<64x128xbf16, #tpu.memory_space<vmem>>, vector<64x64xbf16>,
    %88 = vector.extract_strided_slice %62 {offsets = [0, 64], sizes = [64, 64], strides = [1, 1]} : vector<64x128xf32> to vector<64x64xf32>
    %89 = arith.truncf %88 : vector<64x64xf32> to vector<64x64xbf16>
    %90 = vector.extract_strided_slice %64 {offsets = [0, 64], sizes = [64, 64], strides = [1, 1]} : vector<64x128xf32> to vector<64x64xf32>
    %91 = arith.truncf %90 : vector<64x64xf32> to vector<64x64xbf16>
    %cst_48 = arith.constant dense<0.000000e+00> : vector<64x64xf32>
    %92 = tpu.matmul %89, %91, %cst_48 {dimension_numbers = #tpu.dot_dimension_numbers<[1], [1], [0], [0], [0, 0, 1, 0], [], []>} : vector<64x64xbf16>, vector<64x64xbf16>, vector<64x64xf32> -> vector<64x64xf32>
    %cst_49 = arith.constant dense<0xFF800000> : vector<64xf32>
    %93 = vector.multi_reduction <maximumf>, %92, %cst_49 [1] : vector<64x64xf32> to vector<64xf32>
    %94 = vector.shape_cast %93 : vector<64xf32> to vector<64x1xf32>
    %95 = vector.broadcast %94 : vector<64x1xf32> to vector<64x64xf32>
    %96 = arith.subf %92, %95 : vector<64x64xf32>
    %97 = math.exp %96 : vector<64x64xf32>
    %cst_50 = arith.constant dense<0.000000e+00> : vector<64xf32>
    %98 = vector.multi_reduction <add>, %97, %cst_50 [1] : vector<64x64xf32> to vector<64xf32>
    %99 = vector.shape_cast %98 : vector<64xf32> to vector<64x1xf32>
    %100 = tpu.reciprocal %99 {approx = true} : vector<64x1xf32> -> vector<64x1xf32>
    %101 = vector.broadcast %100 : vector<64x1xf32> to vector<64x64xf32>
    %102 = arith.mulf %97, %101 : vector<64x64xf32>
    %103 = arith.truncf %102 : vector<64x64xf32> to vector<64x64xbf16>
    %104 = vector.extract_strided_slice %66 {offsets = [0, 64], sizes = [64, 64], strides = [1, 1]} : vector<64x128xf32> to vector<64x64xf32>
    %105 = arith.truncf %104 : vector<64x64xf32> to vector<64x64xbf16>
    %cst_51 = arith.constant dense<0.000000e+00> : vector<64x64xf32>
    %106 = tpu.matmul %103, %105, %cst_51 {dimension_numbers = #tpu.dot_dimension_numbers<[1], [0], [0], [1], [0, 0, 1, 1], [], []>} : vector<64x64xbf16>, vector<64x64xbf16>, vector<64x64xf32> -> vector<64x64xf32>
    %107 = arith.truncf %106 : vector<64x64xf32> to vector<64x64xbf16>
    %c0_52 = arith.constant 0 : index
    %c64 = arith.constant 64 : index
    %108 = vector.load %arg31[%c0_52, %c64] : memref<64x128xbf16, #tpu.memory_space<vmem>>, vector<64x64xbf16>
    tpu.vector_store %arg31[%c0_52, %c64], %107 {strides = array<i32>} : memref<64x128xbf16, #tpu.memory_space<vmem>>, vector<64x64xbf16>,
    %c0_53 = arith.constant 0 : index
    %c0_54 = arith.constant 0 : index
    %109 = vector.load %arg31[%c0_53, %c0_54] : memref<64x128xbf16, #tpu.memory_space<vmem>>, vector<64x128xbf16>
    %c0_55 = arith.constant 0 : index
    %c0_56 = arith.constant 0 : index
    %110 = vector.load %arg13[%c0_55, %c0_56] : memref<128x128xbf16, #tpu.memory_space<vmem>>, vector<128x128xbf16>
    %cst_57 = arith.constant dense<0.000000e+00> : vector<64x128xf32>
    %111 = tpu.matmul %109, %110, %cst_57 {dimension_numbers = #tpu.dot_dimension_numbers<[1], [0], [0], [1], [0, 0, 1, 1], [], []>} : vector<64x128xbf16>, vector<128x128xbf16>, vector<64x128xf32> -> vector<64x128xf32>
    %c0_58 = arith.constant 0 : index
    %c0_59 = arith.constant 0 : index
    %112 = vector.load %arg14[%c0_58, %c0_59] : memref<1x128xf32, #tpu.memory_space<vmem>>, vector<1x128xf32>
    %113 = vector.broadcast %112 : vector<1x128xf32> to vector<64x128xf32>
    %114 = arith.addf %111, %113 : vector<64x128xf32>
    %115 = arith.addf %114, %35 : vector<64x128xf32>
    %cst_60 = arith.constant dense<0.000000e+00> : vector<64xf32>
    %116 = vector.multi_reduction <add>, %115, %cst_60 [1] : vector<64x128xf32> to vector<64xf32>
    %117 = vector.shape_cast %116 : vector<64xf32> to vector<64x1xf32>
    %cst_61 = arith.constant 1.280000e+02 : f32
    %118 = vector.broadcast %cst_61 : f32 to vector<64x1xf32>
    %119 = arith.divf %117, %118 : vector<64x1xf32>
    %120 = vector.broadcast %119 : vector<64x1xf32> to vector<64x128xf32>
    %121 = arith.subf %115, %120 : vector<64x128xf32>
    %122 = arith.mulf %121, %121 : vector<64x128xf32>
    %cst_62 = arith.constant dense<0.000000e+00> : vector<64xf32>
    %123 = vector.multi_reduction <add>, %122, %cst_62 [1] : vector<64x128xf32> to vector<64xf32>
    %124 = vector.shape_cast %123 : vector<64xf32> to vector<64x1xf32>
    %cst_63 = arith.constant 1.280000e+02 : f32
    %125 = vector.broadcast %cst_63 : f32 to vector<64x1xf32>
    %126 = arith.divf %124, %125 : vector<64x1xf32>
    %cst_64 = arith.constant 9.99999974E-6 : f32
    %127 = vector.broadcast %cst_64 : f32 to vector<64x1xf32>
    %128 = arith.addf %126, %127 : vector<64x1xf32>
    %129 = math.rsqrt %128 : vector<64x1xf32>
    %130 = vector.broadcast %129 : vector<64x1xf32> to vector<64x128xf32>
    %131 = arith.mulf %121, %130 : vector<64x128xf32>
    %c0_65 = arith.constant 0 : index
    %c0_66 = arith.constant 0 : index
    %132 = vector.load %arg15[%c0_65, %c0_66] : memref<1x128xf32, #tpu.memory_space<vmem>>, vector<1x128xf32>
    %133 = vector.broadcast %132 : vector<1x128xf32> to vector<64x128xf32>
    %134 = arith.mulf %131, %133 : vector<64x128xf32>
    %c0_67 = arith.constant 0 : index
    %c0_68 = arith.constant 0 : index
    %135 = vector.load %arg16[%c0_67, %c0_68] : memref<1x128xf32, #tpu.memory_space<vmem>>, vector<1x128xf32>
    %136 = vector.broadcast %135 : vector<1x128xf32> to vector<64x128xf32>
    %137 = arith.addf %134, %136 : vector<64x128xf32>
    %138 = arith.truncf %137 : vector<64x128xf32> to vector<64x128xbf16>
    %c0_69 = arith.constant 0 : index
    %c0_70 = arith.constant 0 : index
    %139 = vector.load %arg17[%c0_69, %c0_70] : memref<128x128xbf16, #tpu.memory_space<vmem>>, vector<128x128xbf16>
    %cst_71 = arith.constant dense<0.000000e+00> : vector<64x128xf32>
    %140 = tpu.matmul %138, %139, %cst_71 {dimension_numbers = #tpu.dot_dimension_numbers<[1], [0], [0], [1], [0, 0, 1, 1], [], []>} : vector<64x128xbf16>, vector<128x128xbf16>, vector<64x128xf32> -> vector<64x128xf32>
    %cst_72 = arith.constant 1.250000e-01 : f32
    %141 = vector.broadcast %cst_72 : f32 to vector<64x128xf32>
    %142 = arith.mulf %140, %141 : vector<64x128xf32>
    %c0_73 = arith.constant 0 : index
    %c0_74 = arith.constant 0 : index
    %143 = vector.load %arg18[%c0_73, %c0_74] : memref<128x128xbf16, #tpu.memory_space<vmem>>, vector<128x128xbf16>
    %cst_75 = arith.constant dense<0.000000e+00> : vector<64x128xf32>
    %144 = tpu.matmul %138, %143, %cst_75 {dimension_numbers = #tpu.dot_dimension_numbers<[1], [0], [0], [1], [0, 0, 1, 1], [], []>} : vector<64x128xbf16>, vector<128x128xbf16>, vector<64x128xf32> -> vector<64x128xf32>
    %c0_76 = arith.constant 0 : index
    %c0_77 = arith.constant 0 : index
    %145 = vector.load %arg19[%c0_76, %c0_77] : memref<128x128xbf16, #tpu.memory_space<vmem>>, vector<128x128xbf16>
    %cst_78 = arith.constant dense<0.000000e+00> : vector<64x128xf32>
    %146 = tpu.matmul %138, %145, %cst_78 {dimension_numbers = #tpu.dot_dimension_numbers<[1], [0], [0], [1], [0, 0, 1, 1], [], []>} : vector<64x128xbf16>, vector<128x128xbf16>, vector<64x128xf32> -> vector<64x128xf32>
    %147 = vector.extract_strided_slice %142 {offsets = [0, 0], sizes = [64, 64], strides = [1, 1]} : vector<64x128xf32> to vector<64x64xf32>
    %148 = arith.truncf %147 : vector<64x64xf32> to vector<64x64xbf16>
    %149 = vector.extract_strided_slice %144 {offsets = [0, 0], sizes = [64, 64], strides = [1, 1]} : vector<64x128xf32> to vector<64x64xf32>
    %150 = arith.truncf %149 : vector<64x64xf32> to vector<64x64xbf16>
    %cst_79 = arith.constant dense<0.000000e+00> : vector<64x64xf32>
    %151 = tpu.matmul %148, %150, %cst_79 {dimension_numbers = #tpu.dot_dimension_numbers<[1], [1], [0], [0], [0, 0, 1, 0], [], []>} : vector<64x64xbf16>, vector<64x64xbf16>, vector<64x64xf32> -> vector<64x64xf32>
    %cst_80 = arith.constant dense<0xFF800000> : vector<64xf32>
    %152 = vector.multi_reduction <maximumf>, %151, %cst_80 [1] : vector<64x64xf32> to vector<64xf32>
    %153 = vector.shape_cast %152 : vector<64xf32> to vector<64x1xf32>
    %154 = vector.broadcast %153 : vector<64x1xf32> to vector<64x64xf32>
    %155 = arith.subf %151, %154 : vector<64x64xf32>
    %156 = math.exp %155 : vector<64x64xf32>
    %cst_81 = arith.constant dense<0.000000e+00> : vector<64xf32>
    %157 = vector.multi_reduction <add>, %156, %cst_81 [1] : vector<64x64xf32> to vector<64xf32>
    %158 = vector.shape_cast %157 : vector<64xf32> to vector<64x1xf32>
    %159 = tpu.reciprocal %158 {approx = true} : vector<64x1xf32> -> vector<64x1xf32>
    %160 = vector.broadcast %159 : vector<64x1xf32> to vector<64x64xf32>
    %161 = arith.mulf %156, %160 : vector<64x64xf32>
    %162 = arith.truncf %161 : vector<64x64xf32> to vector<64x64xbf16>
    %163 = vector.extract_strided_slice %146 {offsets = [0, 0], sizes = [64, 64], strides = [1, 1]} : vector<64x128xf32> to vector<64x64xf32>
    %164 = arith.truncf %163 : vector<64x64xf32> to vector<64x64xbf16>
    %cst_82 = arith.constant dense<0.000000e+00> : vector<64x64xf32>
    %165 = tpu.matmul %162, %164, %cst_82 {dimension_numbers = #tpu.dot_dimension_numbers<[1], [0], [0], [1], [0, 0, 1, 1], [], []>} : vector<64x64xbf16>, vector<64x64xbf16>, vector<64x64xf32> -> vector<64x64xf32>
    %166 = arith.truncf %165 : vector<64x64xf32> to vector<64x64xbf16>
    %c0_83 = arith.constant 0 : index
    %c0_84 = arith.constant 0 : index
    %167 = vector.load %arg31[%c0_83, %c0_84] : memref<64x128xbf16, #tpu.memory_space<vmem>>, vector<64x64xbf16>
    tpu.vector_store %arg31[%c0_83, %c0_84], %166 {strides = array<i32>} : memref<64x128xbf16, #tpu.memory_space<vmem>>, vector<64x64xbf16>,
    %168 = vector.extract_strided_slice %142 {offsets = [0, 64], sizes = [64, 64], strides = [1, 1]} : vector<64x128xf32> to vector<64x64xf32>
    %169 = arith.truncf %168 : vector<64x64xf32> to vector<64x64xbf16>
    %170 = vector.extract_strided_slice %144 {offsets = [0, 64], sizes = [64, 64], strides = [1, 1]} : vector<64x128xf32> to vector<64x64xf32>
    %171 = arith.truncf %170 : vector<64x64xf32> to vector<64x64xbf16>
    %cst_85 = arith.constant dense<0.000000e+00> : vector<64x64xf32>
    %172 = tpu.matmul %169, %171, %cst_85 {dimension_numbers = #tpu.dot_dimension_numbers<[1], [1], [0], [0], [0, 0, 1, 0], [], []>} : vector<64x64xbf16>, vector<64x64xbf16>, vector<64x64xf32> -> vector<64x64xf32>
    %cst_86 = arith.constant dense<0xFF800000> : vector<64xf32>
    %173 = vector.multi_reduction <maximumf>, %172, %cst_86 [1] : vector<64x64xf32> to vector<64xf32>
    %174 = vector.shape_cast %173 : vector<64xf32> to vector<64x1xf32>
    %175 = vector.broadcast %174 : vector<64x1xf32> to vector<64x64xf32>
    %176 = arith.subf %172, %175 : vector<64x64xf32>
    %177 = math.exp %176 : vector<64x64xf32>
    %cst_87 = arith.constant dense<0.000000e+00> : vector<64xf32>
    %178 = vector.multi_reduction <add>, %177, %cst_87 [1] : vector<64x64xf32> to vector<64xf32>
    %179 = vector.shape_cast %178 : vector<64xf32> to vector<64x1xf32>
    %180 = tpu.reciprocal %179 {approx = true} : vector<64x1xf32> -> vector<64x1xf32>
    %181 = vector.broadcast %180 : vector<64x1xf32> to vector<64x64xf32>
    %182 = arith.mulf %177, %181 : vector<64x64xf32>
    %183 = arith.truncf %182 : vector<64x64xf32> to vector<64x64xbf16>
    %184 = vector.extract_strided_slice %146 {offsets = [0, 64], sizes = [64, 64], strides = [1, 1]} : vector<64x128xf32> to vector<64x64xf32>
    %185 = arith.truncf %184 : vector<64x64xf32> to vector<64x64xbf16>
    %cst_88 = arith.constant dense<0.000000e+00> : vector<64x64xf32>
    %186 = tpu.matmul %183, %185, %cst_88 {dimension_numbers = #tpu.dot_dimension_numbers<[1], [0], [0], [1], [0, 0, 1, 1], [], []>} : vector<64x64xbf16>, vector<64x64xbf16>, vector<64x64xf32> -> vector<64x64xf32>
    %187 = arith.truncf %186 : vector<64x64xf32> to vector<64x64xbf16>
    %c0_89 = arith.constant 0 : index
    %c64_90 = arith.constant 64 : index
    %188 = vector.load %arg31[%c0_89, %c64_90] : memref<64x128xbf16, #tpu.memory_space<vmem>>, vector<64x64xbf16>
    tpu.vector_store %arg31[%c0_89, %c64_90], %187 {strides = array<i32>} : memref<64x128xbf16, #tpu.memory_space<vmem>>, vector<64x64xbf16>,
    %c0_91 = arith.constant 0 : index
    %c0_92 = arith.constant 0 : index
    %189 = vector.load %arg31[%c0_91, %c0_92] : memref<64x128xbf16, #tpu.memory_space<vmem>>, vector<64x128xbf16>
    %c0_93 = arith.constant 0 : index
    %c0_94 = arith.constant 0 : index
    %190 = vector.load %arg20[%c0_93, %c0_94] : memref<128x128xbf16, #tpu.memory_space<vmem>>, vector<128x128xbf16>
    %cst_95 = arith.constant dense<0.000000e+00> : vector<64x128xf32>
    %191 = tpu.matmul %189, %190, %cst_95 {dimension_numbers = #tpu.dot_dimension_numbers<[1], [0], [0], [1], [0, 0, 1, 1], [], []>} : vector<64x128xbf16>, vector<128x128xbf16>, vector<64x128xf32> -> vector<64x128xf32>
    %c0_96 = arith.constant 0 : index
    %c0_97 = arith.constant 0 : index
    %192 = vector.load %arg21[%c0_96, %c0_97] : memref<1x128xf32, #tpu.memory_space<vmem>>, vector<1x128xf32>
    %193 = vector.broadcast %192 : vector<1x128xf32> to vector<64x128xf32>
    %194 = arith.addf %191, %193 : vector<64x128xf32>
    %195 = arith.addf %194, %115 : vector<64x128xf32>
    %cst_98 = arith.constant dense<0.000000e+00> : vector<64xf32>
    %196 = vector.multi_reduction <add>, %195, %cst_98 [1] : vector<64x128xf32> to vector<64xf32>
    %197 = vector.shape_cast %196 : vector<64xf32> to vector<64x1xf32>
    %cst_99 = arith.constant 1.280000e+02 : f32
    %198 = vector.broadcast %cst_99 : f32 to vector<64x1xf32>
    %199 = arith.divf %197, %198 : vector<64x1xf32>
    %200 = vector.broadcast %199 : vector<64x1xf32> to vector<64x128xf32>
    %201 = arith.subf %195, %200 : vector<64x128xf32>
    %202 = arith.mulf %201, %201 : vector<64x128xf32>
    %cst_100 = arith.constant dense<0.000000e+00> : vector<64xf32>
    %203 = vector.multi_reduction <add>, %202, %cst_100 [1] : vector<64x128xf32> to vector<64xf32>
    %204 = vector.shape_cast %203 : vector<64xf32> to vector<64x1xf32>
    %cst_101 = arith.constant 1.280000e+02 : f32
    %205 = vector.broadcast %cst_101 : f32 to vector<64x1xf32>
    %206 = arith.divf %204, %205 : vector<64x1xf32>
    %cst_102 = arith.constant 9.99999974E-6 : f32
    %207 = vector.broadcast %cst_102 : f32 to vector<64x1xf32>
    %208 = arith.addf %206, %207 : vector<64x1xf32>
    %209 = math.rsqrt %208 : vector<64x1xf32>
    %210 = vector.broadcast %209 : vector<64x1xf32> to vector<64x128xf32>
    %211 = arith.mulf %201, %210 : vector<64x128xf32>
    %c0_103 = arith.constant 0 : index
    %c0_104 = arith.constant 0 : index
    %212 = vector.load %arg22[%c0_103, %c0_104] : memref<1x128xf32, #tpu.memory_space<vmem>>, vector<1x128xf32>
    %213 = vector.broadcast %212 : vector<1x128xf32> to vector<64x128xf32>
    %214 = arith.mulf %211, %213 : vector<64x128xf32>
    %c0_105 = arith.constant 0 : index
    %c0_106 = arith.constant 0 : index
    %215 = vector.load %arg23[%c0_105, %c0_106] : memref<1x128xf32, #tpu.memory_space<vmem>>, vector<1x128xf32>
    %216 = vector.broadcast %215 : vector<1x128xf32> to vector<64x128xf32>
    %217 = arith.addf %214, %216 : vector<64x128xf32>
    %218 = arith.truncf %217 : vector<64x128xf32> to vector<64x128xbf16>
    %c0_107 = arith.constant 0 : index
    %c0_108 = arith.constant 0 : index
    %219 = vector.load %arg24[%c0_107, %c0_108] : memref<128x1024xbf16, #tpu.memory_space<vmem>>, vector<128x1024xbf16>
    %cst_109 = arith.constant dense<0.000000e+00> : vector<64x1024xf32>
    %220 = tpu.matmul %218, %219, %cst_109 {dimension_numbers = #tpu.dot_dimension_numbers<[1], [0], [0], [1], [0, 0, 1, 1], [], []>} : vector<64x128xbf16>, vector<128x1024xbf16>, vector<64x1024xf32> -> vector<64x1024xf32>
    %c0_110 = arith.constant 0 : index
    %c0_111 = arith.constant 0 : index
    %221 = vector.load %arg25[%c0_110, %c0_111] : memref<1x1024xf32, #tpu.memory_space<vmem>>, vector<1x1024xf32>
    %222 = vector.broadcast %221 : vector<1x1024xf32> to vector<64x1024xf32>
    %223 = arith.addf %220, %222 : vector<64x1024xf32>
    %224 = vector.extract_strided_slice %223 {offsets = [0, 0], sizes = [64, 512], strides = [1, 1]} : vector<64x1024xf32> to vector<64x512xf32>
    %225 = vector.extract_strided_slice %223 {offsets = [0, 512], sizes = [64, 512], strides = [1, 1]} : vector<64x1024xf32> to vector<64x512xf32>
    %cst_112 = arith.constant 5.000000e-01 : f32
    %226 = vector.broadcast %cst_112 : f32 to vector<64x512xf32>
    %227 = arith.mulf %226, %225 : vector<64x512xf32>
    %cst_113 = arith.constant 4.471500e-02 : f32
    %228 = vector.broadcast %cst_113 : f32 to vector<64x512xf32>
    %229 = arith.mulf %228, %225 : vector<64x512xf32>
    %230 = arith.mulf %229, %225 : vector<64x512xf32>
    %231 = arith.mulf %230, %225 : vector<64x512xf32>
    %232 = arith.addf %225, %231 : vector<64x512xf32>
    %cst_114 = arith.constant 0.797884583 : f32
    %233 = vector.broadcast %cst_114 : f32 to vector<64x512xf32>
    %234 = arith.mulf %233, %232 : vector<64x512xf32>
    %235 = math.tanh %234 : vector<64x512xf32>
    %cst_115 = arith.constant 1.000000e+00 : f32
    %236 = vector.broadcast %cst_115 : f32 to vector<64x512xf32>
    %237 = arith.addf %236, %235 : vector<64x512xf32>
    %238 = arith.mulf %227, %237 : vector<64x512xf32>
    %239 = arith.mulf %224, %238 : vector<64x512xf32>
    %240 = arith.truncf %239 : vector<64x512xf32> to vector<64x512xbf16>
    %c0_116 = arith.constant 0 : index
    %c0_117 = arith.constant 0 : index
    %241 = vector.load %arg26[%c0_116, %c0_117] : memref<512x128xbf16, #tpu.memory_space<vmem>>, vector<512x128xbf16>
    %cst_118 = arith.constant dense<0.000000e+00> : vector<64x128xf32>
    %242 = tpu.matmul %240, %241, %cst_118 {dimension_numbers = #tpu.dot_dimension_numbers<[1], [0], [0], [1], [0, 0, 1, 1], [], []>} : vector<64x512xbf16>, vector<512x128xbf16>, vector<64x128xf32> -> vector<64x128xf32>
    %c0_119 = arith.constant 0 : index
    %c0_120 = arith.constant 0 : index
    %243 = vector.load %arg27[%c0_119, %c0_120] : memref<1x128xf32, #tpu.memory_space<vmem>>, vector<1x128xf32>
    %244 = vector.broadcast %243 : vector<1x128xf32> to vector<64x128xf32>
    %245 = arith.addf %242, %244 : vector<64x128xf32>
    %246 = arith.addf %245, %195 : vector<64x128xf32>
    %247 = arith.truncf %246 : vector<64x128xf32> to vector<64x128xbf16>
    %c0_121 = arith.constant 0 : index
    %c0_122 = arith.constant 0 : index
    %248 = vector.load %arg28[%c0_121, %c0_122] : memref<128x128xbf16, #tpu.memory_space<vmem>>, vector<128x128xbf16>
    %cst_123 = arith.constant dense<0.000000e+00> : vector<64x128xf32>
    %249 = tpu.matmul %247, %248, %cst_123 {dimension_numbers = #tpu.dot_dimension_numbers<[1], [0], [0], [1], [0, 0, 1, 1], [], []>} : vector<64x128xbf16>, vector<128x128xbf16>, vector<64x128xf32> -> vector<64x128xf32>
    %c0_124 = arith.constant 0 : index
    %c0_125 = arith.constant 0 : index
    %250 = vector.load %arg29[%c0_124, %c0_125] : memref<1x128xf32, #tpu.memory_space<vmem>>, vector<1x128xf32>
    %251 = vector.broadcast %250 : vector<1x128xf32> to vector<64x128xf32>
    %252 = arith.addf %249, %251 : vector<64x128xf32>
    %253 = arith.addf %252, %1 : vector<64x128xf32>
    %c0_126 = arith.constant 0 : index
    %c0_127 = arith.constant 0 : index
    %c0_128 = arith.constant 0 : index
    %254 = vector.load %arg30[%c0_126, %c0_127, %c0_128] : memref<1x64x128xf32, #tpu.memory_space<vmem>>, vector<1x64x128xf32>
    %255 = vector.shape_cast %254 : vector<1x64x128xf32> to vector<64x128xf32>
    %256 = vector.shape_cast %253 : vector<64x128xf32> to vector<1x64x128xf32>
    tpu.vector_store %arg30[%c0_126, %c0_127, %c0_128], %256 {strides = array<i32>} : memref<1x64x128xf32, #tpu.memory_space<vmem>>, vector<1x64x128xf32>,
    return
  }
  func.func @transform_0(%arg0: i32) -> (i32, i32, i32) {
    %c0_i32 = arith.constant 0 : i32
    %c0_i32_0 = arith.constant 0 : i32
    %c0_i32_1 = arith.constant 0 : i32
    return %arg0, %c0_i32, %c0_i32_0 : i32, i32, i32
  }
  func.func @transform_1(%arg0: i32) -> (i32, i32) {
    %c0_i32 = arith.constant 0 : i32
    %c0_i32_0 = arith.constant 0 : i32
    %c0_i32_1 = arith.constant 0 : i32
    return %c0_i32, %c0_i32_0 : i32, i32
  }
  func.func @transform_2(%arg0: i32) -> (i32, i32) {
    %c0_i32 = arith.constant 0 : i32
    %c0_i32_0 = arith.constant 0 : i32
    %c0_i32_1 = arith.constant 0 : i32
    return %c0_i32, %c0_i32_0 : i32, i32
  }
  func.func @transform_3(%arg0: i32) -> (i32, i32) {
    %c0_i32 = arith.constant 0 : i32
    %c0_i32_0 = arith.constant 0 : i32
    %c0_i32_1 = arith.constant 0 : i32
    return %c0_i32, %c0_i32_0 : i32, i32
  }
  func.func @transform_4(%arg0: i32) -> (i32, i32) {
    %c0_i32 = arith.constant 0 : i32
    %c0_i32_0 = arith.constant 0 : i32
    %c0_i32_1 = arith.constant 0 : i32
    return %c0_i32, %c0_i32_0 : i32, i32
  }
  func.func @transform_5(%arg0: i32) -> (i32, i32) {
    %c0_i32 = arith.constant 0 : i32
    %c0_i32_0 = arith.constant 0 : i32
    %c0_i32_1 = arith.constant 0 : i32
    return %c0_i32, %c0_i32_0 : i32, i32
  }
  func.func @transform_6(%arg0: i32) -> (i32, i32) {
    %c0_i32 = arith.constant 0 : i32
    %c0_i32_0 = arith.constant 0 : i32
    %c0_i32_1 = arith.constant 0 : i32
    return %c0_i32, %c0_i32_0 : i32, i32
  }
  func.func @transform_7(%arg0: i32) -> (i32, i32) {
    %c0_i32 = arith.constant 0 : i32
    %c0_i32_0 = arith.constant 0 : i32
    %c0_i32_1 = arith.constant 0 : i32
    return %c0_i32, %c0_i32_0 : i32, i32
  }
  func.func @transform_8(%arg0: i32) -> (i32, i32) {
    %c0_i32 = arith.constant 0 : i32
    %c0_i32_0 = arith.constant 0 : i32
    %c0_i32_1 = arith.constant 0 : i32
    return %c0_i32, %c0_i32_0 : i32, i32
  }
  func.func @transform_9(%arg0: i32) -> (i32, i32) {
    %c0_i32 = arith.constant 0 : i32
    %c0_i32_0 = arith.constant 0 : i32
    %c0_i32_1 = arith.constant 0 : i32
    return %c0_i32, %c0_i32_0 : i32, i32
  }
  func.func @transform_10(%arg0: i32) -> (i32, i32) {
    %c0_i32 = arith.constant 0 : i32
    %c0_i32_0 = arith.constant 0 : i32
    %c0_i32_1 = arith.constant 0 : i32
    return %c0_i32, %c0_i32_0 : i32, i32
  }
  func.func @transform_11(%arg0: i32) -> (i32, i32) {
    %c0_i32 = arith.constant 0 : i32
    %c0_i32_0 = arith.constant 0 : i32
    %c0_i32_1 = arith.constant 0 : i32
    return %c0_i32, %c0_i32_0 : i32, i32
  }
  func.func @transform_12(%arg0: i32) -> (i32, i32) {
    %c0_i32 = arith.constant 0 : i32
    %c0_i32_0 = arith.constant 0 : i32
    %c0_i32_1 = arith.constant 0 : i32
    return %c0_i32, %c0_i32_0 : i32, i32
  }
  func.func @transform_13(%arg0: i32) -> (i32, i32) {
    %c0_i32 = arith.constant 0 : i32
    %c0_i32_0 = arith.constant 0 : i32
    %c0_i32_1 = arith.constant 0 : i32
    return %c0_i32, %c0_i32_0 : i32, i32
  }
  func.func @transform_14(%arg0: i32) -> (i32, i32) {
    %c0_i32 = arith.constant 0 : i32
    %c0_i32_0 = arith.constant 0 : i32
    %c0_i32_1 = arith.constant 0 : i32
    return %c0_i32, %c0_i32_0 : i32, i32
  }
  func.func @transform_15(%arg0: i32) -> (i32, i32) {
    %c0_i32 = arith.constant 0 : i32
    %c0_i32_0 = arith.constant 0 : i32
    %c0_i32_1 = arith.constant 0 : i32
    return %c0_i32, %c0_i32_0 : i32, i32
  }
  func.func @transform_16(%arg0: i32) -> (i32, i32) {
    %c0_i32 = arith.constant 0 : i32
    %c0_i32_0 = arith.constant 0 : i32
    %c0_i32_1 = arith.constant 0 : i32
    return %c0_i32, %c0_i32_0 : i32, i32
  }
  func.func @transform_17(%arg0: i32) -> (i32, i32) {
    %c0_i32 = arith.constant 0 : i32
    %c0_i32_0 = arith.constant 0 : i32
    %c0_i32_1 = arith.constant 0 : i32
    return %c0_i32, %c0_i32_0 : i32, i32
  }
  func.func @transform_18(%arg0: i32) -> (i32, i32) {
    %c0_i32 = arith.constant 0 : i32
    %c0_i32_0 = arith.constant 0 : i32
    %c0_i32_1 = arith.constant 0 : i32
    return %c0_i32, %c0_i32_0 : i32, i32
  }
  func.func @transform_19(%arg0: i32) -> (i32, i32) {
    %c0_i32 = arith.constant 0 : i32
    %c0_i32_0 = arith.constant 0 : i32
    %c0_i32_1 = arith.constant 0 : i32
    return %c0_i32, %c0_i32_0 : i32, i32
  }
  func.func @transform_20(%arg0: i32) -> (i32, i32) {
    %c0_i32 = arith.constant 0 : i32
    %c0_i32_0 = arith.constant 0 : i32
    %c0_i32_1 = arith.constant 0 : i32
    return %c0_i32, %c0_i32_0 : i32, i32
  }
  func.func @transform_21(%arg0: i32) -> (i32, i32) {
    %c0_i32 = arith.constant 0 : i32
    %c0_i32_0 = arith.constant 0 : i32
    %c0_i32_1 = arith.constant 0 : i32
    return %c0_i32, %c0_i32_0 : i32, i32
  }
  func.func @transform_22(%arg0: i32) -> (i32, i32) {
    %c0_i32 = arith.constant 0 : i32
    %c0_i32_0 = arith.constant 0 : i32
    %c0_i32_1 = arith.constant 0 : i32
    return %c0_i32, %c0_i32_0 : i32, i32
  }
  func.func @transform_23(%arg0: i32) -> (i32, i32) {
    %c0_i32 = arith.constant 0 : i32
    %c0_i32_0 = arith.constant 0 : i32
    %c0_i32_1 = arith.constant 0 : i32
    return %c0_i32, %c0_i32_0 : i32, i32
  }
  func.func @transform_24(%arg0: i32) -> (i32, i32) {
    %c0_i32 = arith.constant 0 : i32
    %c0_i32_0 = arith.constant 0 : i32
    %c0_i32_1 = arith.constant 0 : i32
    return %c0_i32, %c0_i32_0 : i32, i32
  }
  func.func @transform_25(%arg0: i32) -> (i32, i32) {
    %c0_i32 = arith.constant 0 : i32
    %c0_i32_0 = arith.constant 0 : i32
    %c0_i32_1 = arith.constant 0 : i32
    return %c0_i32, %c0_i32_0 : i32, i32
  }
  func.func @transform_26(%arg0: i32) -> (i32, i32) {
    %c0_i32 = arith.constant 0 : i32
    %c0_i32_0 = arith.constant 0 : i32
    %c0_i32_1 = arith.constant 0 : i32
    return %c0_i32, %c0_i32_0 : i32, i32
  }
  func.func @transform_27(%arg0: i32) -> (i32, i32) {
    %c0_i32 = arith.constant 0 : i32
    %c0_i32_0 = arith.constant 0 : i32
    %c0_i32_1 = arith.constant 0 : i32
    return %c0_i32, %c0_i32_0 : i32, i32
  }
  func.func @transform_28(%arg0: i32) -> (i32, i32) {
    %c0_i32 = arith.constant 0 : i32
    %c0_i32_0 = arith.constant 0 : i32
    %c0_i32_1 = arith.constant 0 : i32
    return %c0_i32, %c0_i32_0 : i32, i32
  }
  func.func @transform_29(%arg0: i32) -> (i32, i32, i32) {
    %c0_i32 = arith.constant 0 : i32
    %c0_i32_0 = arith.constant 0 : i32
    %c0_i32_1 = arith.constant 0 : i32
    return %arg0, %c0_i32, %c0_i32_0 : i32, i32, i32
  }
}

</mosaic_0001>

<llo_original>
// kernel: spatial_transformer.1
$region0: #{spatial_transformer.1}
  #allocation0 [shape = 'u32[]', space=smem, size = 0x4, offset = 0x4, fixed_abs, tag = 'smem constant byte address 0x4 - core index']
  #allocation1 [shape = 'u32[144,128]{1,0:T(1,128)}', space=vmem, size = 0x12000, scoped, tag = 'internal scratch']
  #allocation2 [shape = 'bf16[64,128]{1,0:T(16,128)(2,1)}', space=vmem, size = 0x4000, scoped, tag = 'scratch operand']
  %s0 = inlined_call_operand.smem [shape: u32[30], index: -1, kind: input, shape index: {}]
  %s1 = sld [smem:[%s0]]
  %s2 = scalar_lea.smem %s0, 1
  %s3 = sld [smem:[%s2]]
  %s4 = scalar_lea.smem %s0, 2
  %s5 = sld [smem:[%s4]]
  %s6 = scalar_lea.smem %s0, 3
  %s7 = sld [smem:[%s6]]
  %s8 = scalar_lea.smem %s0, 4
  %s9 = sld [smem:[%s8]]
  %s10 = scalar_lea.smem %s0, 5
  %s11 = sld [smem:[%s10]]
  %s12 = scalar_lea.smem %s0, 6
  %s13 = sld [smem:[%s12]]
  %s14 = scalar_lea.smem %s0, 7
  %s15 = sld [smem:[%s14]]
  %s16 = scalar_lea.smem %s0, 8
  %s17 = sld [smem:[%s16]]
  %s18 = scalar_lea.smem %s0, 9
  %s19 = sld [smem:[%s18]]
  %s20 = scalar_lea.smem %s0, 10
  %s21 = sld [smem:[%s20]]
  %s22 = scalar_lea.smem %s0, 11
  %s23 = sld [smem:[%s22]]
  %s24 = scalar_lea.smem %s0, 12
  %s25 = sld [smem:[%s24]]
  %s26 = scalar_lea.smem %s0, 13
  %s27 = sld [smem:[%s26]]
  %s28 = scalar_lea.smem %s0, 14
  %s29 = sld [smem:[%s28]]
  %s30 = scalar_lea.smem %s0, 15
  %s31 = sld [smem:[%s30]]
  %s32 = scalar_lea.smem %s0, 16
  %s33 = sld [smem:[%s32]]
  %s34 = scalar_lea.smem %s0, 17
  %s35 = sld [smem:[%s34]]
  %s36 = scalar_lea.smem %s0, 18
  %s37 = sld [smem:[%s36]]
  %s38 = scalar_lea.smem %s0, 19
  %s39 = sld [smem:[%s38]]
  %s40 = scalar_lea.smem %s0, 20
  %s41 = sld [smem:[%s40]]
  %s42 = scalar_lea.smem %s0, 21
  %s43 = sld [smem:[%s42]]
  %s44 = scalar_lea.smem %s0, 22
  %s45 = sld [smem:[%s44]]
  %s46 = scalar_lea.smem %s0, 23
  %s47 = sld [smem:[%s46]]
  %s48 = scalar_lea.smem %s0, 24
  %s49 = sld [smem:[%s48]]
  %s50 = scalar_lea.smem %s0, 25
  %s51 = sld [smem:[%s50]]
  %s52 = scalar_lea.smem %s0, 26
  %s53 = sld [smem:[%s52]]
  %s54 = scalar_lea.smem %s0, 27
  %s55 = sld [smem:[%s54]]
  %s56 = scalar_lea.smem %s0, 28
  %s57 = sld [smem:[%s56]]
  %s58 = scalar_lea.smem %s0, 29
  %s59 = sld [smem:[%s58]]
  %s60 = sld [smem:[#allocation0]]
  $region149: #{spatial_transformer.1} parent=0
    _
  %s62 = ssub.s32 1, %s60
  %s63 = scalar_select 0, %s62, %s60
  $region1: #{spatial_transformer.1} parent=0
    #allocation3 [shape = 'u8[65536]{0}', space=vmem, size = 0x10000, scoped, tag = 'output window, operand 0']
    #allocation4 [shape = 's32[2]{0}', space=sflag, size = 0x8, scoped, tag = 'scoped memory for spatial_transformer.1']
    %64 = vsyncpa [#allocation4], 0
    %s65 = scalar_lea.sflag [#allocation4], 1
    %66 = vsyncpa %s65, 0
    loop: start=0, step=1, limit=4
    $region2: #{spatial_transformer.1} parent=1 // loop_pre_header
      _
    $region3: #{spatial_transformer.1} parent=1 // loop_header
      %s68 = sphi 0, %s72
      %p69 = scmp.ge.s32.totalorder %s68, 4
      %s78 = sphi 0, %s80
      %s81 = sphi 0, %s78
      %s82 = sphi 0, %s81
      %s98 = sphi 0, %s82
      %s102 = sphi 0, %s102
      %s104 = sphi 0, %s102
      %s105 = sphi 0, %s104
      %s119 = sphi 0, %s105
      %s123 = sphi 0, %s123
      %s125 = sphi 0, %s123
      %s126 = sphi 0, %s125
      %s140 = sphi 0, %s126
      %s144 = sphi 0, %s144
      %s146 = sphi 0, %s144
      %s147 = sphi 0, %s146
      %s161 = sphi 0, %s147
      %s165 = sphi 0, %s165
      %s167 = sphi 0, %s165
      %s168 = sphi 0, %s167
      %s182 = sphi 0, %s168
      %s186 = sphi 0, %s186
      %s188 = sphi 0, %s186
      %s189 = sphi 0, %s188
      %s203 = sphi 0, %s189
      %s207 = sphi 0, %s207
      %s209 = sphi 0, %s207
      %s210 = sphi 0, %s209
      %s224 = sphi 0, %s210
      %s228 = sphi 0, %s228
      %s230 = sphi 0, %s228
      %s231 = sphi 0, %s230
      %s245 = sphi 0, %s231
      %s249 = sphi 0, %s249
      %s251 = sphi 0, %s249
      %s252 = sphi 0, %s251
      %s266 = sphi 0, %s252
      %s270 = sphi 0, %s270
      %s272 = sphi 0, %s270
      %s273 = sphi 0, %s272
      %s287 = sphi 0, %s273
      %s291 = sphi 0, %s291
      %s293 = sphi 0, %s291
      %s294 = sphi 0, %s293
      %s308 = sphi 0, %s294
      %s312 = sphi 0, %s312
      %s314 = sphi 0, %s312
      %s315 = sphi 0, %s314
      %s329 = sphi 0, %s315
      %s333 = sphi 0, %s333
      %s335 = sphi 0, %s333
      %s336 = sphi 0, %s335
      %s350 = sphi 0, %s336
      %s354 = sphi 0, %s354
      %s356 = sphi 0, %s354
      %s357 = sphi 0, %s356
      %s371 = sphi 0, %s357
      %s375 = sphi 0, %s375
      %s377 = sphi 0, %s375
      %s378 = sphi 0, %s377
      %s392 = sphi 0, %s378
      %s396 = sphi 0, %s396
      %s398 = sphi 0, %s396
      %s399 = sphi 0, %s398
      %s413 = sphi 0, %s399
      %s417 = sphi 0, %s417
      %s419 = sphi 0, %s417
      %s420 = sphi 0, %s419
      %s434 = sphi 0, %s420
      %s438 = sphi 0, %s438
      %s440 = sphi 0, %s438
      %s441 = sphi 0, %s440
      %s455 = sphi 0, %s441
      %s459 = sphi 0, %s459
      %s461 = sphi 0, %s459
      %s462 = sphi 0, %s461
      %s476 = sphi 0, %s462
      %s480 = sphi 0, %s480
      %s482 = sphi 0, %s480
      %s483 = sphi 0, %s482
      %s497 = sphi 0, %s483
      %s501 = sphi 0, %s501
      %s503 = sphi 0, %s501
      %s504 = sphi 0, %s503
      %s518 = sphi 0, %s504
      %s522 = sphi 0, %s522
      %s524 = sphi 0, %s522
      %s525 = sphi 0, %s524
      %s539 = sphi 0, %s525
      %s543 = sphi 0, %s543
      %s545 = sphi 0, %s543
      %s546 = sphi 0, %s545
      %s560 = sphi 0, %s546
      %s564 = sphi 0, %s564
      %s566 = sphi 0, %s564
      %s567 = sphi 0, %s566
      %s581 = sphi 0, %s567
      %s585 = sphi 0, %s585
      %s587 = sphi 0, %s585
      %s588 = sphi 0, %s587
      %s602 = sphi 0, %s588
      %s606 = sphi 0, %s606
      %s608 = sphi 0, %s606
      %s609 = sphi 0, %s608
      %s623 = sphi 0, %s609
      %s627 = sphi 0, %s627
      %s629 = sphi 0, %s627
      %s630 = sphi 0, %s629
      %s644 = sphi 0, %s630
      %s648 = sphi 0, %s648
      %s650 = sphi 0, %s648
      %s651 = sphi 0, %s650
      %s665 = sphi 0, %s651
      %s669 = sphi 0, %s669
      %s671 = sphi 0, %s669
      %s672 = sphi 0, %s671
      %s686 = sphi 0, %s672
      %s692 = sphi 0, %s694
      %s695 = sphi 0, %s692
      %s696 = sphi 0, %s695
      %s712 = sphi 0, %s696
    $region4: #{spatial_transformer.1} parent=1 // loop_header_branch
      %71 = sbr.rel (%p69) target = $region8
    $region5: #{spatial_transformer.1} parent=1 // loop_body
      %s73 = ssub.s32 %s68, 1
      %s74 = ssub.s32 %s68, 2
      %s75 = sadd.s32 %s68, 1
      %s76 = ssub.s32 %s68, %s75
      %p77 = scmp.eq.s32.totalorder %s76, 0
      %s79 = sadd.s32 %s78, 1
      %s80 = scalar_select %p77, %s78, %s79
      %p83 = pneg %p77
      %p84 = scmp.eq.s32.totalorder %s68, 1
      %p85 = por %p83, %p84
      %p86 = scmp.ne.s32.totalorder %s78, %s81
      %p87 = scmp.eq.s32.totalorder %s68, 0
      %p88 = por %p86, %p87
      %p89 = scmp.ne.s32.totalorder %s78, %s81
      %p90 = scmp.eq.s32.totalorder %s73, 1
      %p91 = por %p89, %p90
      %p92 = scmp.ne.s32.totalorder %s81, %s82
      %p93 = scmp.eq.s32.totalorder %s73, 0
      %p94 = por %p92, %p93
      %p95 = scmp.ne.s32.totalorder %s81, %s82
      %p96 = scmp.eq.s32.totalorder %s74, 1
      %p97 = por %p95, %p96
      %p99 = scmp.ne.s32.totalorder %s82, %s98
      %p100 = scmp.eq.s32.totalorder %s74, 0
      %p101 = por %p99, %p100
      %s103 = sadd.s32 %s102, 1
      %p106 = scmp.eq.s32.totalorder %s68, 1
      %p107 = scmp.ne.s32.totalorder %s102, %s104
      %p108 = scmp.eq.s32.totalorder %s68, 0
      %p109 = por %p107, %p108
      %p110 = scmp.ne.s32.totalorder %s102, %s104
      %p111 = scmp.eq.s32.totalorder %s73, 1
      %p112 = por %p110, %p111
      %p113 = scmp.ne.s32.totalorder %s104, %s105
      %p114 = scmp.eq.s32.totalorder %s73, 0
      %p115 = por %p113, %p114
      %p116 = scmp.ne.s32.totalorder %s104, %s105
      %p117 = scmp.eq.s32.totalorder %s74, 1
      %p118 = por %p116, %p117
      %p120 = scmp.ne.s32.totalorder %s105, %s119
      %p121 = scmp.eq.s32.totalorder %s74, 0
      %p122 = por %p120, %p121
      %s124 = sadd.s32 %s123, 1
      %p127 = scmp.eq.s32.totalorder %s68, 1
      %p128 = scmp.ne.s32.totalorder %s123, %s125
      %p129 = scmp.eq.s32.totalorder %s68, 0
      %p130 = por %p128, %p129
      %p131 = scmp.ne.s32.totalorder %s123, %s125
      %p132 = scmp.eq.s32.totalorder %s73, 1
      %p133 = por %p131, %p132
      %p134 = scmp.ne.s32.totalorder %s125, %s126
      %p135 = scmp.eq.s32.totalorder %s73, 0
      %p136 = por %p134, %p135
      %p137 = scmp.ne.s32.totalorder %s125, %s126
      %p138 = scmp.eq.s32.totalorder %s74, 1
      %p139 = por %p137, %p138
      %p141 = scmp.ne.s32.totalorder %s126, %s140
      %p142 = scmp.eq.s32.totalorder %s74, 0
      %p143 = por %p141, %p142
      %s145 = sadd.s32 %s144, 1
      %p148 = scmp.eq.s32.totalorder %s68, 1
      %p149 = scmp.ne.s32.totalorder %s144, %s146
      %p150 = scmp.eq.s32.totalorder %s68, 0
      %p151 = por %p149, %p150
      %p152 = scmp.ne.s32.totalorder %s144, %s146
      %p153 = scmp.eq.s32.totalorder %s73, 1
      %p154 = por %p152, %p153
      %p155 = scmp.ne.s32.totalorder %s146, %s147
      %p156 = scmp.eq.s32.totalorder %s73, 0
      %p157 = por %p155, %p156
      %p158 = scmp.ne.s32.totalorder %s146, %s147
      %p159 = scmp.eq.s32.totalorder %s74, 1
      %p160 = por %p158, %p159
      %p162 = scmp.ne.s32.totalorder %s147, %s161
      %p163 = scmp.eq.s32.totalorder %s74, 0
      %p164 = por %p162, %p163
      %s166 = sadd.s32 %s165, 1
      %p169 = scmp.eq.s32.totalorder %s68, 1
      %p170 = scmp.ne.s32.totalorder %s165, %s167
      %p171 = scmp.eq.s32.totalorder %s68, 0
      %p172 = por %p170, %p171
      %p173 = scmp.ne.s32.totalorder %s165, %s167
      %p174 = scmp.eq.s32.totalorder %s73, 1
      %p175 = por %p173, %p174
      %p176 = scmp.ne.s32.totalorder %s167, %s168
      %p177 = scmp.eq.s32.totalorder %s73, 0
      %p178 = por %p176, %p177
      %p179 = scmp.ne.s32.totalorder %s167, %s168
      %p180 = scmp.eq.s32.totalorder %s74, 1
      %p181 = por %p179, %p180
      %p183 = scmp.ne.s32.totalorder %s168, %s182
      %p184 = scmp.eq.s32.totalorder %s74, 0
      %p185 = por %p183, %p184
      %s187 = sadd.s32 %s186, 1
      %p190 = scmp.eq.s32.totalorder %s68, 1
      %p191 = scmp.ne.s32.totalorder %s186, %s188
      %p192 = scmp.eq.s32.totalorder %s68, 0
      %p193 = por %p191, %p192
      %p194 = scmp.ne.s32.totalorder %s186, %s188
      %p195 = scmp.eq.s32.totalorder %s73, 1
      %p196 = por %p194, %p195
      %p197 = scmp.ne.s32.totalorder %s188, %s189
      %p198 = scmp.eq.s32.totalorder %s73, 0
      %p199 = por %p197, %p198
      %p200 = scmp.ne.s32.totalorder %s188, %s189
      %p201 = scmp.eq.s32.totalorder %s74, 1
      %p202 = por %p200, %p201
      %p204 = scmp.ne.s32.totalorder %s189, %s203
      %p205 = scmp.eq.s32.totalorder %s74, 0
      %p206 = por %p204, %p205
      %s208 = sadd.s32 %s207, 1
      %p211 = scmp.eq.s32.totalorder %s68, 1
      %p212 = scmp.ne.s32.totalorder %s207, %s209
      %p213 = scmp.eq.s32.totalorder %s68, 0
      %p214 = por %p212, %p213
      %p215 = scmp.ne.s32.totalorder %s207, %s209
      %p216 = scmp.eq.s32.totalorder %s73, 1
      %p217 = por %p215, %p216
      %p218 = scmp.ne.s32.totalorder %s209, %s210
      %p219 = scmp.eq.s32.totalorder %s73, 0
      %p220 = por %p218, %p219
      %p221 = scmp.ne.s32.totalorder %s209, %s210
      %p222 = scmp.eq.s32.totalorder %s74, 1
      %p223 = por %p221, %p222
      %p225 = scmp.ne.s32.totalorder %s210, %s224
      %p226 = scmp.eq.s32.totalorder %s74, 0
      %p227 = por %p225, %p226
      %s229 = sadd.s32 %s228, 1
      %p232 = scmp.eq.s32.totalorder %s68, 1
      %p233 = scmp.ne.s32.totalorder %s228, %s230
      %p234 = scmp.eq.s32.totalorder %s68, 0
      %p235 = por %p233, %p234
      %p236 = scmp.ne.s32.totalorder %s228, %s230
      %p237 = scmp.eq.s32.totalorder %s73, 1
      %p238 = por %p236, %p237
      %p239 = scmp.ne.s32.totalorder %s230, %s231
      %p240 = scmp.eq.s32.totalorder %s73, 0
      %p241 = por %p239, %p240
      %p242 = scmp.ne.s32.totalorder %s230, %s231
      %p243 = scmp.eq.s32.totalorder %s74, 1
      %p244 = por %p242, %p243
      %p246 = scmp.ne.s32.totalorder %s231, %s245
      %p247 = scmp.eq.s32.totalorder %s74, 0
      %p248 = por %p246, %p247
      %s250 = sadd.s32 %s249, 1
      %p253 = scmp.eq.s32.totalorder %s68, 1
      %p254 = scmp.ne.s32.totalorder %s249, %s251
      %p255 = scmp.eq.s32.totalorder %s68, 0
      %p256 = por %p254, %p255
      %p257 = scmp.ne.s32.totalorder %s249, %s251
      %p258 = scmp.eq.s32.totalorder %s73, 1
      %p259 = por %p257, %p258
      %p260 = scmp.ne.s32.totalorder %s251, %s252
      %p261 = scmp.eq.s32.totalorder %s73, 0
      %p262 = por %p260, %p261
      %p263 = scmp.ne.s32.totalorder %s251, %s252
      %p264 = scmp.eq.s32.totalorder %s74, 1
      %p265 = por %p263, %p264
      %p267 = scmp.ne.s32.totalorder %s252, %s266
      %p268 = scmp.eq.s32.totalorder %s74, 0
      %p269 = por %p267, %p268
      %s271 = sadd.s32 %s270, 1
      %p274 = scmp.eq.s32.totalorder %s68, 1
      %p275 = scmp.ne.s32.totalorder %s270, %s272
      %p276 = scmp.eq.s32.totalorder %s68, 0
      %p277 = por %p275, %p276
      %p278 = scmp.ne.s32.totalorder %s270, %s272
      %p279 = scmp.eq.s32.totalorder %s73, 1
      %p280 = por %p278, %p279
      %p281 = scmp.ne.s32.totalorder %s272, %s273
      %p282 = scmp.eq.s32.totalorder %s73, 0
      %p283 = por %p281, %p282
      %p284 = scmp.ne.s32.totalorder %s272, %s273
      %p285 = scmp.eq.s32.totalorder %s74, 1
      %p286 = por %p284, %p285
      %p288 = scmp.ne.s32.totalorder %s273, %s287
      %p289 = scmp.eq.s32.totalorder %s74, 0
      %p290 = por %p288, %p289
      %s292 = sadd.s32 %s291, 1
      %p295 = scmp.eq.s32.totalorder %s68, 1
      %p296 = scmp.ne.s32.totalorder %s291, %s293
      %p297 = scmp.eq.s32.totalorder %s68, 0
      %p298 = por %p296, %p297
      %p299 = scmp.ne.s32.totalorder %s291, %s293
      %p300 = scmp.eq.s32.totalorder %s73, 1
      %p301 = por %p299, %p300
      %p302 = scmp.ne.s32.totalorder %s293, %s294
      %p303 = scmp.eq.s32.totalorder %s73, 0
      %p304 = por %p302, %p303
      %p305 = scmp.ne.s32.totalorder %s293, %s294
      %p306 = scmp.eq.s32.totalorder %s74, 1
      %p307 = por %p305, %p306
      %p309 = scmp.ne.s32.totalorder %s294, %s308
      %p310 = scmp.eq.s32.totalorder %s74, 0
      %p311 = por %p309, %p310
      %s313 = sadd.s32 %s312, 1
      %p316 = scmp.eq.s32.totalorder %s68, 1
      %p317 = scmp.ne.s32.totalorder %s312, %s314
      %p318 = scmp.eq.s32.totalorder %s68, 0
      %p319 = por %p317, %p318
      %p320 = scmp.ne.s32.totalorder %s312, %s314
      %p321 = scmp.eq.s32.totalorder %s73, 1
      %p322 = por %p320, %p321
      %p323 = scmp.ne.s32.totalorder %s314, %s315
      %p324 = scmp.eq.s32.totalorder %s73, 0
      %p325 = por %p323, %p324
      %p326 = scmp.ne.s32.totalorder %s314, %s315
      %p327 = scmp.eq.s32.totalorder %s74, 1
      %p328 = por %p326, %p327
      %p330 = scmp.ne.s32.totalorder %s315, %s329
      %p331 = scmp.eq.s32.totalorder %s74, 0
      %p332 = por %p330, %p331
      %s334 = sadd.s32 %s333, 1
      %p337 = scmp.eq.s32.totalorder %s68, 1
      %p338 = scmp.ne.s32.totalorder %s333, %s335
      %p339 = scmp.eq.s32.totalorder %s68, 0
      %p340 = por %p338, %p339
      %p341 = scmp.ne.s32.totalorder %s333, %s335
      %p342 = scmp.eq.s32.totalorder %s73, 1
      %p343 = por %p341, %p342
      %p344 = scmp.ne.s32.totalorder %s335, %s336
      %p345 = scmp.eq.s32.totalorder %s73, 0
      %p346 = por %p344, %p345
      %p347 = scmp.ne.s32.totalorder %s335, %s336
      %p348 = scmp.eq.s32.totalorder %s74, 1
      %p349 = por %p347, %p348
      %p351 = scmp.ne.s32.totalorder %s336, %s350
      %p352 = scmp.eq.s32.totalorder %s74, 0
      %p353 = por %p351, %p352
      %s355 = sadd.s32 %s354, 1
      %p358 = scmp.eq.s32.totalorder %s68, 1
      %p359 = scmp.ne.s32.totalorder %s354, %s356
      %p360 = scmp.eq.s32.totalorder %s68, 0
      %p361 = por %p359, %p360
      %p362 = scmp.ne.s32.totalorder %s354, %s356
      %p363 = scmp.eq.s32.totalorder %s73, 1
      %p364 = por %p362, %p363
      %p365 = scmp.ne.s32.totalorder %s356, %s357
      %p366 = scmp.eq.s32.totalorder %s73, 0
      %p367 = por %p365, %p366
      %p368 = scmp.ne.s32.totalorder %s356, %s357
      %p369 = scmp.eq.s32.totalorder %s74, 1
      %p370 = por %p368, %p369
      %p372 = scmp.ne.s32.totalorder %s357, %s371
      %p373 = scmp.eq.s32.totalorder %s74, 0
      %p374 = por %p372, %p373
      %s376 = sadd.s32 %s375, 1
      %p379 = scmp.eq.s32.totalorder %s68, 1
      %p380 = scmp.ne.s32.totalorder %s375, %s377
      %p381 = scmp.eq.s32.totalorder %s68, 0
      %p382 = por %p380, %p381
      %p383 = scmp.ne.s32.totalorder %s375, %s377
      %p384 = scmp.eq.s32.totalorder %s73, 1
      %p385 = por %p383, %p384
      %p386 = scmp.ne.s32.totalorder %s377, %s378
      %p387 = scmp.eq.s32.totalorder %s73, 0
      %p388 = por %p386, %p387
      %p389 = scmp.ne.s32.totalorder %s377, %s378
      %p390 = scmp.eq.s32.totalorder %s74, 1
      %p391 = por %p389, %p390
      %p393 = scmp.ne.s32.totalorder %s378, %s392
      %p394 = scmp.eq.s32.totalorder %s74, 0
      %p395 = por %p393, %p394
      %s397 = sadd.s32 %s396, 1
      %p400 = scmp.eq.s32.totalorder %s68, 1
      %p401 = scmp.ne.s32.totalorder %s396, %s398
      %p402 = scmp.eq.s32.totalorder %s68, 0
      %p403 = por %p401, %p402
      %p404 = scmp.ne.s32.totalorder %s396, %s398
      %p405 = scmp.eq.s32.totalorder %s73, 1
      %p406 = por %p404, %p405
      %p407 = scmp.ne.s32.totalorder %s398, %s399
      %p408 = scmp.eq.s32.totalorder %s73, 0
      %p409 = por %p407, %p408
      %p410 = scmp.ne.s32.totalorder %s398, %s399
      %p411 = scmp.eq.s32.totalorder %s74, 1
      %p412 = por %p410, %p411
      %p414 = scmp.ne.s32.totalorder %s399, %s413
      %p415 = scmp.eq.s32.totalorder %s74, 0
      %p416 = por %p414, %p415
      %s418 = sadd.s32 %s417, 1
      %p421 = scmp.eq.s32.totalorder %s68, 1
      %p422 = scmp.ne.s32.totalorder %s417, %s419
      %p423 = scmp.eq.s32.totalorder %s68, 0
      %p424 = por %p422, %p423
      %p425 = scmp.ne.s32.totalorder %s417, %s419
      %p426 = scmp.eq.s32.totalorder %s73, 1
      %p427 = por %p425, %p426
      %p428 = scmp.ne.s32.totalorder %s419, %s420
      %p429 = scmp.eq.s32.totalorder %s73, 0
      %p430 = por %p428, %p429
      %p431 = scmp.ne.s32.totalorder %s419, %s420
      %p432 = scmp.eq.s32.totalorder %s74, 1
      %p433 = por %p431, %p432
      %p435 = scmp.ne.s32.totalorder %s420, %s434
      %p436 = scmp.eq.s32.totalorder %s74, 0
      %p437 = por %p435, %p436
      %s439 = sadd.s32 %s438, 1
      %p442 = scmp.eq.s32.totalorder %s68, 1
      %p443 = scmp.ne.s32.totalorder %s438, %s440
      %p444 = scmp.eq.s32.totalorder %s68, 0
      %p445 = por %p443, %p444
      %p446 = scmp.ne.s32.totalorder %s438, %s440
      %p447 = scmp.eq.s32.totalorder %s73, 1
      %p448 = por %p446, %p447
      %p449 = scmp.ne.s32.totalorder %s440, %s441
      %p450 = scmp.eq.s32.totalorder %s73, 0
      %p451 = por %p449, %p450
      %p452 = scmp.ne.s32.totalorder %s440, %s441
      %p453 = scmp.eq.s32.totalorder %s74, 1
      %p454 = por %p452, %p453
      %p456 = scmp.ne.s32.totalorder %s441, %s455
      %p457 = scmp.eq.s32.totalorder %s74, 0
      %p458 = por %p456, %p457
      %s460 = sadd.s32 %s459, 1
      %p463 = scmp.eq.s32.totalorder %s68, 1
      %p464 = scmp.ne.s32.totalorder %s459, %s461
      %p465 = scmp.eq.s32.totalorder %s68, 0
      %p466 = por %p464, %p465
      %p467 = scmp.ne.s32.totalorder %s459, %s461
      %p468 = scmp.eq.s32.totalorder %s73, 1
      %p469 = por %p467, %p468
      %p470 = scmp.ne.s32.totalorder %s461, %s462
      %p471 = scmp.eq.s32.totalorder %s73, 0
      %p472 = por %p470, %p471
      %p473 = scmp.ne.s32.totalorder %s461, %s462
      %p474 = scmp.eq.s32.totalorder %s74, 1
      %p475 = por %p473, %p474
      %p477 = scmp.ne.s32.totalorder %s462, %s476
      %p478 = scmp.eq.s32.totalorder %s74, 0
      %p479 = por %p477, %p478
      %s481 = sadd.s32 %s480, 1
      %p484 = scmp.eq.s32.totalorder %s68, 1
      %p485 = scmp.ne.s32.totalorder %s480, %s482
      %p486 = scmp.eq.s32.totalorder %s68, 0
      %p487 = por %p485, %p486
      %p488 = scmp.ne.s32.totalorder %s480, %s482
      %p489 = scmp.eq.s32.totalorder %s73, 1
      %p490 = por %p488, %p489
      %p491 = scmp.ne.s32.totalorder %s482, %s483
      %p492 = scmp.eq.s32.totalorder %s73, 0
      %p493 = por %p491, %p492
      %p494 = scmp.ne.s32.totalorder %s482, %s483
      %p495 = scmp.eq.s32.totalorder %s74, 1
      %p496 = por %p494, %p495
      %p498 = scmp.ne.s32.totalorder %s483, %s497
      %p499 = scmp.eq.s32.totalorder %s74, 0
      %p500 = por %p498, %p499
      %s502 = sadd.s32 %s501, 1
      %p505 = scmp.eq.s32.totalorder %s68, 1
      %p506 = scmp.ne.s32.totalorder %s501, %s503
      %p507 = scmp.eq.s32.totalorder %s68, 0
      %p508 = por %p506, %p507
      %p509 = scmp.ne.s32.totalorder %s501, %s503
      %p510 = scmp.eq.s32.totalorder %s73, 1
      %p511 = por %p509, %p510
      %p512 = scmp.ne.s32.totalorder %s503, %s504
      %p513 = scmp.eq.s32.totalorder %s73, 0
      %p514 = por %p512, %p513
      %p515 = scmp.ne.s32.totalorder %s503, %s504
      %p516 = scmp.eq.s32.totalorder %s74, 1
      %p517 = por %p515, %p516
      %p519 = scmp.ne.s32.totalorder %s504, %s518
      %p520 = scmp.eq.s32.totalorder %s74, 0
      %p521 = por %p519, %p520
      %s523 = sadd.s32 %s522, 1
      %p526 = scmp.eq.s32.totalorder %s68, 1
      %p527 = scmp.ne.s32.totalorder %s522, %s524
      %p528 = scmp.eq.s32.totalorder %s68, 0
      %p529 = por %p527, %p528
      %p530 = scmp.ne.s32.totalorder %s522, %s524
      %p531 = scmp.eq.s32.totalorder %s73, 1
      %p532 = por %p530, %p531
      %p533 = scmp.ne.s32.totalorder %s524, %s525
      %p534 = scmp.eq.s32.totalorder %s73, 0
      %p535 = por %p533, %p534
      %p536 = scmp.ne.s32.totalorder %s524, %s525
      %p537 = scmp.eq.s32.totalorder %s74, 1
      %p538 = por %p536, %p537
      %p540 = scmp.ne.s32.totalorder %s525, %s539
      %p541 = scmp.eq.s32.totalorder %s74, 0
      %p542 = por %p540, %p541
      %s544 = sadd.s32 %s543, 1
      %p547 = scmp.eq.s32.totalorder %s68, 1
      %p548 = scmp.ne.s32.totalorder %s543, %s545
      %p549 = scmp.eq.s32.totalorder %s68, 0
      %p550 = por %p548, %p549
      %p551 = scmp.ne.s32.totalorder %s543, %s545
      %p552 = scmp.eq.s32.totalorder %s73, 1
      %p553 = por %p551, %p552
      %p554 = scmp.ne.s32.totalorder %s545, %s546
      %p555 = scmp.eq.s32.totalorder %s73, 0
      %p556 = por %p554, %p555
      %p557 = scmp.ne.s32.totalorder %s545, %s546
      %p558 = scmp.eq.s32.totalorder %s74, 1
      %p559 = por %p557, %p558
      %p561 = scmp.ne.s32.totalorder %s546, %s560
      %p562 = scmp.eq.s32.totalorder %s74, 0
      %p563 = por %p561, %p562
      %s565 = sadd.s32 %s564, 1
      %p568 = scmp.eq.s32.totalorder %s68, 1
      %p569 = scmp.ne.s32.totalorder %s564, %s566
      %p570 = scmp.eq.s32.totalorder %s68, 0
      %p571 = por %p569, %p570
      %p572 = scmp.ne.s32.totalorder %s564, %s566
      %p573 = scmp.eq.s32.totalorder %s73, 1
      %p574 = por %p572, %p573
      %p575 = scmp.ne.s32.totalorder %s566, %s567
      %p576 = scmp.eq.s32.totalorder %s73, 0
      %p577 = por %p575, %p576
      %p578 = scmp.ne.s32.totalorder %s566, %s567
      %p579 = scmp.eq.s32.totalorder %s74, 1
      %p580 = por %p578, %p579
      %p582 = scmp.ne.s32.totalorder %s567, %s581
      %p583 = scmp.eq.s32.totalorder %s74, 0
      %p584 = por %p582, %p583
      %s586 = sadd.s32 %s585, 1
      %p589 = scmp.eq.s32.totalorder %s68, 1
      %p590 = scmp.ne.s32.totalorder %s585, %s587
      %p591 = scmp.eq.s32.totalorder %s68, 0
      %p592 = por %p590, %p591
      %p593 = scmp.ne.s32.totalorder %s585, %s587
      %p594 = scmp.eq.s32.totalorder %s73, 1
      %p595 = por %p593, %p594
      %p596 = scmp.ne.s32.totalorder %s587, %s588
      %p597 = scmp.eq.s32.totalorder %s73, 0
      %p598 = por %p596, %p597
      %p599 = scmp.ne.s32.totalorder %s587, %s588
      %p600 = scmp.eq.s32.totalorder %s74, 1
      %p601 = por %p599, %p600
      %p603 = scmp.ne.s32.totalorder %s588, %s602
      %p604 = scmp.eq.s32.totalorder %s74, 0
      %p605 = por %p603, %p604
      %s607 = sadd.s32 %s606, 1
      %p610 = scmp.eq.s32.totalorder %s68, 1
      %p611 = scmp.ne.s32.totalorder %s606, %s608
      %p612 = scmp.eq.s32.totalorder %s68, 0
      %p613 = por %p611, %p612
      %p614 = scmp.ne.s32.totalorder %s606, %s608
      %p615 = scmp.eq.s32.totalorder %s73, 1
      %p616 = por %p614, %p615
      %p617 = scmp.ne.s32.totalorder %s608, %s609
      %p618 = scmp.eq.s32.totalorder %s73, 0
      %p619 = por %p617, %p618
      %p620 = scmp.ne.s32.totalorder %s608, %s609
      %p621 = scmp.eq.s32.totalorder %s74, 1
      %p622 = por %p620, %p621
      %p624 = scmp.ne.s32.totalorder %s609, %s623
      %p625 = scmp.eq.s32.totalorder %s74, 0
      %p626 = por %p624, %p625
      %s628 = sadd.s32 %s627, 1
      %p631 = scmp.eq.s32.totalorder %s68, 1
      %p632 = scmp.ne.s32.totalorder %s627, %s629
      %p633 = scmp.eq.s32.totalorder %s68, 0
      %p634 = por %p632, %p633
      %p635 = scmp.ne.s32.totalorder %s627, %s629
      %p636 = scmp.eq.s32.totalorder %s73, 1
      %p637 = por %p635, %p636
      %p638 = scmp.ne.s32.totalorder %s629, %s630
      %p639 = scmp.eq.s32.totalorder %s73, 0
      %p640 = por %p638, %p639
      %p641 = scmp.ne.s32.totalorder %s629, %s630
      %p642 = scmp.eq.s32.totalorder %s74, 1
      %p643 = por %p641, %p642
      %p645 = scmp.ne.s32.totalorder %s630, %s644
      %p646 = scmp.eq.s32.totalorder %s74, 0
      %p647 = por %p645, %p646
      %s649 = sadd.s32 %s648, 1
      %p652 = scmp.eq.s32.totalorder %s68, 1
      %p653 = scmp.ne.s32.totalorder %s648, %s650
      %p654 = scmp.eq.s32.totalorder %s68, 0
      %p655 = por %p653, %p654
      %p656 = scmp.ne.s32.totalorder %s648, %s650
      %p657 = scmp.eq.s32.totalorder %s73, 1
      %p658 = por %p656, %p657
      %p659 = scmp.ne.s32.totalorder %s650, %s651
      %p660 = scmp.eq.s32.totalorder %s73, 0
      %p661 = por %p659, %p660
      %p662 = scmp.ne.s32.totalorder %s650, %s651
      %p663 = scmp.eq.s32.totalorder %s74, 1
      %p664 = por %p662, %p663
      %p666 = scmp.ne.s32.totalorder %s651, %s665
      %p667 = scmp.eq.s32.totalorder %s74, 0
      %p668 = por %p666, %p667
      %s670 = sadd.s32 %s669, 1
      %p673 = scmp.eq.s32.totalorder %s68, 1
      %p674 = scmp.ne.s32.totalorder %s669, %s671
      %p675 = scmp.eq.s32.totalorder %s68, 0
      %p676 = por %p674, %p675
      %p677 = scmp.ne.s32.totalorder %s669, %s671
      %p678 = scmp.eq.s32.totalorder %s73, 1
      %p679 = por %p677, %p678
      %p680 = scmp.ne.s32.totalorder %s671, %s672
      %p681 = scmp.eq.s32.totalorder %s73, 0
      %p682 = por %p680, %p681
      %p683 = scmp.ne.s32.totalorder %s671, %s672
      %p684 = scmp.eq.s32.totalorder %s74, 1
      %p685 = por %p683, %p684
      %p687 = scmp.ne.s32.totalorder %s672, %s686
      %p688 = scmp.eq.s32.totalorder %s74, 0
      %p689 = por %p687, %p688
      %s690 = ssub.s32 %s68, %s75
      %p691 = scmp.eq.s32.totalorder %s690, 0
      %s693 = sadd.s32 %s692, 1
      %s694 = scalar_select %p691, %s692, %s693
      %p697 = pneg %p691
      %p698 = scmp.eq.s32.totalorder %s68, 1
      %p699 = por %p697, %p698
      %p700 = scmp.ne.s32.totalorder %s692, %s695
      %p701 = scmp.eq.s32.totalorder %s68, 0
      %p702 = por %p700, %p701
      %p703 = scmp.ne.s32.totalorder %s692, %s695
      %p704 = scmp.eq.s32.totalorder %s73, 1
      %p705 = por %p703, %p704
      %p706 = scmp.ne.s32.totalorder %s695, %s696
      %p707 = scmp.eq.s32.totalorder %s73, 0
      %p708 = por %p706, %p707
      %p709 = scmp.ne.s32.totalorder %s695, %s696
      %p710 = scmp.eq.s32.totalorder %s74, 1
      %p711 = por %p709, %p710
      %p713 = scmp.ne.s32.totalorder %s696, %s712
      %p714 = scmp.eq.s32.totalorder %s74, 0
      %p715 = por %p713, %p714
      %p716 = scmp.le.s32.totalorder 1, %s68
      %p717 = scmp.lt.s32.totalorder %s68, 3
      %p718 = pnand %p716, %p717
      %p719 = pneg %p718
      // Predicated region
      $region9: #{spatial_transformer.1} parent=5 // pred_check
        _
      $region10: #{spatial_transformer.1} parent=5 // pred_check_branch
        %721 = sbr.rel (%p718) target = $region12
      $region11: #{spatial_transformer.1} parent=5 // pred_region
        %s722 = ssub.s32 %s68, 1
        // Predicated region
        $region13: #{spatial_transformer.1} parent=11 // pred_check
          %p723 = pneg %p115
        $region14: #{spatial_transformer.1} parent=11 // pred_check_branch
          %725 = sbr.rel (%p723) target = $region16
        $region15: #{spatial_transformer.1} parent=11 // pred_region
          _
        $region16: #{spatial_transformer.1} parent=11 // pred_fallthru
          _
        // Predicated region
        $region17: #{spatial_transformer.1} parent=11 // pred_check
          %p726 = pneg %p136
        $region18: #{spatial_transformer.1} parent=11 // pred_check_branch
          %728 = sbr.rel (%p726) target = $region20
        $region19: #{spatial_transformer.1} parent=11 // pred_region
          _
        $region20: #{spatial_transformer.1} parent=11 // pred_fallthru
          _
        // Predicated region
        $region21: #{spatial_transformer.1} parent=11 // pred_check
          %p729 = pneg %p157
        $region22: #{spatial_transformer.1} parent=11 // pred_check_branch
          %731 = sbr.rel (%p729) target = $region24
        $region23: #{spatial_transformer.1} parent=11 // pred_region
          _
        $region24: #{spatial_transformer.1} parent=11 // pred_fallthru
          _
        // Predicated region
        $region25: #{spatial_transformer.1} parent=11 // pred_check
          %p732 = pneg %p178
        $region26: #{spatial_transformer.1} parent=11 // pred_check_branch
          %734 = sbr.rel (%p732) target = $region28
        $region27: #{spatial_transformer.1} parent=11 // pred_region
          _
        $region28: #{spatial_transformer.1} parent=11 // pred_fallthru
          _
        // Predicated region
        $region29: #{spatial_transformer.1} parent=11 // pred_check
          %p735 = pneg %p199
        $region30: #{spatial_transformer.1} parent=11 // pred_check_branch
          %737 = sbr.rel (%p735) target = $region32
        $region31: #{spatial_transformer.1} parent=11 // pred_region
          _
        $region32: #{spatial_transformer.1} parent=11 // pred_fallthru
          _
        // Predicated region
        $region33: #{spatial_transformer.1} parent=11 // pred_check
          %p738 = pneg %p220
        $region34: #{spatial_transformer.1} parent=11 // pred_check_branch
          %740 = sbr.rel (%p738) target = $region36
        $region35: #{spatial_transformer.1} parent=11 // pred_region
          _
        $region36: #{spatial_transformer.1} parent=11 // pred_fallthru
          _
        // Predicated region
        $region37: #{spatial_transformer.1} parent=11 // pred_check
          %p741 = pneg %p241
        $region38: #{spatial_transformer.1} parent=11 // pred_check_branch
          %743 = sbr.rel (%p741) target = $region40
        $region39: #{spatial_transformer.1} parent=11 // pred_region
          _
        $region40: #{spatial_transformer.1} parent=11 // pred_fallthru
          _
        // Predicated region
        $region41: #{spatial_transformer.1} parent=11 // pred_check
          %p744 = pneg %p262
        $region42: #{spatial_transformer.1} parent=11 // pred_check_branch
          %746 = sbr.rel (%p744) target = $region44
        $region43: #{spatial_transformer.1} parent=11 // pred_region
          _
        $region44: #{spatial_transformer.1} parent=11 // pred_fallthru
          _
        // Predicated region
        $region45: #{spatial_transformer.1} parent=11 // pred_check
          %p747 = pneg %p283
        $region46: #{spatial_transformer.1} parent=11 // pred_check_branch
          %749 = sbr.rel (%p747) target = $region48
        $region47: #{spatial_transformer.1} parent=11 // pred_region
          _
        $region48: #{spatial_transformer.1} parent=11 // pred_fallthru
          _
        // Predicated region
        $region49: #{spatial_transformer.1} parent=11 // pred_check
          %p750 = pneg %p304
        $region50: #{spatial_transformer.1} parent=11 // pred_check_branch
          %752 = sbr.rel (%p750) target = $region52
        $region51: #{spatial_transformer.1} parent=11 // pred_region
          _
        $region52: #{spatial_transformer.1} parent=11 // pred_fallthru
          _
        // Predicated region
        $region53: #{spatial_transformer.1} parent=11 // pred_check
          %p753 = pneg %p325
        $region54: #{spatial_transformer.1} parent=11 // pred_check_branch
          %755 = sbr.rel (%p753) target = $region56
        $region55: #{spatial_transformer.1} parent=11 // pred_region
          _
        $region56: #{spatial_transformer.1} parent=11 // pred_fallthru
          _
        // Predicated region
        $region57: #{spatial_transformer.1} parent=11 // pred_check
          %p756 = pneg %p346
        $region58: #{spatial_transformer.1} parent=11 // pred_check_branch
          %758 = sbr.rel (%p756) target = $region60
        $region59: #{spatial_transformer.1} parent=11 // pred_region
          _
        $region60: #{spatial_transformer.1} parent=11 // pred_fallthru
          _
        // Predicated region
        $region61: #{spatial_transformer.1} parent=11 // pred_check
          %p759 = pneg %p367
        $region62: #{spatial_transformer.1} parent=11 // pred_check_branch
          %761 = sbr.rel (%p759) target = $region64
        $region63: #{spatial_transformer.1} parent=11 // pred_region
          _
        $region64: #{spatial_transformer.1} parent=11 // pred_fallthru
          _
        // Predicated region
        $region65: #{spatial_transformer.1} parent=11 // pred_check
          %p762 = pneg %p388
        $region66: #{spatial_transformer.1} parent=11 // pred_check_branch
          %764 = sbr.rel (%p762) target = $region68
        $region67: #{spatial_transformer.1} parent=11 // pred_region
          _
        $region68: #{spatial_transformer.1} parent=11 // pred_fallthru
          _
        // Predicated region
        $region69: #{spatial_transformer.1} parent=11 // pred_check
          %p765 = pneg %p409
        $region70: #{spatial_transformer.1} parent=11 // pred_check_branch
          %767 = sbr.rel (%p765) target = $region72
        $region71: #{spatial_transformer.1} parent=11 // pred_region
          _
        $region72: #{spatial_transformer.1} parent=11 // pred_fallthru
          _
        // Predicated region
        $region73: #{spatial_transformer.1} parent=11 // pred_check
          %p768 = pneg %p430
        $region74: #{spatial_transformer.1} parent=11 // pred_check_branch
          %770 = sbr.rel (%p768) target = $region76
        $region75: #{spatial_transformer.1} parent=11 // pred_region
          _
        $region76: #{spatial_transformer.1} parent=11 // pred_fallthru
          _
        // Predicated region
        $region77: #{spatial_transformer.1} parent=11 // pred_check
          %p771 = pneg %p451
        $region78: #{spatial_transformer.1} parent=11 // pred_check_branch
          %773 = sbr.rel (%p771) target = $region80
        $region79: #{spatial_transformer.1} parent=11 // pred_region
          _
        $region80: #{spatial_transformer.1} parent=11 // pred_fallthru
          _
        // Predicated region
        $region81: #{spatial_transformer.1} parent=11 // pred_check
          %p774 = pneg %p472
        $region82: #{spatial_transformer.1} parent=11 // pred_check_branch
          %776 = sbr.rel (%p774) target = $region84
        $region83: #{spatial_transformer.1} parent=11 // pred_region
          _
        $region84: #{spatial_transformer.1} parent=11 // pred_fallthru
          _
        // Predicated region
        $region85: #{spatial_transformer.1} parent=11 // pred_check
          %p777 = pneg %p493
        $region86: #{spatial_transformer.1} parent=11 // pred_check_branch
          %779 = sbr.rel (%p777) target = $region88
        $region87: #{spatial_transformer.1} parent=11 // pred_region
          _
        $region88: #{spatial_transformer.1} parent=11 // pred_fallthru
          _
        // Predicated region
        $region89: #{spatial_transformer.1} parent=11 // pred_check
          %p780 = pneg %p514
        $region90: #{spatial_transformer.1} parent=11 // pred_check_branch
          %782 = sbr.rel (%p780) target = $region92
        $region91: #{spatial_transformer.1} parent=11 // pred_region
          _
        $region92: #{spatial_transformer.1} parent=11 // pred_fallthru
          _
        // Predicated region
        $region93: #{spatial_transformer.1} parent=11 // pred_check
          %p783 = pneg %p535
        $region94: #{spatial_transformer.1} parent=11 // pred_check_branch
          %785 = sbr.rel (%p783) target = $region96
        $region95: #{spatial_transformer.1} parent=11 // pred_region
          _
        $region96: #{spatial_transformer.1} parent=11 // pred_fallthru
          _
        // Predicated region
        $region97: #{spatial_transformer.1} parent=11 // pred_check
          %p786 = pneg %p556
        $region98: #{spatial_transformer.1} parent=11 // pred_check_branch
          %788 = sbr.rel (%p786) target = $region100
        $region99: #{spatial_transformer.1} parent=11 // pred_region
          _
        $region100: #{spatial_transformer.1} parent=11 // pred_fallthru
          _
        // Predicated region
        $region101: #{spatial_transformer.1} parent=11 // pred_check
          %p789 = pneg %p577
        $region102: #{spatial_transformer.1} parent=11 // pred_check_branch
          %791 = sbr.rel (%p789) target = $region104
        $region103: #{spatial_transformer.1} parent=11 // pred_region
          _
        $region104: #{spatial_transformer.1} parent=11 // pred_fallthru
          _
        // Predicated region
        $region105: #{spatial_transformer.1} parent=11 // pred_check
          %p792 = pneg %p598
        $region106: #{spatial_transformer.1} parent=11 // pred_check_branch
          %794 = sbr.rel (%p792) target = $region108
        $region107: #{spatial_transformer.1} parent=11 // pred_region
          _
        $region108: #{spatial_transformer.1} parent=11 // pred_fallthru
          _
        // Predicated region
        $region109: #{spatial_transformer.1} parent=11 // pred_check
          %p795 = pneg %p619
        $region110: #{spatial_transformer.1} parent=11 // pred_check_branch
          %797 = sbr.rel (%p795) target = $region112
        $region111: #{spatial_transformer.1} parent=11 // pred_region
          _
        $region112: #{spatial_transformer.1} parent=11 // pred_fallthru
          _
        // Predicated region
        $region113: #{spatial_transformer.1} parent=11 // pred_check
          %p798 = pneg %p640
        $region114: #{spatial_transformer.1} parent=11 // pred_check_branch
          %800 = sbr.rel (%p798) target = $region116
        $region115: #{spatial_transformer.1} parent=11 // pred_region
          _
        $region116: #{spatial_transformer.1} parent=11 // pred_fallthru
          _
        // Predicated region
        $region117: #{spatial_transformer.1} parent=11 // pred_check
          %p801 = pneg %p661
        $region118: #{spatial_transformer.1} parent=11 // pred_check_branch
          %803 = sbr.rel (%p801) target = $region120
        $region119: #{spatial_transformer.1} parent=11 // pred_region
          _
        $region120: #{spatial_transformer.1} parent=11 // pred_fallthru
          _
        // Predicated region
        $region121: #{spatial_transformer.1} parent=11 // pred_check
          %p804 = pneg %p682
        $region122: #{spatial_transformer.1} parent=11 // pred_check_branch
          %806 = sbr.rel (%p804) target = $region124
        $region123: #{spatial_transformer.1} parent=11 // pred_region
          _
        $region124: #{spatial_transformer.1} parent=11 // pred_fallthru
          _
      $region12: #{spatial_transformer.1} parent=5 // pred_fallthru
        _
      %p807 = scmp.lt.s32.totalorder %s68, 2
      // Predicated region
      $region125: #{spatial_transformer.1} parent=5 // pred_check
        %p808 = pneg %p807
      $region126: #{spatial_transformer.1} parent=5 // pred_check_branch
        %810 = sbr.rel (%p808) target = $region128
      $region127: #{spatial_transformer.1} parent=5 // pred_region
        // Predicated region
        $region129: #{spatial_transformer.1} parent=127 // pred_check
          %p811 = pneg %p88
        $region130: #{spatial_transformer.1} parent=127 // pred_check_branch
          %813 = sbr.rel (%p811) target = $region132
        $region131: #{spatial_transformer.1} parent=127 // pred_region
          %p814 = scmp.lt.s32.totalorder %s68, 1
          %s815 = scalar_select %p814, %s68, 1
          %s816 = smul.addr %s815, 8
          %s817 = smul.addr %s816, 8
          %s818 = scalar_lea.vmem %s1, %s817
        $region132: #{spatial_transformer.1} parent=127 // pred_fallthru
          _
      $region128: #{spatial_transformer.1} parent=5 // pred_fallthru
        _
      %p819 = scmp.le.s32.totalorder 1, %s68
      %p820 = scmp.lt.s32.totalorder %s68, 3
      %p821 = pnand %p819, %p820
      %p822 = pneg %p821
      // Predicated region
      $region133: #{spatial_transformer.1} parent=5 // pred_check
        _
      $region134: #{spatial_transformer.1} parent=5 // pred_check_branch
        %824 = sbr.rel (%p821) target = $region136
      $region135: #{spatial_transformer.1} parent=5 // pred_region
        %s825 = ssub.s32 %s68, 1
        %p826 = scmp.lt.s32.totalorder %s73, 1
        %s827 = scalar_select %p826, %s73, 1
        %s828 = smul.addr %s827, 8
        %s829 = smul.addr %s828, 8
        %s830 = scalar_lea.vmem %s1, %s829
        %p831 = pneg %p94
        %p832 = pneg %p91
        %p833 = pneg %p115
        %p834 = pneg %p112
        %p835 = pneg %p136
        %p836 = pneg %p133
        %p837 = pneg %p157
        %p838 = pneg %p154
        %p839 = pneg %p178
        %p840 = pneg %p175
        %p841 = pneg %p199
        %p842 = pneg %p196
        %p843 = pneg %p220
        %p844 = pneg %p217
        %p845 = pneg %p241
        %p846 = pneg %p238
        %p847 = pneg %p262
        %p848 = pneg %p259
        %p849 = pneg %p283
        %p850 = pneg %p280
        %p851 = pneg %p304
        %p852 = pneg %p301
        %p853 = pneg %p325
        %p854 = pneg %p322
        %p855 = pneg %p346
        %p856 = pneg %p343
        %p857 = pneg %p367
        %p858 = pneg %p364
        %p859 = pneg %p388
        %p860 = pneg %p385
        %p861 = pneg %p409
        %p862 = pneg %p406
        %p863 = pneg %p430
        %p864 = pneg %p427
        %p865 = pneg %p451
        %p866 = pneg %p448
        %p867 = pneg %p472
        %p868 = pneg %p469
        %p869 = pneg %p493
        %p870 = pneg %p490
        %p871 = pneg %p514
        %p872 = pneg %p511
        %p873 = pneg %p535
        %p874 = pneg %p532
        %p875 = pneg %p556
        %p876 = pneg %p553
        %p877 = pneg %p577
        %p878 = pneg %p574
        %p879 = pneg %p598
        %p880 = pneg %p595
        %p881 = pneg %p619
        %p882 = pneg %p616
        %p883 = pneg %p640
        %p884 = pneg %p637
        %p885 = pneg %p661
        %p886 = pneg %p658
        %p887 = pneg %p682
        %p888 = pneg %p679
        %p889 = pneg %p708
        %p890 = pneg %p705
        %s891 = sand.u32 %s695, 1
        %s892 = scalar_lea.sflag [#allocation4], %s891
        %s893 = sand.u32 %s695, 1
        %s894 = smul.addr %s893, 64
        %s895 = scalar_lea.vmem [#allocation3], %s894
        %p896 = scmp.lt.s32.totalorder %s73, 1
        %s897 = scalar_select %p896, %s73, 1
        %s898 = smul.addr %s897, 8
        %s899 = smul.addr %s898, 8
        %s900 = scalar_lea.vmem %s1, %s899
        %v902 = vld [vmem:[%s900] sm:$0xff]
        %v903 = vld [vmem:[%s900 + $0x8] sm:$0xff]
        %v904 = vld [vmem:[%s900 + $0x10] sm:$0xff]
        %v905 = vld [vmem:[%s900 + $0x18] sm:$0xff]
        %v906 = vld [vmem:[%s900 + $0x20] sm:$0xff]
        %v907 = vld [vmem:[%s900 + $0x28] sm:$0xff]
        %v908 = vld [vmem:[%s900 + $0x30] sm:$0xff]
        %v909 = vld [vmem:[%s900 + $0x38] sm:$0xff]
        %v910 = vld [vmem:[%s7] sm:$0xff]
        %v911 = vld [vmem:[%s7 + $0x8] sm:$0xff]
        %v912 = vld [vmem:[%s7 + $0x10] sm:$0xff]
        %v913 = vld [vmem:[%s7 + $0x18] sm:$0xff]
        %v914 = vld [vmem:[%s7 + $0x20] sm:$0xff]
        %v915 = vld [vmem:[%s7 + $0x28] sm:$0xff]
        %v916 = vld [vmem:[%s7 + $0x30] sm:$0xff]
        %v917 = vld [vmem:[%s7 + $0x38] sm:$0xff]
        %v918 = vld [vmem:[%s7 + $0x40] sm:$0xff]
        %v919 = vld [vmem:[%s7 + $0x48] sm:$0xff]
        %v920 = vld [vmem:[%s7 + $0x50] sm:$0xff]
        %v921 = vld [vmem:[%s7 + $0x58] sm:$0xff]
        %v922 = vld [vmem:[%s7 + $0x60] sm:$0xff]
        %v923 = vld [vmem:[%s7 + $0x68] sm:$0xff]
        %v924 = vld [vmem:[%s7 + $0x70] sm:$0xff]
        %v925 = vld [vmem:[%s7 + $0x78] sm:$0xff]
        %v926 = vld [vmem:[%s9] sm:$0xff]
        %v927 = vld [vmem:[%s9 + $0x8] sm:$0xff]
        %v928 = vld [vmem:[%s9 + $0x10] sm:$0xff]
        %v929 = vld [vmem:[%s9 + $0x18] sm:$0xff]
        %v930 = vadd.f32 %v902, %v903
        %v931 = vadd.f32 %v930, %v904
        %v932 = vadd.f32 %v931, %v905
        %v933 = vadd.f32 %v932, %v906
        %v934 = vadd.f32 %v933, %v907
        %v935 = vadd.f32 %v934, %v908
        %v936 = vadd.f32 %v935, %v909
        %v937 = vrot.slane %v936, 4
        %v938 = vadd.f32 %v936, %v937
        %v939 = vrot.slane %v938, 2
        %v940 = vadd.f32 %v938, %v939
        %v941 = vrot.slane %v940, 1
        %v942 = vadd.f32 %v940, %v941
        %943 = vmatprep.subr.mxu0 0.0
        %944 = vmatpush1.msra.mxu0 %v910
        %945 = vmatprep.subr.mxu0 0.0
        %946 = vmatpush1.msra.mxu0 %v911
        %947 = vmatprep.subr.mxu0 0.0
        %948 = vmatpush1.msra.mxu0 %v912
        %949 = vmatprep.subr.mxu0 0.0
        %950 = vmatpush1.msra.mxu0 %v913
        %951 = vmatprep.subr.mxu0 0.0
        %952 = vmatpush1.msra.mxu0 %v914
        %953 = vmatprep.subr.mxu0 0.0
        %954 = vmatpush1.msra.mxu0 %v915
        %955 = vmatprep.subr.mxu0 0.0
        %956 = vmatpush1.msra.mxu0 %v916
        %957 = vmatprep.subr.mxu0 0.0
        %958 = vmatpush1.msra.mxu0 %v917
        %959 = vmatprep.subr.mxu0 0.0
        %960 = vmatpush1.msra.mxu0 %v918
        %961 = vmatprep.subr.mxu0 0.0
        %962 = vmatpush1.msra.mxu0 %v919
        %963 = vmatprep.subr.mxu0 0.0
        %964 = vmatpush1.msra.mxu0 %v920
        %965 = vmatprep.subr.mxu0 0.0
        %966 = vmatpush1.msra.mxu0 %v921
        %967 = vmatprep.subr.mxu0 0.0
        %968 = vmatpush1.msra.mxu0 %v922
        %969 = vmatprep.subr.mxu0 0.0
        %970 = vmatpush1.msra.mxu0 %v923
        %971 = vmatprep.subr.mxu0 0.0
        %972 = vmatpush1.msra.mxu0 %v924
        %973 = vmatprep.subr.mxu0 0.0
        %974 = vmatpush1.msra.mxu0 %v925
        %975 = vmatprep.subr.mxu0 0.0
        %976 = vmatpush1.msra.mxu0 0.0
        %977 = vmatprep.subr.mxu0 0.0
        %978 = vmatpush1.msra.mxu0 0.0
        %979 = vmatprep.subr.mxu0 0.0
        %980 = vmatpush1.msra.mxu0 0.0
        %981 = vmatprep.subr.mxu0 0.0
        %982 = vmatpush1.msra.mxu0 0.0
        %983 = vmatprep.subr.mxu0 0.0
        %984 = vmatpush1.msra.mxu0 0.0
        %985 = vmatprep.subr.mxu0 0.0
        %986 = vmatpush1.msra.mxu0 0.0
        %987 = vmatprep.subr.mxu0 0.0
        %988 = vmatpush1.msra.mxu0 0.0
        %989 = vmatprep.subr.mxu0 0.0
        %990 = vmatpush1.msra.mxu0 0.0
        %991 = vmatprep.subr.mxu0 0.0
        %992 = vmatpush1.msra.mxu0 0.0
        %993 = vmatprep.subr.mxu0 0.0
        %994 = vmatpush1.msra.mxu0 0.0
        %995 = vmatprep.subr.mxu0 0.0
        %996 = vmatpush1.msra.mxu0 0.0
        %997 = vmatprep.subr.mxu0 0.0
        %998 = vmatpush1.msra.mxu0 0.0
        %999 = vmatprep.subr.mxu0 0.0
        %1000 = vmatpush1.msra.mxu0 0.0
        %1001 = vmatprep.subr.mxu0 0.0
        %1002 = vmatpush1.msra.mxu0 0.0
        %1003 = vmatprep.subr.mxu0 0.0
        %1004 = vmatpush1.msra.mxu0 0.0
        %1005 = vmatprep.subr.mxu0 0.0
        %1006 = vmatpush1.msra.mxu0 0.0
        %1007 = vmatprep.mubr.f32.mxu0 0.0
        %1008 = vmatmul.mubr.f32.gmra.mrb[0].mxu0 %v942
        %v1009 = vpop.f32.mrb[0].mxu0
        %v1010 = vadd.f32 0.0, %v1009
        %v1011 = vpop.f32.mrb[0].mxu0
        %1012 = vdwg.mxu0
        %v1013 = vrcp.pop 256.0
        %v1014 = vmul.f32 %v1010, %v1013
        %vm1015 = vcmask 261120
        %v1017 = vsel %vm1015, %v1014, 0
        %1019 = vmatprep.subr.mxu0 0.0
        %1020 = vmatpush1.msra.mxu0 %v926
        %1021 = vmatprep.subr.mxu0 0.0
        %1022 = vmatpush1.msra.mxu0 %v927
        %1023 = vmatprep.subr.mxu0 0.0
        %1024 = vmatpush1.msra.mxu0 %v928
        %1025 = vmatprep.subr.mxu0 0.0
        %1026 = vmatpush1.msra.mxu0 %v929
        %1027 = vmatprep.subr.mxu0 0.0
        %1028 = vmatpush1.msra.mxu0 0.0
        %1029 = vmatprep.subr.mxu0 0.0
        %1030 = vmatpush1.msra.mxu0 0.0
        %1031 = vmatprep.subr.mxu0 0.0
        %1032 = vmatpush1.msra.mxu0 0.0
        %1033 = vmatprep.subr.mxu0 0.0
        %1034 = vmatpush1.msra.mxu0 0.0
        %1035 = vmatprep.subr.mxu0 0.0
        %1036 = vmatpush1.msra.mxu0 0.0
        %1037 = vmatprep.subr.mxu0 0.0
        %1038 = vmatpush1.msra.mxu0 0.0
        %1039 = vmatprep.subr.mxu0 0.0
        %1040 = vmatpush1.msra.mxu0 0.0
        %1041 = vmatprep.subr.mxu0 0.0
        %1042 = vmatpush1.msra.mxu0 0.0
        %1043 = vmatprep.subr.mxu0 0.0
        %1044 = vmatpush1.msra.mxu0 0.0
        %1045 = vmatprep.subr.mxu0 0.0
        %1046 = vmatpush1.msra.mxu0 0.0
        %1047 = vmatprep.subr.mxu0 0.0
        %1048 = vmatpush1.msra.mxu0 0.0
        %1049 = vmatprep.subr.mxu0 0.0
        %1050 = vmatpush1.msra.mxu0 0.0
        %1051 = vmatprep.subr.mxu0 0.0
        %1052 = vmatpush1.msra.mxu0 0.0
        %1053 = vmatprep.subr.mxu0 0.0
        %1054 = vmatpush1.msra.mxu0 0.0
        %1055 = vmatprep.subr.mxu0 0.0
        %1056 = vmatpush1.msra.mxu0 0.0
        %1057 = vmatprep.subr.mxu0 0.0
        %1058 = vmatpush1.msra.mxu0 0.0
        %1059 = vmatprep.subr.mxu0 0.0
        %1060 = vmatpush1.msra.mxu0 0.0
        %1061 = vmatprep.subr.mxu0 0.0
        %1062 = vmatpush1.msra.mxu0 0.0
        %1063 = vmatprep.subr.mxu0 0.0
        %1064 = vmatpush1.msra.mxu0 0.0
        %1065 = vmatprep.subr.mxu0 0.0
        %1066 = vmatpush1.msra.mxu0 0.0
        %1067 = vmatprep.subr.mxu0 0.0
        %1068 = vmatpush1.msra.mxu0 0.0
        %1069 = vmatprep.subr.mxu0 0.0
        %1070 = vmatpush1.msra.mxu0 0.0
        %1071 = vmatprep.subr.mxu0 0.0
        %1072 = vmatpush1.msra.mxu0 0.0
        %1073 = vmatprep.subr.mxu0 0.0
        %1074 = vmatpush1.msra.mxu0 0.0
        %1075 = vmatprep.subr.mxu0 0.0
        %1076 = vmatpush1.msra.mxu0 0.0
        %1077 = vmatprep.subr.mxu0 0.0
        %1078 = vmatpush1.msra.mxu0 0.0
        %1079 = vmatprep.subr.mxu0 0.0
        %1080 = vmatpush1.msra.mxu0 0.0
        %1081 = vmatprep.subr.mxu0 0.0
        %1082 = vmatpush1.msra.mxu0 0.0
        %1083 = vmatprep.mubr.f32.mxu0 0.0
        %1084 = vmatmul.mubr.f32.gmra.mrb[0].mxu0 %v1017
        %v1085 = vpop.f32.mrb[0].mxu0
        %v1086 = vadd.f32 0.0, %v1085
        %v1087 = vpop.f32.mrb[0].mxu0
        %1088 = vdwg.mxu0
        %v1089 = vlaneseq
        %v1090 = vshrl.u32 %v1089, 7
        %v1091 = vsub.s32 0, %v1090
        %v1092 = vrot.slane %v1086, %v1091
        %v1093 = vsub.f32 %v902, %v1092
        %v1094 = vsub.f32 %v903, %v1092
        %v1095 = vsub.f32 %v904, %v1092
        %v1096 = vsub.f32 %v905, %v1092
        %v1097 = vsub.f32 %v906, %v1092
        %v1098 = vsub.f32 %v907, %v1092
        %v1099 = vsub.f32 %v908, %v1092
        %v1100 = vsub.f32 %v909, %v1092
        %v1101 = vmul.f32 %v1093, %v1093
        %v1102 = vmul.f32 %v1094, %v1094
        %v1103 = vmul.f32 %v1095, %v1095
        %v1104 = vmul.f32 %v1096, %v1096
        %v1105 = vmul.f32 %v1097, %v1097
        %v1106 = vmul.f32 %v1098, %v1098
        %v1107 = vmul.f32 %v1099, %v1099
        %v1108 = vmul.f32 %v1100, %v1100
        %v1109 = vadd.f32 %v1101, %v1102
        %v1110 = vadd.f32 %v1109, %v1103
        %v1111 = vadd.f32 %v1110, %v1104
        %v1112 = vadd.f32 %v1111, %v1105
        %v1113 = vadd.f32 %v1112, %v1106
        %v1114 = vadd.f32 %v1113, %v1107
        %v1115 = vadd.f32 %v1114, %v1108
        %v1116 = vrot.slane %v1115, 4
        %v1117 = vadd.f32 %v1115, %v1116
        %v1118 = vrot.slane %v1117, 2
        %v1119 = vadd.f32 %v1117, %v1118
        %v1120 = vrot.slane %v1119, 1
        %v1121 = vadd.f32 %v1119, %v1120
        %1122 = vmatprep.subr.mxu0 0.0
        %1123 = vmatpush1.msra.mxu0 %v910
        %1124 = vmatprep.subr.mxu0 0.0
        %1125 = vmatpush1.msra.mxu0 %v911
        %1126 = vmatprep.subr.mxu0 0.0
        %1127 = vmatpush1.msra.mxu0 %v912
        %1128 = vmatprep.subr.mxu0 0.0
        %1129 = vmatpush1.msra.mxu0 %v913
        %1130 = vmatprep.subr.mxu0 0.0
        %1131 = vmatpush1.msra.mxu0 %v914
        %1132 = vmatprep.subr.mxu0 0.0
        %1133 = vmatpush1.msra.mxu0 %v915
        %1134 = vmatprep.subr.mxu0 0.0
        %1135 = vmatpush1.msra.mxu0 %v916
        %1136 = vmatprep.subr.mxu0 0.0
        %1137 = vmatpush1.msra.mxu0 %v917
        %1138 = vmatprep.subr.mxu0 0.0
        %1139 = vmatpush1.msra.mxu0 %v918
        %1140 = vmatprep.subr.mxu0 0.0
        %1141 = vmatpush1.msra.mxu0 %v919
        %1142 = vmatprep.subr.mxu0 0.0
        %1143 = vmatpush1.msra.mxu0 %v920
        %1144 = vmatprep.subr.mxu0 0.0
        %1145 = vmatpush1.msra.mxu0 %v921
        %1146 = vmatprep.subr.mxu0 0.0
        %1147 = vmatpush1.msra.mxu0 %v922
        %1148 = vmatprep.subr.mxu0 0.0
        %1149 = vmatpush1.msra.mxu0 %v923
        %1150 = vmatprep.subr.mxu0 0.0
        %1151 = vmatpush1.msra.mxu0 %v924
        %1152 = vmatprep.subr.mxu0 0.0
        %1153 = vmatpush1.msra.mxu0 %v925
        %1154 = vmatprep.subr.mxu0 0.0
        %1155 = vmatpush1.msra.mxu0 0.0
        %1156 = vmatprep.subr.mxu0 0.0
        %1157 = vmatpush1.msra.mxu0 0.0
        %1158 = vmatprep.subr.mxu0 0.0
        %1159 = vmatpush1.msra.mxu0 0.0
        %1160 = vmatprep.subr.mxu0 0.0
        %1161 = vmatpush1.msra.mxu0 0.0
        %1162 = vmatprep.subr.mxu0 0.0
        %1163 = vmatpush1.msra.mxu0 0.0
        %1164 = vmatprep.subr.mxu0 0.0
        %1165 = vmatpush1.msra.mxu0 0.0
        %1166 = vmatprep.subr.mxu0 0.0
        %1167 = vmatpush1.msra.mxu0 0.0
        %1168 = vmatprep.subr.mxu0 0.0
        %1169 = vmatpush1.msra.mxu0 0.0
        %1170 = vmatprep.subr.mxu0 0.0
        %1171 = vmatpush1.msra.mxu0 0.0
        %1172 = vmatprep.subr.mxu0 0.0
        %1173 = vmatpush1.msra.mxu0 0.0
        %1174 = vmatprep.subr.mxu0 0.0
        %1175 = vmatpush1.msra.mxu0 0.0
        %1176 = vmatprep.subr.mxu0 0.0
        %1177 = vmatpush1.msra.mxu0 0.0
        %1178 = vmatprep.subr.mxu0 0.0
        %1179 = vmatpush1.msra.mxu0 0.0
        %1180 = vmatprep.subr.mxu0 0.0
        %1181 = vmatpush1.msra.mxu0 0.0
        %1182 = vmatprep.subr.mxu0 0.0
        %1183 = vmatpush1.msra.mxu0 0.0
        %1184 = vmatprep.subr.mxu0 0.0
        %1185 = vmatpush1.msra.mxu0 0.0
        %1186 = vmatprep.mubr.f32.mxu0 0.0
        %1187 = vmatmul.mubr.f32.gmra.mrb[0].mxu0 %v1121
        %v1188 = vpop.f32.mrb[0].mxu0
        %v1189 = vadd.f32 0.0, %v1188
        %v1190 = vpop.f32.mrb[0].mxu0
        %1191 = vdwg.mxu0
        %v1192 = vmul.f32 %v1189, %v1013
        %v1193 = vadd.f32 %v1192, 1e-06
        %v1194 = vrsqrt.pop %v1193
        %v1196 = vsel %vm1015, %v1194, 0
        %1198 = vmatprep.subr.mxu0 0.0
        %1199 = vmatpush1.msra.mxu0 %v926
        %1200 = vmatprep.subr.mxu0 0.0
        %1201 = vmatpush1.msra.mxu0 %v927
        %1202 = vmatprep.subr.mxu0 0.0
        %1203 = vmatpush1.msra.mxu0 %v928
        %1204 = vmatprep.subr.mxu0 0.0
        %1205 = vmatpush1.msra.mxu0 %v929
        %1206 = vmatprep.subr.mxu0 0.0
        %1207 = vmatpush1.msra.mxu0 0.0
        %1208 = vmatprep.subr.mxu0 0.0
        %1209 = vmatpush1.msra.mxu0 0.0
        %1210 = vmatprep.subr.mxu0 0.0
        %1211 = vmatpush1.msra.mxu0 0.0
        %1212 = vmatprep.subr.mxu0 0.0
        %1213 = vmatpush1.msra.mxu0 0.0
        %1214 = vmatprep.subr.mxu0 0.0
        %1215 = vmatpush1.msra.mxu0 0.0
        %1216 = vmatprep.subr.mxu0 0.0
        %1217 = vmatpush1.msra.mxu0 0.0
        %1218 = vmatprep.subr.mxu0 0.0
        %1219 = vmatpush1.msra.mxu0 0.0
        %1220 = vmatprep.subr.mxu0 0.0
        %1221 = vmatpush1.msra.mxu0 0.0
        %1222 = vmatprep.subr.mxu0 0.0
        %1223 = vmatpush1.msra.mxu0 0.0
        %1224 = vmatprep.subr.mxu0 0.0
        %1225 = vmatpush1.msra.mxu0 0.0
        %1226 = vmatprep.subr.mxu0 0.0
        %1227 = vmatpush1.msra.mxu0 0.0
        %1228 = vmatprep.subr.mxu0 0.0
        %1229 = vmatpush1.msra.mxu0 0.0
        %1230 = vmatprep.subr.mxu0 0.0
        %1231 = vmatpush1.msra.mxu0 0.0
        %1232 = vmatprep.subr.mxu0 0.0
        %1233 = vmatpush1.msra.mxu0 0.0
        %1234 = vmatprep.subr.mxu0 0.0
        %1235 = vmatpush1.msra.mxu0 0.0
        %1236 = vmatprep.subr.mxu0 0.0
        %1237 = vmatpush1.msra.mxu0 0.0
        %1238 = vmatprep.subr.mxu0 0.0
        %1239 = vmatpush1.msra.mxu0 0.0
        %1240 = vmatprep.subr.mxu0 0.0
        %1241 = vmatpush1.msra.mxu0 0.0
        %1242 = vmatprep.subr.mxu0 0.0
        %1243 = vmatpush1.msra.mxu0 0.0
        %1244 = vmatprep.subr.mxu0 0.0
        %1245 = vmatpush1.msra.mxu0 0.0
        %1246 = vmatprep.subr.mxu0 0.0
        %1247 = vmatpush1.msra.mxu0 0.0
        %1248 = vmatprep.subr.mxu0 0.0
        %1249 = vmatpush1.msra.mxu0 0.0
        %1250 = vmatprep.subr.mxu0 0.0
        %1251 = vmatpush1.msra.mxu0 0.0
        %1252 = vmatprep.subr.mxu0 0.0
        %1253 = vmatpush1.msra.mxu0 0.0
        %1254 = vmatprep.subr.mxu0 0.0
        %1255 = vmatpush1.msra.mxu0 0.0
        %1256 = vmatprep.subr.mxu0 0.0
        %1257 = vmatpush1.msra.mxu0 0.0
        %1258 = vmatprep.subr.mxu0 0.0
        %1259 = vmatpush1.msra.mxu0 0.0
        %1260 = vmatprep.subr.mxu0 0.0
        %1261 = vmatpush1.msra.mxu0 0.0
        %1262 = vmatprep.mubr.f32.mxu0 0.0
        %1263 = vmatmul.mubr.f32.gmra.mrb[0].mxu0 %v1196
        %v1264 = vpop.f32.mrb[0].mxu0
        %v1265 = vadd.f32 0.0, %v1264
        %v1266 = vpop.f32.mrb[0].mxu0
        %1267 = vdwg.mxu0
        %v1268 = vlaneseq
        %v1269 = vshrl.u32 %v1268, 7
        %v1270 = vsub.s32 0, %v1269
        %v1271 = vrot.slane %v1265, %v1270
        %v1272 = vmul.f32 %v1093, %v1271
        %v1273 = vmul.f32 %v1094, %v1271
        %v1274 = vmul.f32 %v1095, %v1271
        %v1275 = vmul.f32 %v1096, %v1271
        %v1276 = vmul.f32 %v1097, %v1271
        %v1277 = vmul.f32 %v1098, %v1271
        %v1278 = vmul.f32 %v1099, %v1271
        %v1279 = vmul.f32 %v1100, %v1271
        %v1280 = vld [vmem:[%s3] sm:$0x1]
        %v1282 = vlaneseq
        %v1283 = vshrl.u32 %v1282, 7
        %v1284 = vsub.s32 0, %v1283
        %v1285 = vrot.slane %v1280, %v1284
        %v1287 = vmul.f32 %v1272, %v1285
        %v1288 = vmul.f32 %v1273, %v1285
        %v1289 = vmul.f32 %v1274, %v1285
        %v1290 = vmul.f32 %v1275, %v1285
        %v1291 = vmul.f32 %v1276, %v1285
        %v1292 = vmul.f32 %v1277, %v1285
        %v1293 = vmul.f32 %v1278, %v1285
        %v1294 = vmul.f32 %v1279, %v1285
        %v1295 = vld [vmem:[%s5] sm:$0x1]
        %v1297 = vlaneseq
        %v1298 = vshrl.u32 %v1297, 7
        %v1299 = vsub.s32 0, %v1298
        %v1300 = vrot.slane %v1295, %v1299
        %v1302 = vadd.f32 %v1287, %v1300
        %v1303 = vadd.f32 %v1288, %v1300
        %v1304 = vadd.f32 %v1289, %v1300
        %v1305 = vadd.f32 %v1290, %v1300
        %v1306 = vadd.f32 %v1291, %v1300
        %v1307 = vadd.f32 %v1292, %v1300
        %v1308 = vadd.f32 %v1293, %v1300
        %v1309 = vadd.f32 %v1294, %v1300
        %v1310 = vpack.c.bf16 %v1303, %v1302
        %v1311 = vpack.c.bf16 %v1305, %v1304
        %v1312 = vpack.c.bf16 %v1307, %v1306
        %v1313 = vpack.c.bf16 %v1309, %v1308
        %v1314 = vld [vmem:[%s11] sm:$0xf]
        %v1315 = vld [vmem:[%s11 + $0x4] sm:$0xf]
        %v1316 = vld [vmem:[%s11 + $0x8] sm:$0xf]
        %v1317 = vld [vmem:[%s11 + $0xc] sm:$0xf]
        %v1318 = vld [vmem:[%s11 + $0x10] sm:$0xf]
        %v1319 = vld [vmem:[%s11 + $0x14] sm:$0xf]
        %v1320 = vld [vmem:[%s11 + $0x18] sm:$0xf]
        %v1321 = vld [vmem:[%s11 + $0x1c] sm:$0xf]
        %v1322 = vld [vmem:[%s11 + $0x20] sm:$0xf]
        %v1323 = vld [vmem:[%s11 + $0x24] sm:$0xf]
        %v1324 = vld [vmem:[%s11 + $0x28] sm:$0xf]
        %v1325 = vld [vmem:[%s11 + $0x2c] sm:$0xf]
        %v1326 = vld [vmem:[%s11 + $0x30] sm:$0xf]
        %v1327 = vld [vmem:[%s11 + $0x34] sm:$0xf]
        %v1328 = vld [vmem:[%s11 + $0x38] sm:$0xf]
        %v1329 = vld [vmem:[%s11 + $0x3c] sm:$0xf]
        %v1330 = vld [vmem:[%s13] sm:$0x1]
        %v1332 = vlaneseq
        %v1333 = vshrl.u32 %v1332, 7
        %v1334 = vsub.s32 0, %v1333
        %v1335 = vrot.slane %v1330, %v1334
        %v1353 = vunpack.c.l.b16 %v1314
        %v1354 = vunpack.c.l.b16 %v1315
        %v1355 = vunpack.c.l.b16 %v1316
        %v1356 = vunpack.c.l.b16 %v1317
        %v1357 = vunpack.c.l.b16 %v1318
        %v1358 = vunpack.c.l.b16 %v1319
        %v1359 = vunpack.c.l.b16 %v1320
        %v1360 = vunpack.c.l.b16 %v1321
        %v1361 = vunpack.c.l.b16 %v1322
        %v1362 = vunpack.c.l.b16 %v1323
        %v1363 = vunpack.c.l.b16 %v1324
        %v1364 = vunpack.c.l.b16 %v1325
        %v1365 = vunpack.c.l.b16 %v1326
        %v1366 = vunpack.c.l.b16 %v1327
        %v1367 = vunpack.c.l.b16 %v1328
        %v1368 = vunpack.c.l.b16 %v1329
        %v1369 = vpack.c.b16 %v1354, %v1353
        %v1370 = vpack.c.b16 %v1356, %v1355
        %v1371 = vpack.c.b16 %v1358, %v1357
        %v1372 = vpack.c.b16 %v1360, %v1359
        %v1373 = vpack.c.b16 %v1362, %v1361
        %v1374 = vpack.c.b16 %v1364, %v1363
        %v1375 = vpack.c.b16 %v1366, %v1365
        %v1376 = vpack.c.b16 %v1368, %v1367
        %1385 = vmatprep.subr.bf16.mxu0 0
        %1386 = vmatpush1.bf16.msra.mxu0 %v1369
        %1387 = vmatprep.subr.bf16.mxu0 0
        %1388 = vmatpush1.bf16.msra.mxu0 %v1370
        %1389 = vmatprep.subr.bf16.mxu0 0
        %1390 = vmatpush1.bf16.msra.mxu0 %v1371
        %1391 = vmatprep.subr.bf16.mxu0 0
        %1392 = vmatpush1.bf16.msra.mxu0 %v1372
        %1393 = vmatprep.subr.bf16.mxu0 0
        %1394 = vmatpush1.bf16.msra.mxu0 %v1373
        %1395 = vmatprep.subr.bf16.mxu0 0
        %1396 = vmatpush1.bf16.msra.mxu0 %v1374
        %1397 = vmatprep.subr.bf16.mxu0 0
        %1398 = vmatpush1.bf16.msra.mxu0 %v1375
        %1399 = vmatprep.subr.bf16.mxu0 0
        %1400 = vmatpush1.bf16.msra.mxu0 %v1376
        %1401 = vmatprep.subr.bf16.mxu0 0
        %1402 = vmatpush1.bf16.msra.mxu0 0
        %1403 = vmatprep.subr.bf16.mxu0 0
        %1404 = vmatpush1.bf16.msra.mxu0 0
        %1405 = vmatprep.subr.bf16.mxu0 0
        %1406 = vmatpush1.bf16.msra.mxu0 0
        %1407 = vmatprep.subr.bf16.mxu0 0
        %1408 = vmatpush1.bf16.msra.mxu0 0
        %1409 = vmatprep.subr.bf16.mxu0 0
        %1410 = vmatpush1.bf16.msra.mxu0 0
        %1411 = vmatprep.subr.bf16.mxu0 0
        %1412 = vmatpush1.bf16.msra.mxu0 0
        %1413 = vmatprep.subr.bf16.mxu0 0
        %1414 = vmatpush1.bf16.msra.mxu0 0
        %1415 = vmatprep.subr.bf16.mxu0 0
        %1416 = vmatpush1.bf16.msra.mxu0 0
        %1417 = vmatprep.mubr.bf16.mxu0 0
        %1418 = vmatmul.mubr.bf16.gmra.mrb[0].mxu0 %v1310
        %v1419 = vpop.f32.mrb[0].mxu0
        %v1420 = vadd.f32 %v1335, %v1419
        %v1421 = vpop.f32.mrb[0].mxu0
        %v1422 = vpop.f32.mrb[0].mxu0
        %v1423 = vadd.f32 %v1335, %v1422
        %v1424 = vpop.f32.mrb[0].mxu0
        %1425 = vmatprep.mubr.bf16.mxu0 0
        %1426 = vmatmul.mubr.bf16.gmra.mrb[0].mxu0 %v1311
        %v1427 = vpop.f32.mrb[0].mxu0
        %v1428 = vadd.f32 %v1335, %v1427
        %v1429 = vpop.f32.mrb[0].mxu0
        %v1430 = vpop.f32.mrb[0].mxu0
        %v1431 = vadd.f32 %v1335, %v1430
        %v1432 = vpop.f32.mrb[0].mxu0
        %1433 = vmatprep.mubr.bf16.mxu0 0
        %1434 = vmatmul.mubr.bf16.gmra.mrb[0].mxu0 %v1312
        %v1435 = vpop.f32.mrb[0].mxu0
        %v1436 = vadd.f32 %v1335, %v1435
        %v1437 = vpop.f32.mrb[0].mxu0
        %v1438 = vpop.f32.mrb[0].mxu0
        %v1439 = vadd.f32 %v1335, %v1438
        %v1440 = vpop.f32.mrb[0].mxu0
        %1441 = vmatprep.mubr.bf16.mxu0 0
        %1442 = vmatmul.mubr.bf16.gmra.mrb[0].mxu0 %v1313
        %v1443 = vpop.f32.mrb[0].mxu0
        %v1444 = vadd.f32 %v1335, %v1443
        %v1445 = vpop.f32.mrb[0].mxu0
        %v1446 = vpop.f32.mrb[0].mxu0
        %v1447 = vadd.f32 %v1335, %v1446
        %v1448 = vpop.f32.mrb[0].mxu0
        %1449 = vdwg.mxu0
        %1450 = vadd.xlane.f32.xlu0 %v1420
        %v1451 = vpop.xlane.xlu0 %1450
        %1452 = vadd.xlane.f32.xlu0 %v1423
        %v1453 = vpop.xlane.xlu0 %1452
        %1454 = vadd.xlane.f32.xlu0 %v1428
        %v1455 = vpop.xlane.xlu0 %1454
        %1456 = vadd.xlane.f32.xlu0 %v1431
        %v1457 = vpop.xlane.xlu0 %1456
        %1458 = vadd.xlane.f32.xlu0 %v1436
        %v1459 = vpop.xlane.xlu0 %1458
        %1460 = vadd.xlane.f32.xlu0 %v1439
        %v1461 = vpop.xlane.xlu0 %1460
        %1462 = vadd.xlane.f32.xlu0 %v1444
        %v1463 = vpop.xlane.xlu0 %1462
        %1464 = vadd.xlane.f32.xlu0 %v1447
        %v1465 = vpop.xlane.xlu0 %1464
        %v1466 = vrcp.pop 128.0
        %v1467 = vmul.f32 %v1451, %v1466
        %v1468 = vmul.f32 %v1453, %v1466
        %v1469 = vmul.f32 %v1455, %v1466
        %v1470 = vmul.f32 %v1457, %v1466
        %v1471 = vmul.f32 %v1459, %v1466
        %v1472 = vmul.f32 %v1461, %v1466
        %v1473 = vmul.f32 %v1463, %v1466
        %v1474 = vmul.f32 %v1465, %v1466
        %v1475 = vsub.f32 %v1420, %v1467
        %v1476 = vsub.f32 %v1423, %v1468
        %v1477 = vsub.f32 %v1428, %v1469
        %v1478 = vsub.f32 %v1431, %v1470
        %v1479 = vsub.f32 %v1436, %v1471
        %v1480 = vsub.f32 %v1439, %v1472
        %v1481 = vsub.f32 %v1444, %v1473
        %v1482 = vsub.f32 %v1447, %v1474
        %v1483 = vmul.f32 %v1475, %v1475
        %v1484 = vmul.f32 %v1476, %v1476
        %v1485 = vmul.f32 %v1477, %v1477
        %v1486 = vmul.f32 %v1478, %v1478
        %v1487 = vmul.f32 %v1479, %v1479
        %v1488 = vmul.f32 %v1480, %v1480
        %v1489 = vmul.f32 %v1481, %v1481
        %v1490 = vmul.f32 %v1482, %v1482
        %1491 = vadd.xlane.f32.xlu0 %v1483
        %v1492 = vpop.xlane.xlu0 %1491
        %1493 = vadd.xlane.f32.xlu0 %v1484
        %v1494 = vpop.xlane.xlu0 %1493
        %1495 = vadd.xlane.f32.xlu0 %v1485
        %v1496 = vpop.xlane.xlu0 %1495
        %1497 = vadd.xlane.f32.xlu0 %v1486
        %v1498 = vpop.xlane.xlu0 %1497
        %1499 = vadd.xlane.f32.xlu0 %v1487
        %v1500 = vpop.xlane.xlu0 %1499
        %1501 = vadd.xlane.f32.xlu0 %v1488
        %v1502 = vpop.xlane.xlu0 %1501
        %1503 = vadd.xlane.f32.xlu0 %v1489
        %v1504 = vpop.xlane.xlu0 %1503
        %1505 = vadd.xlane.f32.xlu0 %v1490
        %v1506 = vpop.xlane.xlu0 %1505
        %v1507 = vmul.f32 %v1492, %v1466
        %v1508 = vmul.f32 %v1494, %v1466
        %v1509 = vmul.f32 %v1496, %v1466
        %v1510 = vmul.f32 %v1498, %v1466
        %v1511 = vmul.f32 %v1500, %v1466
        %v1512 = vmul.f32 %v1502, %v1466
        %v1513 = vmul.f32 %v1504, %v1466
        %v1514 = vmul.f32 %v1506, %v1466
        %v1515 = vadd.f32 %v1507, 1e-05
        %v1516 = vadd.f32 %v1508, 1e-05
        %v1517 = vadd.f32 %v1509, 1e-05
        %v1518 = vadd.f32 %v1510, 1e-05
        %v1519 = vadd.f32 %v1511, 1e-05
        %v1520 = vadd.f32 %v1512, 1e-05
        %v1521 = vadd.f32 %v1513, 1e-05
        %v1522 = vadd.f32 %v1514, 1e-05
        %v1523 = vrsqrt.pop %v1515
        %v1524 = vrsqrt.pop %v1516
        %v1525 = vrsqrt.pop %v1517
        %v1526 = vrsqrt.pop %v1518
        %v1527 = vrsqrt.pop %v1519
        %v1528 = vrsqrt.pop %v1520
        %v1529 = vrsqrt.pop %v1521
        %v1530 = vrsqrt.pop %v1522
        %v1531 = vmul.f32 %v1475, %v1523
        %v1532 = vmul.f32 %v1476, %v1524
        %v1533 = vmul.f32 %v1477, %v1525
        %v1534 = vmul.f32 %v1478, %v1526
        %v1535 = vmul.f32 %v1479, %v1527
        %v1536 = vmul.f32 %v1480, %v1528
        %v1537 = vmul.f32 %v1481, %v1529
        %v1538 = vmul.f32 %v1482, %v1530
        %v1539 = vld [vmem:[%s15] sm:$0x1]
        %v1541 = vlaneseq
        %v1542 = vshrl.u32 %v1541, 7
        %v1543 = vsub.s32 0, %v1542
        %v1544 = vrot.slane %v1539, %v1543
        %v1546 = vmul.f32 %v1531, %v1544
        %v1547 = vmul.f32 %v1532, %v1544
        %v1548 = vmul.f32 %v1533, %v1544
        %v1549 = vmul.f32 %v1534, %v1544
        %v1550 = vmul.f32 %v1535, %v1544
        %v1551 = vmul.f32 %v1536, %v1544
        %v1552 = vmul.f32 %v1537, %v1544
        %v1553 = vmul.f32 %v1538, %v1544
        %v1554 = vld [vmem:[%s17] sm:$0x1]
        %v1556 = vlaneseq
        %v1557 = vshrl.u32 %v1556, 7
        %v1558 = vsub.s32 0, %v1557
        %v1559 = vrot.slane %v1554, %v1558
        %v1561 = vadd.f32 %v1546, %v1559
        %v1562 = vadd.f32 %v1547, %v1559
        %v1563 = vadd.f32 %v1548, %v1559
        %v1564 = vadd.f32 %v1549, %v1559
        %v1565 = vadd.f32 %v1550, %v1559
        %v1566 = vadd.f32 %v1551, %v1559
        %v1567 = vadd.f32 %v1552, %v1559
        %v1568 = vadd.f32 %v1553, %v1559
        %v1569 = vpack.c.bf16 %v1562, %v1561
        %v1570 = vpack.c.bf16 %v1564, %v1563
        %v1571 = vpack.c.bf16 %v1566, %v1565
        %v1572 = vpack.c.bf16 %v1568, %v1567
        %v1573 = vld [vmem:[%s19] sm:$0xf]
        %v1574 = vld [vmem:[%s19 + $0x4] sm:$0xf]
        %v1575 = vld [vmem:[%s19 + $0x8] sm:$0xf]
        %v1576 = vld [vmem:[%s19 + $0xc] sm:$0xf]
        %v1577 = vld [vmem:[%s19 + $0x10] sm:$0xf]
        %v1578 = vld [vmem:[%s19 + $0x14] sm:$0xf]
        %v1579 = vld [vmem:[%s19 + $0x18] sm:$0xf]
        %v1580 = vld [vmem:[%s19 + $0x1c] sm:$0xf]
        %v1581 = vld [vmem:[%s19 + $0x20] sm:$0xf]
        %v1582 = vld [vmem:[%s19 + $0x24] sm:$0xf]
        %v1583 = vld [vmem:[%s19 + $0x28] sm:$0xf]
        %v1584 = vld [vmem:[%s19 + $0x2c] sm:$0xf]
        %v1585 = vld [vmem:[%s19 + $0x30] sm:$0xf]
        %v1586 = vld [vmem:[%s19 + $0x34] sm:$0xf]
        %v1587 = vld [vmem:[%s19 + $0x38] sm:$0xf]
        %v1588 = vld [vmem:[%s19 + $0x3c] sm:$0xf]
        %v1605 = vunpack.c.l.b16 %v1573
        %v1606 = vunpack.c.l.b16 %v1574
        %v1607 = vunpack.c.l.b16 %v1575
        %v1608 = vunpack.c.l.b16 %v1576
        %v1609 = vunpack.c.l.b16 %v1577
        %v1610 = vunpack.c.l.b16 %v1578
        %v1611 = vunpack.c.l.b16 %v1579
        %v1612 = vunpack.c.l.b16 %v1580
        %v1613 = vunpack.c.l.b16 %v1581
        %v1614 = vunpack.c.l.b16 %v1582
        %v1615 = vunpack.c.l.b16 %v1583
        %v1616 = vunpack.c.l.b16 %v1584
        %v1617 = vunpack.c.l.b16 %v1585
        %v1618 = vunpack.c.l.b16 %v1586
        %v1619 = vunpack.c.l.b16 %v1587
        %v1620 = vunpack.c.l.b16 %v1588
        %v1621 = vpack.c.b16 %v1606, %v1605
        %v1622 = vpack.c.b16 %v1608, %v1607
        %v1623 = vpack.c.b16 %v1610, %v1609
        %v1624 = vpack.c.b16 %v1612, %v1611
        %v1625 = vpack.c.b16 %v1614, %v1613
        %v1626 = vpack.c.b16 %v1616, %v1615
        %v1627 = vpack.c.b16 %v1618, %v1617
        %v1628 = vpack.c.b16 %v1620, %v1619
        %1637 = vmatprep.subr.bf16.mxu0 0
        %1638 = vmatpush1.bf16.msra.mxu0 %v1621
        %1639 = vmatprep.subr.bf16.mxu0 0
        %1640 = vmatpush1.bf16.msra.mxu0 %v1622
        %1641 = vmatprep.subr.bf16.mxu0 0
        %1642 = vmatpush1.bf16.msra.mxu0 %v1623
        %1643 = vmatprep.subr.bf16.mxu0 0
        %1644 = vmatpush1.bf16.msra.mxu0 %v1624
        %1645 = vmatprep.subr.bf16.mxu0 0
        %1646 = vmatpush1.bf16.msra.mxu0 %v1625
        %1647 = vmatprep.subr.bf16.mxu0 0
        %1648 = vmatpush1.bf16.msra.mxu0 %v1626
        %1649 = vmatprep.subr.bf16.mxu0 0
        %1650 = vmatpush1.bf16.msra.mxu0 %v1627
        %1651 = vmatprep.subr.bf16.mxu0 0
        %1652 = vmatpush1.bf16.msra.mxu0 %v1628
        %1653 = vmatprep.subr.bf16.mxu0 0
        %1654 = vmatpush1.bf16.msra.mxu0 0
        %1655 = vmatprep.subr.bf16.mxu0 0
        %1656 = vmatpush1.bf16.msra.mxu0 0
        %1657 = vmatprep.subr.bf16.mxu0 0
        %1658 = vmatpush1.bf16.msra.mxu0 0
        %1659 = vmatprep.subr.bf16.mxu0 0
        %1660 = vmatpush1.bf16.msra.mxu0 0
        %1661 = vmatprep.subr.bf16.mxu0 0
        %1662 = vmatpush1.bf16.msra.mxu0 0
        %1663 = vmatprep.subr.bf16.mxu0 0
        %1664 = vmatpush1.bf16.msra.mxu0 0
        %1665 = vmatprep.subr.bf16.mxu0 0
        %1666 = vmatpush1.bf16.msra.mxu0 0
        %1667 = vmatprep.subr.bf16.mxu0 0
        %1668 = vmatpush1.bf16.msra.mxu0 0
        %1669 = vmatprep.mubr.bf16.mxu0 0
        %1670 = vmatmul.mubr.bf16.gmra.mrb[0].mxu0 %v1569
        %v1671 = vpop.f32.mrb[0].mxu0
        %v1672 = vadd.f32 0.0, %v1671
        %v1673 = vpop.f32.mrb[0].mxu0
        %v1674 = vpop.f32.mrb[0].mxu0
        %v1675 = vadd.f32 0.0, %v1674
        %v1676 = vpop.f32.mrb[0].mxu0
        %1677 = vmatprep.mubr.bf16.mxu0 0
        %1678 = vmatmul.mubr.bf16.gmra.mrb[0].mxu0 %v1570
        %v1679 = vpop.f32.mrb[0].mxu0
        %v1680 = vadd.f32 0.0, %v1679
        %v1681 = vpop.f32.mrb[0].mxu0
        %v1682 = vpop.f32.mrb[0].mxu0
        %v1683 = vadd.f32 0.0, %v1682
        %v1684 = vpop.f32.mrb[0].mxu0
        %1685 = vmatprep.mubr.bf16.mxu0 0
        %1686 = vmatmul.mubr.bf16.gmra.mrb[0].mxu0 %v1571
        %v1687 = vpop.f32.mrb[0].mxu0
        %v1688 = vadd.f32 0.0, %v1687
        %v1689 = vpop.f32.mrb[0].mxu0
        %v1690 = vpop.f32.mrb[0].mxu0
        %v1691 = vadd.f32 0.0, %v1690
        %v1692 = vpop.f32.mrb[0].mxu0
        %1693 = vmatprep.mubr.bf16.mxu0 0
        %1694 = vmatmul.mubr.bf16.gmra.mrb[0].mxu0 %v1572
        %v1695 = vpop.f32.mrb[0].mxu0
        %v1696 = vadd.f32 0.0, %v1695
        %v1697 = vpop.f32.mrb[0].mxu0
        %v1698 = vpop.f32.mrb[0].mxu0
        %v1699 = vadd.f32 0.0, %v1698
        %v1700 = vpop.f32.mrb[0].mxu0
        %1701 = vdwg.mxu0
        %v1702 = vmul.f32 %v1672, 0.125
        %v1703 = vmul.f32 %v1675, 0.125
        %v1704 = vmul.f32 %v1680, 0.125
        %v1705 = vmul.f32 %v1683, 0.125
        %v1706 = vmul.f32 %v1688, 0.125
        %v1707 = vmul.f32 %v1691, 0.125
        %v1708 = vmul.f32 %v1696, 0.125
        %v1709 = vmul.f32 %v1699, 0.125
        %v1710 = vld [vmem:[%s21] sm:$0xf]
        %v1711 = vld [vmem:[%s21 + $0x4] sm:$0xf]
        %v1712 = vld [vmem:[%s21 + $0x8] sm:$0xf]
        %v1713 = vld [vmem:[%s21 + $0xc] sm:$0xf]
        %v1714 = vld [vmem:[%s21 + $0x10] sm:$0xf]
        %v1715 = vld [vmem:[%s21 + $0x14] sm:$0xf]
        %v1716 = vld [vmem:[%s21 + $0x18] sm:$0xf]
        %v1717 = vld [vmem:[%s21 + $0x1c] sm:$0xf]
        %v1718 = vld [vmem:[%s21 + $0x20] sm:$0xf]
        %v1719 = vld [vmem:[%s21 + $0x24] sm:$0xf]
        %v1720 = vld [vmem:[%s21 + $0x28] sm:$0xf]
        %v1721 = vld [vmem:[%s21 + $0x2c] sm:$0xf]
        %v1722 = vld [vmem:[%s21 + $0x30] sm:$0xf]
        %v1723 = vld [vmem:[%s21 + $0x34] sm:$0xf]
        %v1724 = vld [vmem:[%s21 + $0x38] sm:$0xf]
        %v1725 = vld [vmem:[%s21 + $0x3c] sm:$0xf]
        %v1742 = vunpack.c.l.b16 %v1710
        %v1743 = vunpack.c.l.b16 %v1711
        %v1744 = vunpack.c.l.b16 %v1712
        %v1745 = vunpack.c.l.b16 %v1713
        %v1746 = vunpack.c.l.b16 %v1714
        %v1747 = vunpack.c.l.b16 %v1715
        %v1748 = vunpack.c.l.b16 %v1716
        %v1749 = vunpack.c.l.b16 %v1717
        %v1750 = vunpack.c.l.b16 %v1718
        %v1751 = vunpack.c.l.b16 %v1719
        %v1752 = vunpack.c.l.b16 %v1720
        %v1753 = vunpack.c.l.b16 %v1721
        %v1754 = vunpack.c.l.b16 %v1722
        %v1755 = vunpack.c.l.b16 %v1723
        %v1756 = vunpack.c.l.b16 %v1724
        %v1757 = vunpack.c.l.b16 %v1725
        %v1758 = vpack.c.b16 %v1743, %v1742
        %v1759 = vpack.c.b16 %v1745, %v1744
        %v1760 = vpack.c.b16 %v1747, %v1746
        %v1761 = vpack.c.b16 %v1749, %v1748
        %v1762 = vpack.c.b16 %v1751, %v1750
        %v1763 = vpack.c.b16 %v1753, %v1752
        %v1764 = vpack.c.b16 %v1755, %v1754
        %v1765 = vpack.c.b16 %v1757, %v1756
        %1774 = vmatprep.subr.bf16.mxu0 0
        %1775 = vmatpush1.bf16.msra.mxu0 %v1758
        %1776 = vmatprep.subr.bf16.mxu0 0
        %1777 = vmatpush1.bf16.msra.mxu0 %v1759
        %1778 = vmatprep.subr.bf16.mxu0 0
        %1779 = vmatpush1.bf16.msra.mxu0 %v1760
        %1780 = vmatprep.subr.bf16.mxu0 0
        %1781 = vmatpush1.bf16.msra.mxu0 %v1761
        %1782 = vmatprep.subr.bf16.mxu0 0
        %1783 = vmatpush1.bf16.msra.mxu0 %v1762
        %1784 = vmatprep.subr.bf16.mxu0 0
        %1785 = vmatpush1.bf16.msra.mxu0 %v1763
        %1786 = vmatprep.subr.bf16.mxu0 0
        %1787 = vmatpush1.bf16.msra.mxu0 %v1764
        %1788 = vmatprep.subr.bf16.mxu0 0
        %1789 = vmatpush1.bf16.msra.mxu0 %v1765
        %1790 = vmatprep.subr.bf16.mxu0 0
        %1791 = vmatpush1.bf16.msra.mxu0 0
        %1792 = vmatprep.subr.bf16.mxu0 0
        %1793 = vmatpush1.bf16.msra.mxu0 0
        %1794 = vmatprep.subr.bf16.mxu0 0
        %1795 = vmatpush1.bf16.msra.mxu0 0
        %1796 = vmatprep.subr.bf16.mxu0 0
        %1797 = vmatpush1.bf16.msra.mxu0 0
        %1798 = vmatprep.subr.bf16.mxu0 0
        %1799 = vmatpush1.bf16.msra.mxu0 0
        %1800 = vmatprep.subr.bf16.mxu0 0
        %1801 = vmatpush1.bf16.msra.mxu0 0
        %1802 = vmatprep.subr.bf16.mxu0 0
        %1803 = vmatpush1.bf16.msra.mxu0 0
        %1804 = vmatprep.subr.bf16.mxu0 0
        %1805 = vmatpush1.bf16.msra.mxu0 0
        %1806 = vmatprep.mubr.bf16.mxu0 0
        %1807 = vmatmul.mubr.bf16.gmra.mrb[0].mxu0 %v1569
        %v1808 = vpop.f32.mrb[0].mxu0
        %v1809 = vadd.f32 0.0, %v1808
        %v1810 = vpop.f32.mrb[0].mxu0
        %v1811 = vpop.f32.mrb[0].mxu0
        %v1812 = vadd.f32 0.0, %v1811
        %v1813 = vpop.f32.mrb[0].mxu0
        %1814 = vmatprep.mubr.bf16.mxu0 0
        %1815 = vmatmul.mubr.bf16.gmra.mrb[0].mxu0 %v1570
        %v1816 = vpop.f32.mrb[0].mxu0
        %v1817 = vadd.f32 0.0, %v1816
        %v1818 = vpop.f32.mrb[0].mxu0
        %v1819 = vpop.f32.mrb[0].mxu0
        %v1820 = vadd.f32 0.0, %v1819
        %v1821 = vpop.f32.mrb[0].mxu0
        %1822 = vmatprep.mubr.bf16.mxu0 0
        %1823 = vmatmul.mubr.bf16.gmra.mrb[0].mxu0 %v1571
        %v1824 = vpop.f32.mrb[0].mxu0
        %v1825 = vadd.f32 0.0, %v1824
        %v1826 = vpop.f32.mrb[0].mxu0
        %v1827 = vpop.f32.mrb[0].mxu0
        %v1828 = vadd.f32 0.0, %v1827
        %v1829 = vpop.f32.mrb[0].mxu0
        %1830 = vmatprep.mubr.bf16.mxu0 0
        %1831 = vmatmul.mubr.bf16.gmra.mrb[0].mxu0 %v1572
        %v1832 = vpop.f32.mrb[0].mxu0
        %v1833 = vadd.f32 0.0, %v1832
        %v1834 = vpop.f32.mrb[0].mxu0
        %v1835 = vpop.f32.mrb[0].mxu0
        %v1836 = vadd.f32 0.0, %v1835
        %v1837 = vpop.f32.mrb[0].mxu0
        %1838 = vdwg.mxu0
        %v1839 = vld [vmem:[%s23] sm:$0xf]
        %v1840 = vld [vmem:[%s23 + $0x4] sm:$0xf]
        %v1841 = vld [vmem:[%s23 + $0x8] sm:$0xf]
        %v1842 = vld [vmem:[%s23 + $0xc] sm:$0xf]
        %v1843 = vld [vmem:[%s23 + $0x10] sm:$0xf]
        %v1844 = vld [vmem:[%s23 + $0x14] sm:$0xf]
        %v1845 = vld [vmem:[%s23 + $0x18] sm:$0xf]
        %v1846 = vld [vmem:[%s23 + $0x1c] sm:$0xf]
        %v1847 = vld [vmem:[%s23 + $0x20] sm:$0xf]
        %v1848 = vld [vmem:[%s23 + $0x24] sm:$0xf]
        %v1849 = vld [vmem:[%s23 + $0x28] sm:$0xf]
        %v1850 = vld [vmem:[%s23 + $0x2c] sm:$0xf]
        %v1851 = vld [vmem:[%s23 + $0x30] sm:$0xf]
        %v1852 = vld [vmem:[%s23 + $0x34] sm:$0xf]
        %v1853 = vld [vmem:[%s23 + $0x38] sm:$0xf]
        %v1854 = vld [vmem:[%s23 + $0x3c] sm:$0xf]
        %v1871 = vunpack.c.l.b16 %v1839
        %v1872 = vunpack.c.l.b16 %v1840
        %v1873 = vunpack.c.l.b16 %v1841
        %v1874 = vunpack.c.l.b16 %v1842
        %v1875 = vunpack.c.l.b16 %v1843
        %v1876 = vunpack.c.l.b16 %v1844
        %v1877 = vunpack.c.l.b16 %v1845
        %v1878 = vunpack.c.l.b16 %v1846
        %v1879 = vunpack.c.l.b16 %v1847
        %v1880 = vunpack.c.l.b16 %v1848
        %v1881 = vunpack.c.l.b16 %v1849
        %v1882 = vunpack.c.l.b16 %v1850
        %v1883 = vunpack.c.l.b16 %v1851
        %v1884 = vunpack.c.l.b16 %v1852
        %v1885 = vunpack.c.l.b16 %v1853
        %v1886 = vunpack.c.l.b16 %v1854
        %v1887 = vpack.c.b16 %v1872, %v1871
        %v1888 = vpack.c.b16 %v1874, %v1873
        %v1889 = vpack.c.b16 %v1876, %v1875
        %v1890 = vpack.c.b16 %v1878, %v1877
        %v1891 = vpack.c.b16 %v1880, %v1879
        %v1892 = vpack.c.b16 %v1882, %v1881
        %v1893 = vpack.c.b16 %v1884, %v1883
        %v1894 = vpack.c.b16 %v1886, %v1885
        %1903 = vmatprep.subr.bf16.mxu0 0
        %1904 = vmatpush1.bf16.msra.mxu0 %v1887
        %1905 = vmatprep.subr.bf16.mxu0 0
        %1906 = vmatpush1.bf16.msra.mxu0 %v1888
        %1907 = vmatprep.subr.bf16.mxu0 0
        %1908 = vmatpush1.bf16.msra.mxu0 %v1889
        %1909 = vmatprep.subr.bf16.mxu0 0
        %1910 = vmatpush1.bf16.msra.mxu0 %v1890
        %1911 = vmatprep.subr.bf16.mxu0 0
        %1912 = vmatpush1.bf16.msra.mxu0 %v1891
        %1913 = vmatprep.subr.bf16.mxu0 0
        %1914 = vmatpush1.bf16.msra.mxu0 %v1892
        %1915 = vmatprep.subr.bf16.mxu0 0
        %1916 = vmatpush1.bf16.msra.mxu0 %v1893
        %1917 = vmatprep.subr.bf16.mxu0 0
        %1918 = vmatpush1.bf16.msra.mxu0 %v1894
        %1919 = vmatprep.subr.bf16.mxu0 0
        %1920 = vmatpush1.bf16.msra.mxu0 0
        %1921 = vmatprep.subr.bf16.mxu0 0
        %1922 = vmatpush1.bf16.msra.mxu0 0
        %1923 = vmatprep.subr.bf16.mxu0 0
        %1924 = vmatpush1.bf16.msra.mxu0 0
        %1925 = vmatprep.subr.bf16.mxu0 0
        %1926 = vmatpush1.bf16.msra.mxu0 0
        %1927 = vmatprep.subr.bf16.mxu0 0
        %1928 = vmatpush1.bf16.msra.mxu0 0
        %1929 = vmatprep.subr.bf16.mxu0 0
        %1930 = vmatpush1.bf16.msra.mxu0 0
        %1931 = vmatprep.subr.bf16.mxu0 0
        %1932 = vmatpush1.bf16.msra.mxu0 0
        %1933 = vmatprep.subr.bf16.mxu0 0
        %1934 = vmatpush1.bf16.msra.mxu0 0
        %1935 = vmatprep.mubr.bf16.mxu0 0
        %1936 = vmatmul.mubr.bf16.gmra.mrb[0].mxu0 %v1569
        %v1937 = vpop.f32.mrb[0].mxu0
        %v1938 = vadd.f32 0.0, %v1937
        %v1939 = vpop.f32.mrb[0].mxu0
        %v1940 = vpop.f32.mrb[0].mxu0
        %v1941 = vadd.f32 0.0, %v1940
        %v1942 = vpop.f32.mrb[0].mxu0
        %1943 = vmatprep.mubr.bf16.mxu0 0
        %1944 = vmatmul.mubr.bf16.gmra.mrb[0].mxu0 %v1570
        %v1945 = vpop.f32.mrb[0].mxu0
        %v1946 = vadd.f32 0.0, %v1945
        %v1947 = vpop.f32.mrb[0].mxu0
        %v1948 = vpop.f32.mrb[0].mxu0
        %v1949 = vadd.f32 0.0, %v1948
        %v1950 = vpop.f32.mrb[0].mxu0
        %1951 = vmatprep.mubr.bf16.mxu0 0
        %1952 = vmatmul.mubr.bf16.gmra.mrb[0].mxu0 %v1571
        %v1953 = vpop.f32.mrb[0].mxu0
        %v1954 = vadd.f32 0.0, %v1953
        %v1955 = vpop.f32.mrb[0].mxu0
        %v1956 = vpop.f32.mrb[0].mxu0
        %v1957 = vadd.f32 0.0, %v1956
        %v1958 = vpop.f32.mrb[0].mxu0
        %1959 = vmatprep.mubr.bf16.mxu0 0
        %1960 = vmatmul.mubr.bf16.gmra.mrb[0].mxu0 %v1572
        %v1961 = vpop.f32.mrb[0].mxu0
        %v1962 = vadd.f32 0.0, %v1961
        %v1963 = vpop.f32.mrb[0].mxu0
        %v1964 = vpop.f32.mrb[0].mxu0
        %v1965 = vadd.f32 0.0, %v1964
        %v1966 = vpop.f32.mrb[0].mxu0
        %1967 = vdwg.mxu0
        %v1968 = vpack.c.bf16 %v1703, %v1702
        %v1969 = vpack.c.bf16 %v1705, %v1704
        %v1970 = vpack.c.bf16 %v1707, %v1706
        %v1971 = vpack.c.bf16 %v1709, %v1708
        %v1972 = vpack.c.bf16 %v1812, %v1809
        %v1973 = vpack.c.bf16 %v1820, %v1817
        %v1974 = vpack.c.bf16 %v1828, %v1825
        %v1975 = vpack.c.bf16 %v1836, %v1833
        %vm1976 = vcmask 523264
        %v1978 = vsel %vm1976, %v1968, 0
        %v1981 = vsel %vm1976, %v1969, 0
        %v1984 = vsel %vm1976, %v1970, 0
        %v1987 = vsel %vm1976, %v1971, 0
        %v1990 = vsel %vm1976, %v1972, 0
        %v1993 = vsel %vm1976, %v1973, 0
        %v1996 = vsel %vm1976, %v1974, 0
        %v1999 = vsel %vm1976, %v1975, 0
        %2001 = vmatprep.subr.bf16.mxu0 0
        %2002 = vmatpush1.bf16.xpose.msra.mxu0 %v1990
        %2003 = vmatprep.subr.bf16.mxu0 0
        %2004 = vmatpush1.bf16.xpose.msra.mxu0 %v1993
        %2005 = vmatprep.subr.bf16.mxu0 0
        %2006 = vmatpush1.bf16.xpose.msra.mxu0 %v1996
        %2007 = vmatprep.subr.bf16.mxu0 0
        %2008 = vmatpush1.bf16.xpose.msra.mxu0 %v1999
        %2009 = vmatprep.subr.bf16.mxu0 0
        %2010 = vmatpush1.bf16.xpose.msra.mxu0 0
        %2011 = vmatprep.subr.bf16.mxu0 0
        %2012 = vmatpush1.bf16.xpose.msra.mxu0 0
        %2013 = vmatprep.subr.bf16.mxu0 0
        %2014 = vmatpush1.bf16.xpose.msra.mxu0 0
        %2015 = vmatprep.subr.bf16.mxu0 0
        %2016 = vmatpush1.bf16.xpose.msra.mxu0 0
        %2017 = vmatprep.subr.bf16.mxu0 0
        %2018 = vmatpush1.bf16.xpose.msra.mxu0 0
        %2019 = vmatprep.subr.bf16.mxu0 0
        %2020 = vmatpush1.bf16.xpose.msra.mxu0 0
        %2021 = vmatprep.subr.bf16.mxu0 0
        %2022 = vmatpush1.bf16.xpose.msra.mxu0 0
        %2023 = vmatprep.subr.bf16.mxu0 0
        %2024 = vmatpush1.bf16.xpose.msra.mxu0 0
        %2025 = vmatprep.subr.bf16.mxu0 0
        %2026 = vmatpush1.bf16.xpose.msra.mxu0 0
        %2027 = vmatprep.subr.bf16.mxu0 0
        %2028 = vmatpush1.bf16.xpose.msra.mxu0 0
        %2029 = vmatprep.subr.bf16.mxu0 0
        %2030 = vmatpush1.bf16.xpose.msra.mxu0 0
        %2031 = vmatprep.subr.bf16.mxu0 0
        %2032 = vmatpush1.bf16.xpose.msra.mxu0 0
        %2033 = vmatprep.mubr.bf16.mxu0 0
        %2034 = vmatmul.mubr.bf16.gmra.mrb[0].mxu0 %v1978
        %v2035 = vpop.f32.mrb[0].mxu0
        %v2036 = vadd.f32 0.0, %v2035
        %v2037 = vpop.f32.mrb[0].mxu0
        %v2038 = vpop.f32.mrb[0].mxu0
        %v2039 = vadd.f32 0.0, %v2038
        %v2040 = vpop.f32.mrb[0].mxu0
        %2041 = vmatprep.mubr.bf16.mxu0 0
        %2042 = vmatmul.mubr.bf16.gmra.mrb[0].mxu0 %v1981
        %v2043 = vpop.f32.mrb[0].mxu0
        %v2044 = vadd.f32 0.0, %v2043
        %v2045 = vpop.f32.mrb[0].mxu0
        %v2046 = vpop.f32.mrb[0].mxu0
        %v2047 = vadd.f32 0.0, %v2046
        %v2048 = vpop.f32.mrb[0].mxu0
        %2049 = vmatprep.mubr.bf16.mxu0 0
        %2050 = vmatmul.mubr.bf16.gmra.mrb[0].mxu0 %v1984
        %v2051 = vpop.f32.mrb[0].mxu0
        %v2052 = vadd.f32 0.0, %v2051
        %v2053 = vpop.f32.mrb[0].mxu0
        %v2054 = vpop.f32.mrb[0].mxu0
        %v2055 = vadd.f32 0.0, %v2054
        %v2056 = vpop.f32.mrb[0].mxu0
        %2057 = vmatprep.mubr.bf16.mxu0 0
        %2058 = vmatmul.mubr.bf16.gmra.mrb[0].mxu0 %v1987
        %v2059 = vpop.f32.mrb[0].mxu0
        %v2060 = vadd.f32 0.0, %v2059
        %v2061 = vpop.f32.mrb[0].mxu0
        %v2062 = vpop.f32.mrb[0].mxu0
        %v2063 = vadd.f32 0.0, %v2062
        %v2064 = vpop.f32.mrb[0].mxu0
        %2065 = vdwg.mxu0
        %v2066 = vsel %vm1976, %v2036, -inf
        %2067 = vmax.xlane.f32.xlu0 %v2066
        %v2068 = vpop.xlane.xlu0 %2067
        %v2069 = vsel %vm1976, %v2039, -inf
        %2070 = vmax.xlane.f32.xlu0 %v2069
        %v2071 = vpop.xlane.xlu0 %2070
        %v2072 = vsel %vm1976, %v2044, -inf
        %2073 = vmax.xlane.f32.xlu0 %v2072
        %v2074 = vpop.xlane.xlu0 %2073
        %v2075 = vsel %vm1976, %v2047, -inf
        %2076 = vmax.xlane.f32.xlu0 %v2075
        %v2077 = vpop.xlane.xlu0 %2076
        %v2078 = vsel %vm1976, %v2052, -inf
        %2079 = vmax.xlane.f32.xlu0 %v2078
        %v2080 = vpop.xlane.xlu0 %2079
        %v2081 = vsel %vm1976, %v2055, -inf
        %2082 = vmax.xlane.f32.xlu0 %v2081
        %v2083 = vpop.xlane.xlu0 %2082
        %v2084 = vsel %vm1976, %v2060, -inf
        %2085 = vmax.xlane.f32.xlu0 %v2084
        %v2086 = vpop.xlane.xlu0 %2085
        %v2087 = vsel %vm1976, %v2063, -inf
        %2088 = vmax.xlane.f32.xlu0 %v2087
        %v2089 = vpop.xlane.xlu0 %2088
        %v2090 = vsub.f32 %v2036, %v2068
        %v2091 = vsub.f32 %v2039, %v2071
        %v2092 = vsub.f32 %v2044, %v2074
        %v2093 = vsub.f32 %v2047, %v2077
        %v2094 = vsub.f32 %v2052, %v2080
        %v2095 = vsub.f32 %v2055, %v2083
        %v2096 = vsub.f32 %v2060, %v2086
        %v2097 = vsub.f32 %v2063, %v2089
        %v2098 = vmul.f32 %v2090, 1.442695
        %v2099 = vpow.pop %v2098
        %v2100 = vmul.f32 %v2091, 1.442695
        %v2101 = vpow.pop %v2100
        %v2102 = vmul.f32 %v2092, 1.442695
        %v2103 = vpow.pop %v2102
        %v2104 = vmul.f32 %v2093, 1.442695
        %v2105 = vpow.pop %v2104
        %v2106 = vmul.f32 %v2094, 1.442695
        %v2107 = vpow.pop %v2106
        %v2108 = vmul.f32 %v2095, 1.442695
        %v2109 = vpow.pop %v2108
        %v2110 = vmul.f32 %v2096, 1.442695
        %v2111 = vpow.pop %v2110
        %v2112 = vmul.f32 %v2097, 1.442695
        %v2113 = vpow.pop %v2112
        %v2114 = vsel %vm1976, %v2099, 0.0
        %2115 = vadd.xlane.f32.xlu0 %v2114
        %v2116 = vpop.xlane.xlu0 %2115
        %v2117 = vsel %vm1976, %v2101, 0.0
        %2118 = vadd.xlane.f32.xlu0 %v2117
        %v2119 = vpop.xlane.xlu0 %2118
        %v2120 = vsel %vm1976, %v2103, 0.0
        %2121 = vadd.xlane.f32.xlu0 %v2120
        %v2122 = vpop.xlane.xlu0 %2121
        %v2123 = vsel %vm1976, %v2105, 0.0
        %2124 = vadd.xlane.f32.xlu0 %v2123
        %v2125 = vpop.xlane.xlu0 %2124
        %v2126 = vsel %vm1976, %v2107, 0.0
        %2127 = vadd.xlane.f32.xlu0 %v2126
        %v2128 = vpop.xlane.xlu0 %2127
        %v2129 = vsel %vm1976, %v2109, 0.0
        %2130 = vadd.xlane.f32.xlu0 %v2129
        %v2131 = vpop.xlane.xlu0 %2130
        %v2132 = vsel %vm1976, %v2111, 0.0
        %2133 = vadd.xlane.f32.xlu0 %v2132
        %v2134 = vpop.xlane.xlu0 %2133
        %v2135 = vsel %vm1976, %v2113, 0.0
        %2136 = vadd.xlane.f32.xlu0 %v2135
        %v2137 = vpop.xlane.xlu0 %2136
        %v2138 = vrcp.pop %v2116
        %v2139 = vrcp.pop %v2119
        %v2140 = vrcp.pop %v2122
        %v2141 = vrcp.pop %v2125
        %v2142 = vrcp.pop %v2128
        %v2143 = vrcp.pop %v2131
        %v2144 = vrcp.pop %v2134
        %v2145 = vrcp.pop %v2137
        %v2146 = vmul.f32 %v2099, %v2138
        %v2147 = vmul.f32 %v2101, %v2139
        %v2148 = vmul.f32 %v2103, %v2140
        %v2149 = vmul.f32 %v2105, %v2141
        %v2150 = vmul.f32 %v2107, %v2142
        %v2151 = vmul.f32 %v2109, %v2143
        %v2152 = vmul.f32 %v2111, %v2144
        %v2153 = vmul.f32 %v2113, %v2145
        %v2154 = vpack.c.bf16 %v2147, %v2146
        %v2155 = vpack.c.bf16 %v2149, %v2148
        %v2156 = vpack.c.bf16 %v2151, %v2150
        %v2157 = vpack.c.bf16 %v2153, %v2152
        %v2158 = vpack.c.bf16 %v1941, %v1938
        %v2159 = vpack.c.bf16 %v1949, %v1946
        %v2160 = vpack.c.bf16 %v1957, %v1954
        %v2161 = vpack.c.bf16 %v1965, %v1962
        %v2163 = vsel %vm1976, %v2154, 0
        %v2166 = vsel %vm1976, %v2155, 0
        %v2169 = vsel %vm1976, %v2156, 0
        %v2172 = vsel %vm1976, %v2157, 0
        %2174 = vmatprep.subr.bf16.mxu0 0
        %2175 = vmatpush1.bf16.msra.mxu0 %v2158
        %2176 = vmatprep.subr.bf16.mxu0 0
        %2177 = vmatpush1.bf16.msra.mxu0 %v2159
        %2178 = vmatprep.subr.bf16.mxu0 0
        %2179 = vmatpush1.bf16.msra.mxu0 %v2160
        %2180 = vmatprep.subr.bf16.mxu0 0
        %2181 = vmatpush1.bf16.msra.mxu0 %v2161
        %2182 = vmatprep.subr.bf16.mxu0 0
        %2183 = vmatpush1.bf16.msra.mxu0 0
        %2184 = vmatprep.subr.bf16.mxu0 0
        %2185 = vmatpush1.bf16.msra.mxu0 0
        %2186 = vmatprep.subr.bf16.mxu0 0
        %2187 = vmatpush1.bf16.msra.mxu0 0
        %2188 = vmatprep.subr.bf16.mxu0 0
        %2189 = vmatpush1.bf16.msra.mxu0 0
        %2190 = vmatprep.subr.bf16.mxu0 0
        %2191 = vmatpush1.bf16.msra.mxu0 0
        %2192 = vmatprep.subr.bf16.mxu0 0
        %2193 = vmatpush1.bf16.msra.mxu0 0
        %2194 = vmatprep.subr.bf16.mxu0 0
        %2195 = vmatpush1.bf16.msra.mxu0 0
        %2196 = vmatprep.subr.bf16.mxu0 0
        %2197 = vmatpush1.bf16.msra.mxu0 0
        %2198 = vmatprep.subr.bf16.mxu0 0
        %2199 = vmatpush1.bf16.msra.mxu0 0
        %2200 = vmatprep.subr.bf16.mxu0 0
        %2201 = vmatpush1.bf16.msra.mxu0 0
        %2202 = vmatprep.subr.bf16.mxu0 0
        %2203 = vmatpush1.bf16.msra.mxu0 0
        %2204 = vmatprep.subr.bf16.mxu0 0
        %2205 = vmatpush1.bf16.msra.mxu0 0
        %2206 = vmatprep.mubr.bf16.mxu0 0
        %2207 = vmatmul.mubr.bf16.gmra.mrb[0].mxu0 %v2163
        %v2208 = vpop.f32.mrb[0].mxu0
        %v2209 = vadd.f32 0.0, %v2208
        %v2210 = vpop.f32.mrb[0].mxu0
        %v2211 = vpop.f32.mrb[0].mxu0
        %v2212 = vadd.f32 0.0, %v2211
        %v2213 = vpop.f32.mrb[0].mxu0
        %2214 = vmatprep.mubr.bf16.mxu0 0
        %2215 = vmatmul.mubr.bf16.gmra.mrb[0].mxu0 %v2166
        %v2216 = vpop.f32.mrb[0].mxu0
        %v2217 = vadd.f32 0.0, %v2216
        %v2218 = vpop.f32.mrb[0].mxu0
        %v2219 = vpop.f32.mrb[0].mxu0
        %v2220 = vadd.f32 0.0, %v2219
        %v2221 = vpop.f32.mrb[0].mxu0
        %2222 = vmatprep.mubr.bf16.mxu0 0
        %2223 = vmatmul.mubr.bf16.gmra.mrb[0].mxu0 %v2169
        %v2224 = vpop.f32.mrb[0].mxu0
        %v2225 = vadd.f32 0.0, %v2224
        %v2226 = vpop.f32.mrb[0].mxu0
        %v2227 = vpop.f32.mrb[0].mxu0
        %v2228 = vadd.f32 0.0, %v2227
        %v2229 = vpop.f32.mrb[0].mxu0
        %2230 = vmatprep.mubr.bf16.mxu0 0
        %2231 = vmatmul.mubr.bf16.gmra.mrb[0].mxu0 %v2172
        %v2232 = vpop.f32.mrb[0].mxu0
        %v2233 = vadd.f32 0.0, %v2232
        %v2234 = vpop.f32.mrb[0].mxu0
        %v2235 = vpop.f32.mrb[0].mxu0
        %v2236 = vadd.f32 0.0, %v2235
        %v2237 = vpop.f32.mrb[0].mxu0
        %2238 = vdwg.mxu0
        %v2239 = vpack.c.bf16 %v2212, %v2209
        %v2240 = vpack.c.bf16 %v2220, %v2217
        %v2241 = vpack.c.bf16 %v2228, %v2225
        %v2242 = vpack.c.bf16 %v2236, %v2233
        %2243 = vst.msk [vmem:[#allocation2] sm:$0xff] %vm1976, %v2239
        %2244 = vst.msk [vmem:[#allocation2 + $0x8] sm:$0xff] %vm1976, %v2240
        %2245 = vst.msk [vmem:[#allocation2 + $0x10] sm:$0xff] %vm1976, %v2241
        %2246 = vst.msk [vmem:[#allocation2 + $0x18] sm:$0xff] %vm1976, %v2242
        %2251 = vrot.lane.b32.xlu0 %v1968, 64
        %v2252 = vpop.permute.xlu0 %2251
        %2253 = vrot.lane.b32.xlu0 %v1969, 64
        %v2254 = vpop.permute.xlu0 %2253
        %2255 = vrot.lane.b32.xlu0 %v1970, 64
        %v2256 = vpop.permute.xlu0 %2255
        %2257 = vrot.lane.b32.xlu0 %v1971, 64
        %v2258 = vpop.permute.xlu0 %2257
        %2263 = vrot.lane.b32.xlu0 %v1972, 64
        %v2264 = vpop.permute.xlu0 %2263
        %2265 = vrot.lane.b32.xlu0 %v1973, 64
        %v2266 = vpop.permute.xlu0 %2265
        %2267 = vrot.lane.b32.xlu0 %v1974, 64
        %v2268 = vpop.permute.xlu0 %2267
        %2269 = vrot.lane.b32.xlu0 %v1975, 64
        %v2270 = vpop.permute.xlu0 %2269
        %v2272 = vsel %vm1976, %v2252, 0
        %v2275 = vsel %vm1976, %v2254, 0
        %v2278 = vsel %vm1976, %v2256, 0
        %v2281 = vsel %vm1976, %v2258, 0
        %v2284 = vsel %vm1976, %v2264, 0
        %v2287 = vsel %vm1976, %v2266, 0
        %v2290 = vsel %vm1976, %v2268, 0
        %v2293 = vsel %vm1976, %v2270, 0
        %2295 = vmatprep.subr.bf16.mxu0 0
        %2296 = vmatpush1.bf16.xpose.msra.mxu0 %v2284
        %2297 = vmatprep.subr.bf16.mxu0 0
        %2298 = vmatpush1.bf16.xpose.msra.mxu0 %v2287
        %2299 = vmatprep.subr.bf16.mxu0 0
        %2300 = vmatpush1.bf16.xpose.msra.mxu0 %v2290
        %2301 = vmatprep.subr.bf16.mxu0 0
        %2302 = vmatpush1.bf16.xpose.msra.mxu0 %v2293
        %2303 = vmatprep.subr.bf16.mxu0 0
        %2304 = vmatpush1.bf16.xpose.msra.mxu0 0
        %2305 = vmatprep.subr.bf16.mxu0 0
        %2306 = vmatpush1.bf16.xpose.msra.mxu0 0
        %2307 = vmatprep.subr.bf16.mxu0 0
        %2308 = vmatpush1.bf16.xpose.msra.mxu0 0
        %2309 = vmatprep.subr.bf16.mxu0 0
        %2310 = vmatpush1.bf16.xpose.msra.mxu0 0
        %2311 = vmatprep.subr.bf16.mxu0 0
        %2312 = vmatpush1.bf16.xpose.msra.mxu0 0
        %2313 = vmatprep.subr.bf16.mxu0 0
        %2314 = vmatpush1.bf16.xpose.msra.mxu0 0
        %2315 = vmatprep.subr.bf16.mxu0 0
        %2316 = vmatpush1.bf16.xpose.msra.mxu0 0
        %2317 = vmatprep.subr.bf16.mxu0 0
        %2318 = vmatpush1.bf16.xpose.msra.mxu0 0
        %2319 = vmatprep.subr.bf16.mxu0 0
        %2320 = vmatpush1.bf16.xpose.msra.mxu0 0
        %2321 = vmatprep.subr.bf16.mxu0 0
        %2322 = vmatpush1.bf16.xpose.msra.mxu0 0
        %2323 = vmatprep.subr.bf16.mxu0 0
        %2324 = vmatpush1.bf16.xpose.msra.mxu0 0
        %2325 = vmatprep.subr.bf16.mxu0 0
        %2326 = vmatpush1.bf16.xpose.msra.mxu0 0
        %2327 = vmatprep.mubr.bf16.mxu0 0
        %2328 = vmatmul.mubr.bf16.gmra.mrb[0].mxu0 %v2272
        %v2329 = vpop.f32.mrb[0].mxu0
        %v2330 = vadd.f32 0.0, %v2329
        %v2331 = vpop.f32.mrb[0].mxu0
        %v2332 = vpop.f32.mrb[0].mxu0
        %v2333 = vadd.f32 0.0, %v2332
        %v2334 = vpop.f32.mrb[0].mxu0
        %2335 = vmatprep.mubr.bf16.mxu0 0
        %2336 = vmatmul.mubr.bf16.gmra.mrb[0].mxu0 %v2275
        %v2337 = vpop.f32.mrb[0].mxu0
        %v2338 = vadd.f32 0.0, %v2337
        %v2339 = vpop.f32.mrb[0].mxu0
        %v2340 = vpop.f32.mrb[0].mxu0
        %v2341 = vadd.f32 0.0, %v2340
        %v2342 = vpop.f32.mrb[0].mxu0
        %2343 = vmatprep.mubr.bf16.mxu0 0
        %2344 = vmatmul.mubr.bf16.gmra.mrb[0].mxu0 %v2278
        %v2345 = vpop.f32.mrb[0].mxu0
        %v2346 = vadd.f32 0.0, %v2345
        %v2347 = vpop.f32.mrb[0].mxu0
        %v2348 = vpop.f32.mrb[0].mxu0
        %v2349 = vadd.f32 0.0, %v2348
        %v2350 = vpop.f32.mrb[0].mxu0
        %2351 = vmatprep.mubr.bf16.mxu0 0
        %2352 = vmatmul.mubr.bf16.gmra.mrb[0].mxu0 %v2281
        %v2353 = vpop.f32.mrb[0].mxu0
        %v2354 = vadd.f32 0.0, %v2353
        %v2355 = vpop.f32.mrb[0].mxu0
        %v2356 = vpop.f32.mrb[0].mxu0
        %v2357 = vadd.f32 0.0, %v2356
        %v2358 = vpop.f32.mrb[0].mxu0
        %2359 = vdwg.mxu0
        %v2360 = vsel %vm1976, %v2330, -inf
        %2361 = vmax.xlane.f32.xlu0 %v2360
        %v2362 = vpop.xlane.xlu0 %2361
        %v2363 = vsel %vm1976, %v2333, -inf
        %2364 = vmax.xlane.f32.xlu0 %v2363
        %v2365 = vpop.xlane.xlu0 %2364
        %v2366 = vsel %vm1976, %v2338, -inf
        %2367 = vmax.xlane.f32.xlu0 %v2366
        %v2368 = vpop.xlane.xlu0 %2367
        %v2369 = vsel %vm1976, %v2341, -inf
        %2370 = vmax.xlane.f32.xlu0 %v2369
        %v2371 = vpop.xlane.xlu0 %2370
        %v2372 = vsel %vm1976, %v2346, -inf
        %2373 = vmax.xlane.f32.xlu0 %v2372
        %v2374 = vpop.xlane.xlu0 %2373
        %v2375 = vsel %vm1976, %v2349, -inf
        %2376 = vmax.xlane.f32.xlu0 %v2375
        %v2377 = vpop.xlane.xlu0 %2376
        %v2378 = vsel %vm1976, %v2354, -inf
        %2379 = vmax.xlane.f32.xlu0 %v2378
        %v2380 = vpop.xlane.xlu0 %2379
        %v2381 = vsel %vm1976, %v2357, -inf
        %2382 = vmax.xlane.f32.xlu0 %v2381
        %v2383 = vpop.xlane.xlu0 %2382
        %v2384 = vsub.f32 %v2330, %v2362
        %v2385 = vsub.f32 %v2333, %v2365
        %v2386 = vsub.f32 %v2338, %v2368
        %v2387 = vsub.f32 %v2341, %v2371
        %v2388 = vsub.f32 %v2346, %v2374
        %v2389 = vsub.f32 %v2349, %v2377
        %v2390 = vsub.f32 %v2354, %v2380
        %v2391 = vsub.f32 %v2357, %v2383
        %v2392 = vmul.f32 %v2384, 1.442695
        %v2393 = vpow.pop %v2392
        %v2394 = vmul.f32 %v2385, 1.442695
        %v2395 = vpow.pop %v2394
        %v2396 = vmul.f32 %v2386, 1.442695
        %v2397 = vpow.pop %v2396
        %v2398 = vmul.f32 %v2387, 1.442695
        %v2399 = vpow.pop %v2398
        %v2400 = vmul.f32 %v2388, 1.442695
        %v2401 = vpow.pop %v2400
        %v2402 = vmul.f32 %v2389, 1.442695
        %v2403 = vpow.pop %v2402
        %v2404 = vmul.f32 %v2390, 1.442695
        %v2405 = vpow.pop %v2404
        %v2406 = vmul.f32 %v2391, 1.442695
        %v2407 = vpow.pop %v2406
        %v2408 = vsel %vm1976, %v2393, 0.0
        %2409 = vadd.xlane.f32.xlu0 %v2408
        %v2410 = vpop.xlane.xlu0 %2409
        %v2411 = vsel %vm1976, %v2395, 0.0
        %2412 = vadd.xlane.f32.xlu0 %v2411
        %v2413 = vpop.xlane.xlu0 %2412
        %v2414 = vsel %vm1976, %v2397, 0.0
        %2415 = vadd.xlane.f32.xlu0 %v2414
        %v2416 = vpop.xlane.xlu0 %2415
        %v2417 = vsel %vm1976, %v2399, 0.0
        %2418 = vadd.xlane.f32.xlu0 %v2417
        %v2419 = vpop.xlane.xlu0 %2418
        %v2420 = vsel %vm1976, %v2401, 0.0
        %2421 = vadd.xlane.f32.xlu0 %v2420
        %v2422 = vpop.xlane.xlu0 %2421
        %v2423 = vsel %vm1976, %v2403, 0.0
        %2424 = vadd.xlane.f32.xlu0 %v2423
        %v2425 = vpop.xlane.xlu0 %2424
        %v2426 = vsel %vm1976, %v2405, 0.0
        %2427 = vadd.xlane.f32.xlu0 %v2426
        %v2428 = vpop.xlane.xlu0 %2427
        %v2429 = vsel %vm1976, %v2407, 0.0
        %2430 = vadd.xlane.f32.xlu0 %v2429
        %v2431 = vpop.xlane.xlu0 %2430
        %v2432 = vrcp.pop %v2410
        %v2433 = vrcp.pop %v2413
        %v2434 = vrcp.pop %v2416
        %v2435 = vrcp.pop %v2419
        %v2436 = vrcp.pop %v2422
        %v2437 = vrcp.pop %v2425
        %v2438 = vrcp.pop %v2428
        %v2439 = vrcp.pop %v2431
        %v2440 = vmul.f32 %v2393, %v2432
        %v2441 = vmul.f32 %v2395, %v2433
        %v2442 = vmul.f32 %v2397, %v2434
        %v2443 = vmul.f32 %v2399, %v2435
        %v2444 = vmul.f32 %v2401, %v2436
        %v2445 = vmul.f32 %v2403, %v2437
        %v2446 = vmul.f32 %v2405, %v2438
        %v2447 = vmul.f32 %v2407, %v2439
        %v2448 = vpack.c.bf16 %v2441, %v2440
        %v2449 = vpack.c.bf16 %v2443, %v2442
        %v2450 = vpack.c.bf16 %v2445, %v2444
        %v2451 = vpack.c.bf16 %v2447, %v2446
        %2456 = vrot.lane.b32.xlu0 %v2158, 64
        %v2457 = vpop.permute.xlu0 %2456
        %2458 = vrot.lane.b32.xlu0 %v2159, 64
        %v2459 = vpop.permute.xlu0 %2458
        %2460 = vrot.lane.b32.xlu0 %v2160, 64
        %v2461 = vpop.permute.xlu0 %2460
        %2462 = vrot.lane.b32.xlu0 %v2161, 64
        %v2463 = vpop.permute.xlu0 %2462
        %v2469 = vsel %vm1976, %v2448, 0
        %v2472 = vsel %vm1976, %v2449, 0
        %v2475 = vsel %vm1976, %v2450, 0
        %v2478 = vsel %vm1976, %v2451, 0
        %2480 = vmatprep.subr.bf16.mxu0 0
        %2481 = vmatpush1.bf16.msra.mxu0 %v2457
        %2482 = vmatprep.subr.bf16.mxu0 0
        %2483 = vmatpush1.bf16.msra.mxu0 %v2459
        %2484 = vmatprep.subr.bf16.mxu0 0
        %2485 = vmatpush1.bf16.msra.mxu0 %v2461
        %2486 = vmatprep.subr.bf16.mxu0 0
        %2487 = vmatpush1.bf16.msra.mxu0 %v2463
        %2488 = vmatprep.subr.bf16.mxu0 0
        %2489 = vmatpush1.bf16.msra.mxu0 0
        %2490 = vmatprep.subr.bf16.mxu0 0
        %2491 = vmatpush1.bf16.msra.mxu0 0
        %2492 = vmatprep.subr.bf16.mxu0 0
        %2493 = vmatpush1.bf16.msra.mxu0 0
        %2494 = vmatprep.subr.bf16.mxu0 0
        %2495 = vmatpush1.bf16.msra.mxu0 0
        %2496 = vmatprep.subr.bf16.mxu0 0
        %2497 = vmatpush1.bf16.msra.mxu0 0
        %2498 = vmatprep.subr.bf16.mxu0 0
        %2499 = vmatpush1.bf16.msra.mxu0 0
        %2500 = vmatprep.subr.bf16.mxu0 0
        %2501 = vmatpush1.bf16.msra.mxu0 0
        %2502 = vmatprep.subr.bf16.mxu0 0
        %2503 = vmatpush1.bf16.msra.mxu0 0
        %2504 = vmatprep.subr.bf16.mxu0 0
        %2505 = vmatpush1.bf16.msra.mxu0 0
        %2506 = vmatprep.subr.bf16.mxu0 0
        %2507 = vmatpush1.bf16.msra.mxu0 0
        %2508 = vmatprep.subr.bf16.mxu0 0
        %2509 = vmatpush1.bf16.msra.mxu0 0
        %2510 = vmatprep.subr.bf16.mxu0 0
        %2511 = vmatpush1.bf16.msra.mxu0 0
        %2512 = vmatprep.mubr.bf16.mxu0 0
        %2513 = vmatmul.mubr.bf16.gmra.mrb[0].mxu0 %v2469
        %v2514 = vpop.f32.mrb[0].mxu0
        %v2515 = vadd.f32 0.0, %v2514
        %v2516 = vpop.f32.mrb[0].mxu0
        %v2517 = vpop.f32.mrb[0].mxu0
        %v2518 = vadd.f32 0.0, %v2517
        %v2519 = vpop.f32.mrb[0].mxu0
        %2520 = vmatprep.mubr.bf16.mxu0 0
        %2521 = vmatmul.mubr.bf16.gmra.mrb[0].mxu0 %v2472
        %v2522 = vpop.f32.mrb[0].mxu0
        %v2523 = vadd.f32 0.0, %v2522
        %v2524 = vpop.f32.mrb[0].mxu0
        %v2525 = vpop.f32.mrb[0].mxu0
        %v2526 = vadd.f32 0.0, %v2525
        %v2527 = vpop.f32.mrb[0].mxu0
        %2528 = vmatprep.mubr.bf16.mxu0 0
        %2529 = vmatmul.mubr.bf16.gmra.mrb[0].mxu0 %v2475
        %v2530 = vpop.f32.mrb[0].mxu0
        %v2531 = vadd.f32 0.0, %v2530
        %v2532 = vpop.f32.mrb[0].mxu0
        %v2533 = vpop.f32.mrb[0].mxu0
        %v2534 = vadd.f32 0.0, %v2533
        %v2535 = vpop.f32.mrb[0].mxu0
        %2536 = vmatprep.mubr.bf16.mxu0 0
        %2537 = vmatmul.mubr.bf16.gmra.mrb[0].mxu0 %v2478
        %v2538 = vpop.f32.mrb[0].mxu0
        %v2539 = vadd.f32 0.0, %v2538
        %v2540 = vpop.f32.mrb[0].mxu0
        %v2541 = vpop.f32.mrb[0].mxu0
        %v2542 = vadd.f32 0.0, %v2541
        %v2543 = vpop.f32.mrb[0].mxu0
        %2544 = vdwg.mxu0
        %v2545 = vpack.c.bf16 %v2518, %v2515
        %v2546 = vpack.c.bf16 %v2526, %v2523
        %v2547 = vpack.c.bf16 %v2534, %v2531
        %v2548 = vpack.c.bf16 %v2542, %v2539
        %2553 = vrot.lane.b32.xlu0 %v2545, 64
        %v2554 = vpop.permute.xlu0 %2553
        %2555 = vrot.lane.b32.xlu0 %v2546, 64
        %v2556 = vpop.permute.xlu0 %2555
        %2557 = vrot.lane.b32.xlu0 %v2547, 64
        %v2558 = vpop.permute.xlu0 %2557
        %2559 = vrot.lane.b32.xlu0 %v2548, 64
        %v2560 = vpop.permute.xlu0 %2559
        %vm2565 = vcmask 1048064
        %2566 = vst.msk [vmem:[#allocation2] sm:$0xff] %vm2565, %v2554
        %2567 = vst.msk [vmem:[#allocation2 + $0x8] sm:$0xff] %vm2565, %v2556
        %2568 = vst.msk [vmem:[#allocation2 + $0x10] sm:$0xff] %vm2565, %v2558
        %2569 = vst.msk [vmem:[#allocation2 + $0x18] sm:$0xff] %vm2565, %v2560
        %v2570 = vld [vmem:[#allocation2] sm:$0xff]
        %v2571 = vld [vmem:[#allocation2 + $0x8] sm:$0xff]
        %v2572 = vld [vmem:[#allocation2 + $0x10] sm:$0xff]
        %v2573 = vld [vmem:[#allocation2 + $0x18] sm:$0xff]
        %v2574 = vld [vmem:[%s25] sm:$0xf]
        %v2575 = vld [vmem:[%s25 + $0x4] sm:$0xf]
        %v2576 = vld [vmem:[%s25 + $0x8] sm:$0xf]
        %v2577 = vld [vmem:[%s25 + $0xc] sm:$0xf]
        %v2578 = vld [vmem:[%s25 + $0x10] sm:$0xf]
        %v2579 = vld [vmem:[%s25 + $0x14] sm:$0xf]
        %v2580 = vld [vmem:[%s25 + $0x18] sm:$0xf]
        %v2581 = vld [vmem:[%s25 + $0x1c] sm:$0xf]
        %v2582 = vld [vmem:[%s25 + $0x20] sm:$0xf]
        %v2583 = vld [vmem:[%s25 + $0x24] sm:$0xf]
        %v2584 = vld [vmem:[%s25 + $0x28] sm:$0xf]
        %v2585 = vld [vmem:[%s25 + $0x2c] sm:$0xf]
        %v2586 = vld [vmem:[%s25 + $0x30] sm:$0xf]
        %v2587 = vld [vmem:[%s25 + $0x34] sm:$0xf]
        %v2588 = vld [vmem:[%s25 + $0x38] sm:$0xf]
        %v2589 = vld [vmem:[%s25 + $0x3c] sm:$0xf]
        %v2590 = vld [vmem:[%s27] sm:$0x1]
        %v2592 = vlaneseq
        %v2593 = vshrl.u32 %v2592, 7
        %v2594 = vsub.s32 0, %v2593
        %v2595 = vrot.slane %v2590, %v2594
        %v2613 = vunpack.c.l.b16 %v2574
        %v2614 = vunpack.c.l.b16 %v2575
        %v2615 = vunpack.c.l.b16 %v2576
        %v2616 = vunpack.c.l.b16 %v2577
        %v2617 = vunpack.c.l.b16 %v2578
        %v2618 = vunpack.c.l.b16 %v2579
        %v2619 = vunpack.c.l.b16 %v2580
        %v2620 = vunpack.c.l.b16 %v2581
        %v2621 = vunpack.c.l.b16 %v2582
        %v2622 = vunpack.c.l.b16 %v2583
        %v2623 = vunpack.c.l.b16 %v2584
        %v2624 = vunpack.c.l.b16 %v2585
        %v2625 = vunpack.c.l.b16 %v2586
        %v2626 = vunpack.c.l.b16 %v2587
        %v2627 = vunpack.c.l.b16 %v2588
        %v2628 = vunpack.c.l.b16 %v2589
        %v2629 = vpack.c.b16 %v2614, %v2613
        %v2630 = vpack.c.b16 %v2616, %v2615
        %v2631 = vpack.c.b16 %v2618, %v2617
        %v2632 = vpack.c.b16 %v2620, %v2619
        %v2633 = vpack.c.b16 %v2622, %v2621
        %v2634 = vpack.c.b16 %v2624, %v2623
        %v2635 = vpack.c.b16 %v2626, %v2625
        %v2636 = vpack.c.b16 %v2628, %v2627
        %2645 = vmatprep.subr.bf16.mxu0 0
        %2646 = vmatpush1.bf16.msra.mxu0 %v2629
        %2647 = vmatprep.subr.bf16.mxu0 0
        %2648 = vmatpush1.bf16.msra.mxu0 %v2630
        %2649 = vmatprep.subr.bf16.mxu0 0
        %2650 = vmatpush1.bf16.msra.mxu0 %v2631
        %2651 = vmatprep.subr.bf16.mxu0 0
        %2652 = vmatpush1.bf16.msra.mxu0 %v2632
        %2653 = vmatprep.subr.bf16.mxu0 0
        %2654 = vmatpush1.bf16.msra.mxu0 %v2633
        %2655 = vmatprep.subr.bf16.mxu0 0
        %2656 = vmatpush1.bf16.msra.mxu0 %v2634
        %2657 = vmatprep.subr.bf16.mxu0 0
        %2658 = vmatpush1.bf16.msra.mxu0 %v2635
        %2659 = vmatprep.subr.bf16.mxu0 0
        %2660 = vmatpush1.bf16.msra.mxu0 %v2636
        %2661 = vmatprep.subr.bf16.mxu0 0
        %2662 = vmatpush1.bf16.msra.mxu0 0
        %2663 = vmatprep.subr.bf16.mxu0 0
        %2664 = vmatpush1.bf16.msra.mxu0 0
        %2665 = vmatprep.subr.bf16.mxu0 0
        %2666 = vmatpush1.bf16.msra.mxu0 0
        %2667 = vmatprep.subr.bf16.mxu0 0
        %2668 = vmatpush1.bf16.msra.mxu0 0
        %2669 = vmatprep.subr.bf16.mxu0 0
        %2670 = vmatpush1.bf16.msra.mxu0 0
        %2671 = vmatprep.subr.bf16.mxu0 0
        %2672 = vmatpush1.bf16.msra.mxu0 0
        %2673 = vmatprep.subr.bf16.mxu0 0
        %2674 = vmatpush1.bf16.msra.mxu0 0
        %2675 = vmatprep.subr.bf16.mxu0 0
        %2676 = vmatpush1.bf16.msra.mxu0 0
        %2677 = vmatprep.mubr.bf16.mxu0 0
        %2678 = vmatmul.mubr.bf16.gmra.mrb[0].mxu0 %v2570
        %v2679 = vpop.f32.mrb[0].mxu0
        %v2680 = vadd.f32 %v2595, %v2679
        %v2681 = vpop.f32.mrb[0].mxu0
        %v2682 = vpop.f32.mrb[0].mxu0
        %v2683 = vadd.f32 %v2595, %v2682
        %v2684 = vpop.f32.mrb[0].mxu0
        %2685 = vmatprep.mubr.bf16.mxu0 0
        %2686 = vmatmul.mubr.bf16.gmra.mrb[0].mxu0 %v2571
        %v2687 = vpop.f32.mrb[0].mxu0
        %v2688 = vadd.f32 %v2595, %v2687
        %v2689 = vpop.f32.mrb[0].mxu0
        %v2690 = vpop.f32.mrb[0].mxu0
        %v2691 = vadd.f32 %v2595, %v2690
        %v2692 = vpop.f32.mrb[0].mxu0
        %2693 = vmatprep.mubr.bf16.mxu0 0
        %2694 = vmatmul.mubr.bf16.gmra.mrb[0].mxu0 %v2572
        %v2695 = vpop.f32.mrb[0].mxu0
        %v2696 = vadd.f32 %v2595, %v2695
        %v2697 = vpop.f32.mrb[0].mxu0
        %v2698 = vpop.f32.mrb[0].mxu0
        %v2699 = vadd.f32 %v2595, %v2698
        %v2700 = vpop.f32.mrb[0].mxu0
        %2701 = vmatprep.mubr.bf16.mxu0 0
        %2702 = vmatmul.mubr.bf16.gmra.mrb[0].mxu0 %v2573
        %v2703 = vpop.f32.mrb[0].mxu0
        %v2704 = vadd.f32 %v2595, %v2703
        %v2705 = vpop.f32.mrb[0].mxu0
        %v2706 = vpop.f32.mrb[0].mxu0
        %v2707 = vadd.f32 %v2595, %v2706
        %v2708 = vpop.f32.mrb[0].mxu0
        %2709 = vdwg.mxu0
        %v2710 = vadd.f32 %v2680, %v1420
        %v2711 = vadd.f32 %v2683, %v1423
        %v2712 = vadd.f32 %v2688, %v1428
        %v2713 = vadd.f32 %v2691, %v1431
        %v2714 = vadd.f32 %v2696, %v1436
        %v2715 = vadd.f32 %v2699, %v1439
        %v2716 = vadd.f32 %v2704, %v1444
        %v2717 = vadd.f32 %v2707, %v1447
        %2718 = vadd.xlane.f32.xlu0 %v2710
        %v2719 = vpop.xlane.xlu0 %2718
        %2720 = vadd.xlane.f32.xlu0 %v2711
        %v2721 = vpop.xlane.xlu0 %2720
        %2722 = vadd.xlane.f32.xlu0 %v2712
        %v2723 = vpop.xlane.xlu0 %2722
        %2724 = vadd.xlane.f32.xlu0 %v2713
        %v2725 = vpop.xlane.xlu0 %2724
        %2726 = vadd.xlane.f32.xlu0 %v2714
        %v2727 = vpop.xlane.xlu0 %2726
        %2728 = vadd.xlane.f32.xlu0 %v2715
        %v2729 = vpop.xlane.xlu0 %2728
        %2730 = vadd.xlane.f32.xlu0 %v2716
        %v2731 = vpop.xlane.xlu0 %2730
        %2732 = vadd.xlane.f32.xlu0 %v2717
        %v2733 = vpop.xlane.xlu0 %2732
        %v2734 = vmul.f32 %v2719, %v1466
        %v2735 = vmul.f32 %v2721, %v1466
        %v2736 = vmul.f32 %v2723, %v1466
        %v2737 = vmul.f32 %v2725, %v1466
        %v2738 = vmul.f32 %v2727, %v1466
        %v2739 = vmul.f32 %v2729, %v1466
        %v2740 = vmul.f32 %v2731, %v1466
        %v2741 = vmul.f32 %v2733, %v1466
        %v2742 = vsub.f32 %v2710, %v2734
        %v2743 = vsub.f32 %v2711, %v2735
        %v2744 = vsub.f32 %v2712, %v2736
        %v2745 = vsub.f32 %v2713, %v2737
        %v2746 = vsub.f32 %v2714, %v2738
        %v2747 = vsub.f32 %v2715, %v2739
        %v2748 = vsub.f32 %v2716, %v2740
        %v2749 = vsub.f32 %v2717, %v2741
        %v2750 = vmul.f32 %v2742, %v2742
        %v2751 = vmul.f32 %v2743, %v2743
        %v2752 = vmul.f32 %v2744, %v2744
        %v2753 = vmul.f32 %v2745, %v2745
        %v2754 = vmul.f32 %v2746, %v2746
        %v2755 = vmul.f32 %v2747, %v2747
        %v2756 = vmul.f32 %v2748, %v2748
        %v2757 = vmul.f32 %v2749, %v2749
        %2758 = vadd.xlane.f32.xlu0 %v2750
        %v2759 = vpop.xlane.xlu0 %2758
        %2760 = vadd.xlane.f32.xlu0 %v2751
        %v2761 = vpop.xlane.xlu0 %2760
        %2762 = vadd.xlane.f32.xlu0 %v2752
        %v2763 = vpop.xlane.xlu0 %2762
        %2764 = vadd.xlane.f32.xlu0 %v2753
        %v2765 = vpop.xlane.xlu0 %2764
        %2766 = vadd.xlane.f32.xlu0 %v2754
        %v2767 = vpop.xlane.xlu0 %2766
        %2768 = vadd.xlane.f32.xlu0 %v2755
        %v2769 = vpop.xlane.xlu0 %2768
        %2770 = vadd.xlane.f32.xlu0 %v2756
        %v2771 = vpop.xlane.xlu0 %2770
        %2772 = vadd.xlane.f32.xlu0 %v2757
        %v2773 = vpop.xlane.xlu0 %2772
        %v2774 = vmul.f32 %v2759, %v1466
        %v2775 = vmul.f32 %v2761, %v1466
        %v2776 = vmul.f32 %v2763, %v1466
        %v2777 = vmul.f32 %v2765, %v1466
        %v2778 = vmul.f32 %v2767, %v1466
        %v2779 = vmul.f32 %v2769, %v1466
        %v2780 = vmul.f32 %v2771, %v1466
        %v2781 = vmul.f32 %v2773, %v1466
        %v2782 = vadd.f32 %v2774, 1e-05
        %v2783 = vadd.f32 %v2775, 1e-05
        %v2784 = vadd.f32 %v2776, 1e-05
        %v2785 = vadd.f32 %v2777, 1e-05
        %v2786 = vadd.f32 %v2778, 1e-05
        %v2787 = vadd.f32 %v2779, 1e-05
        %v2788 = vadd.f32 %v2780, 1e-05
        %v2789 = vadd.f32 %v2781, 1e-05
        %v2790 = vrsqrt.pop %v2782
        %v2791 = vrsqrt.pop %v2783
        %v2792 = vrsqrt.pop %v2784
        %v2793 = vrsqrt.pop %v2785
        %v2794 = vrsqrt.pop %v2786
        %v2795 = vrsqrt.pop %v2787
        %v2796 = vrsqrt.pop %v2788
        %v2797 = vrsqrt.pop %v2789
        %v2798 = vmul.f32 %v2742, %v2790
        %v2799 = vmul.f32 %v2743, %v2791
        %v2800 = vmul.f32 %v2744, %v2792
        %v2801 = vmul.f32 %v2745, %v2793
        %v2802 = vmul.f32 %v2746, %v2794
        %v2803 = vmul.f32 %v2747, %v2795
        %v2804 = vmul.f32 %v2748, %v2796
        %v2805 = vmul.f32 %v2749, %v2797
        %v2806 = vld [vmem:[%s29] sm:$0x1]
        %v2808 = vlaneseq
        %v2809 = vshrl.u32 %v2808, 7
        %v2810 = vsub.s32 0, %v2809
        %v2811 = vrot.slane %v2806, %v2810
        %v2813 = vmul.f32 %v2798, %v2811
        %v2814 = vmul.f32 %v2799, %v2811
        %v2815 = vmul.f32 %v2800, %v2811
        %v2816 = vmul.f32 %v2801, %v2811
        %v2817 = vmul.f32 %v2802, %v2811
        %v2818 = vmul.f32 %v2803, %v2811
        %v2819 = vmul.f32 %v2804, %v2811
        %v2820 = vmul.f32 %v2805, %v2811
        %v2821 = vld [vmem:[%s31] sm:$0x1]
        %v2823 = vlaneseq
        %v2824 = vshrl.u32 %v2823, 7
        %v2825 = vsub.s32 0, %v2824
        %v2826 = vrot.slane %v2821, %v2825
        %v2828 = vadd.f32 %v2813, %v2826
        %v2829 = vadd.f32 %v2814, %v2826
        %v2830 = vadd.f32 %v2815, %v2826
        %v2831 = vadd.f32 %v2816, %v2826
        %v2832 = vadd.f32 %v2817, %v2826
        %v2833 = vadd.f32 %v2818, %v2826
        %v2834 = vadd.f32 %v2819, %v2826
        %v2835 = vadd.f32 %v2820, %v2826
        %v2836 = vpack.c.bf16 %v2829, %v2828
        %v2837 = vpack.c.bf16 %v2831, %v2830
        %v2838 = vpack.c.bf16 %v2833, %v2832
        %v2839 = vpack.c.bf16 %v2835, %v2834
        %v2840 = vld [vmem:[%s33] sm:$0xf]
        %v2841 = vld [vmem:[%s33 + $0x4] sm:$0xf]
        %v2842 = vld [vmem:[%s33 + $0x8] sm:$0xf]
        %v2843 = vld [vmem:[%s33 + $0xc] sm:$0xf]
        %v2844 = vld [vmem:[%s33 + $0x10] sm:$0xf]
        %v2845 = vld [vmem:[%s33 + $0x14] sm:$0xf]
        %v2846 = vld [vmem:[%s33 + $0x18] sm:$0xf]
        %v2847 = vld [vmem:[%s33 + $0x1c] sm:$0xf]
        %v2848 = vld [vmem:[%s33 + $0x20] sm:$0xf]
        %v2849 = vld [vmem:[%s33 + $0x24] sm:$0xf]
        %v2850 = vld [vmem:[%s33 + $0x28] sm:$0xf]
        %v2851 = vld [vmem:[%s33 + $0x2c] sm:$0xf]
        %v2852 = vld [vmem:[%s33 + $0x30] sm:$0xf]
        %v2853 = vld [vmem:[%s33 + $0x34] sm:$0xf]
        %v2854 = vld [vmem:[%s33 + $0x38] sm:$0xf]
        %v2855 = vld [vmem:[%s33 + $0x3c] sm:$0xf]
        %v2872 = vunpack.c.l.b16 %v2840
        %v2873 = vunpack.c.l.b16 %v2841
        %v2874 = vunpack.c.l.b16 %v2842
        %v2875 = vunpack.c.l.b16 %v2843
        %v2876 = vunpack.c.l.b16 %v2844
        %v2877 = vunpack.c.l.b16 %v2845
        %v2878 = vunpack.c.l.b16 %v2846
        %v2879 = vunpack.c.l.b16 %v2847
        %v2880 = vunpack.c.l.b16 %v2848
        %v2881 = vunpack.c.l.b16 %v2849
        %v2882 = vunpack.c.l.b16 %v2850
        %v2883 = vunpack.c.l.b16 %v2851
        %v2884 = vunpack.c.l.b16 %v2852
        %v2885 = vunpack.c.l.b16 %v2853
        %v2886 = vunpack.c.l.b16 %v2854
        %v2887 = vunpack.c.l.b16 %v2855
        %v2888 = vpack.c.b16 %v2873, %v2872
        %v2889 = vpack.c.b16 %v2875, %v2874
        %v2890 = vpack.c.b16 %v2877, %v2876
        %v2891 = vpack.c.b16 %v2879, %v2878
        %v2892 = vpack.c.b16 %v2881, %v2880
        %v2893 = vpack.c.b16 %v2883, %v2882
        %v2894 = vpack.c.b16 %v2885, %v2884
        %v2895 = vpack.c.b16 %v2887, %v2886
        %2904 = vmatprep.subr.bf16.mxu0 0
        %2905 = vmatpush1.bf16.msra.mxu0 %v2888
        %2906 = vmatprep.subr.bf16.mxu0 0
        %2907 = vmatpush1.bf16.msra.mxu0 %v2889
        %2908 = vmatprep.subr.bf16.mxu0 0
        %2909 = vmatpush1.bf16.msra.mxu0 %v2890
        %2910 = vmatprep.subr.bf16.mxu0 0
        %2911 = vmatpush1.bf16.msra.mxu0 %v2891
        %2912 = vmatprep.subr.bf16.mxu0 0
        %2913 = vmatpush1.bf16.msra.mxu0 %v2892
        %2914 = vmatprep.subr.bf16.mxu0 0
        %2915 = vmatpush1.bf16.msra.mxu0 %v2893
        %2916 = vmatprep.subr.bf16.mxu0 0
        %2917 = vmatpush1.bf16.msra.mxu0 %v2894
        %2918 = vmatprep.subr.bf16.mxu0 0
        %2919 = vmatpush1.bf16.msra.mxu0 %v2895
        %2920 = vmatprep.subr.bf16.mxu0 0
        %2921 = vmatpush1.bf16.msra.mxu0 0
        %2922 = vmatprep.subr.bf16.mxu0 0
        %2923 = vmatpush1.bf16.msra.mxu0 0
        %2924 = vmatprep.subr.bf16.mxu0 0
        %2925 = vmatpush1.bf16.msra.mxu0 0
        %2926 = vmatprep.subr.bf16.mxu0 0
        %2927 = vmatpush1.bf16.msra.mxu0 0
        %2928 = vmatprep.subr.bf16.mxu0 0
        %2929 = vmatpush1.bf16.msra.mxu0 0
        %2930 = vmatprep.subr.bf16.mxu0 0
        %2931 = vmatpush1.bf16.msra.mxu0 0
        %2932 = vmatprep.subr.bf16.mxu0 0
        %2933 = vmatpush1.bf16.msra.mxu0 0
        %2934 = vmatprep.subr.bf16.mxu0 0
        %2935 = vmatpush1.bf16.msra.mxu0 0
        %2936 = vmatprep.mubr.bf16.mxu0 0
        %2937 = vmatmul.mubr.bf16.gmra.mrb[0].mxu0 %v2836
        %v2938 = vpop.f32.mrb[0].mxu0
        %v2939 = vadd.f32 0.0, %v2938
        %v2940 = vpop.f32.mrb[0].mxu0
        %v2941 = vpop.f32.mrb[0].mxu0
        %v2942 = vadd.f32 0.0, %v2941
        %v2943 = vpop.f32.mrb[0].mxu0
        %2944 = vmatprep.mubr.bf16.mxu0 0
        %2945 = vmatmul.mubr.bf16.gmra.mrb[0].mxu0 %v2837
        %v2946 = vpop.f32.mrb[0].mxu0
        %v2947 = vadd.f32 0.0, %v2946
        %v2948 = vpop.f32.mrb[0].mxu0
        %v2949 = vpop.f32.mrb[0].mxu0
        %v2950 = vadd.f32 0.0, %v2949
        %v2951 = vpop.f32.mrb[0].mxu0
        %2952 = vmatprep.mubr.bf16.mxu0 0
        %2953 = vmatmul.mubr.bf16.gmra.mrb[0].mxu0 %v2838
        %v2954 = vpop.f32.mrb[0].mxu0
        %v2955 = vadd.f32 0.0, %v2954
        %v2956 = vpop.f32.mrb[0].mxu0
        %v2957 = vpop.f32.mrb[0].mxu0
        %v2958 = vadd.f32 0.0, %v2957
        %v2959 = vpop.f32.mrb[0].mxu0
        %2960 = vmatprep.mubr.bf16.mxu0 0
        %2961 = vmatmul.mubr.bf16.gmra.mrb[0].mxu0 %v2839
        %v2962 = vpop.f32.mrb[0].mxu0
        %v2963 = vadd.f32 0.0, %v2962
        %v2964 = vpop.f32.mrb[0].mxu0
        %v2965 = vpop.f32.mrb[0].mxu0
        %v2966 = vadd.f32 0.0, %v2965
        %v2967 = vpop.f32.mrb[0].mxu0
        %2968 = vdwg.mxu0
        %v2969 = vmul.f32 %v2939, 0.125
        %v2970 = vmul.f32 %v2942, 0.125
        %v2971 = vmul.f32 %v2947, 0.125
        %v2972 = vmul.f32 %v2950, 0.125
        %v2973 = vmul.f32 %v2955, 0.125
        %v2974 = vmul.f32 %v2958, 0.125
        %v2975 = vmul.f32 %v2963, 0.125
        %v2976 = vmul.f32 %v2966, 0.125
        %v2977 = vld [vmem:[%s35] sm:$0xf]
        %v2978 = vld [vmem:[%s35 + $0x4] sm:$0xf]
        %v2979 = vld [vmem:[%s35 + $0x8] sm:$0xf]
        %v2980 = vld [vmem:[%s35 + $0xc] sm:$0xf]
        %v2981 = vld [vmem:[%s35 + $0x10] sm:$0xf]
        %v2982 = vld [vmem:[%s35 + $0x14] sm:$0xf]
        %v2983 = vld [vmem:[%s35 + $0x18] sm:$0xf]
        %v2984 = vld [vmem:[%s35 + $0x1c] sm:$0xf]
        %v2985 = vld [vmem:[%s35 + $0x20] sm:$0xf]
        %v2986 = vld [vmem:[%s35 + $0x24] sm:$0xf]
        %v2987 = vld [vmem:[%s35 + $0x28] sm:$0xf]
        %v2988 = vld [vmem:[%s35 + $0x2c] sm:$0xf]
        %v2989 = vld [vmem:[%s35 + $0x30] sm:$0xf]
        %v2990 = vld [vmem:[%s35 + $0x34] sm:$0xf]
        %v2991 = vld [vmem:[%s35 + $0x38] sm:$0xf]
        %v2992 = vld [vmem:[%s35 + $0x3c] sm:$0xf]
        %v3009 = vunpack.c.l.b16 %v2977
        %v3010 = vunpack.c.l.b16 %v2978
        %v3011 = vunpack.c.l.b16 %v2979
        %v3012 = vunpack.c.l.b16 %v2980
        %v3013 = vunpack.c.l.b16 %v2981
        %v3014 = vunpack.c.l.b16 %v2982
        %v3015 = vunpack.c.l.b16 %v2983
        %v3016 = vunpack.c.l.b16 %v2984
        %v3017 = vunpack.c.l.b16 %v2985
        %v3018 = vunpack.c.l.b16 %v2986
        %v3019 = vunpack.c.l.b16 %v2987
        %v3020 = vunpack.c.l.b16 %v2988
        %v3021 = vunpack.c.l.b16 %v2989
        %v3022 = vunpack.c.l.b16 %v2990
        %v3023 = vunpack.c.l.b16 %v2991
        %v3024 = vunpack.c.l.b16 %v2992
        %v3025 = vpack.c.b16 %v3010, %v3009
        %v3026 = vpack.c.b16 %v3012, %v3011
        %v3027 = vpack.c.b16 %v3014, %v3013
        %v3028 = vpack.c.b16 %v3016, %v3015
        %v3029 = vpack.c.b16 %v3018, %v3017
        %v3030 = vpack.c.b16 %v3020, %v3019
        %v3031 = vpack.c.b16 %v3022, %v3021
        %v3032 = vpack.c.b16 %v3024, %v3023
        %3041 = vmatprep.subr.bf16.mxu0 0
        %3042 = vmatpush1.bf16.msra.mxu0 %v3025
        %3043 = vmatprep.subr.bf16.mxu0 0
        %3044 = vmatpush1.bf16.msra.mxu0 %v3026
        %3045 = vmatprep.subr.bf16.mxu0 0
        %3046 = vmatpush1.bf16.msra.mxu0 %v3027
        %3047 = vmatprep.subr.bf16.mxu0 0
        %3048 = vmatpush1.bf16.msra.mxu0 %v3028
        %3049 = vmatprep.subr.bf16.mxu0 0
        %3050 = vmatpush1.bf16.msra.mxu0 %v3029
        %3051 = vmatprep.subr.bf16.mxu0 0
        %3052 = vmatpush1.bf16.msra.mxu0 %v3030
        %3053 = vmatprep.subr.bf16.mxu0 0
        %3054 = vmatpush1.bf16.msra.mxu0 %v3031
        %3055 = vmatprep.subr.bf16.mxu0 0
        %3056 = vmatpush1.bf16.msra.mxu0 %v3032
        %3057 = vmatprep.subr.bf16.mxu0 0
        %3058 = vmatpush1.bf16.msra.mxu0 0
        %3059 = vmatprep.subr.bf16.mxu0 0
        %3060 = vmatpush1.bf16.msra.mxu0 0
        %3061 = vmatprep.subr.bf16.mxu0 0
        %3062 = vmatpush1.bf16.msra.mxu0 0
        %3063 = vmatprep.subr.bf16.mxu0 0
        %3064 = vmatpush1.bf16.msra.mxu0 0
        %3065 = vmatprep.subr.bf16.mxu0 0
        %3066 = vmatpush1.bf16.msra.mxu0 0
        %3067 = vmatprep.subr.bf16.mxu0 0
        %3068 = vmatpush1.bf16.msra.mxu0 0
        %3069 = vmatprep.subr.bf16.mxu0 0
        %3070 = vmatpush1.bf16.msra.mxu0 0
        %3071 = vmatprep.subr.bf16.mxu0 0
        %3072 = vmatpush1.bf16.msra.mxu0 0
        %3073 = vmatprep.mubr.bf16.mxu0 0
        %3074 = vmatmul.mubr.bf16.gmra.mrb[0].mxu0 %v2836
        %v3075 = vpop.f32.mrb[0].mxu0
        %v3076 = vadd.f32 0.0, %v3075
        %v3077 = vpop.f32.mrb[0].mxu0
        %v3078 = vpop.f32.mrb[0].mxu0
        %v3079 = vadd.f32 0.0, %v3078
        %v3080 = vpop.f32.mrb[0].mxu0
        %3081 = vmatprep.mubr.bf16.mxu0 0
        %3082 = vmatmul.mubr.bf16.gmra.mrb[0].mxu0 %v2837
        %v3083 = vpop.f32.mrb[0].mxu0
        %v3084 = vadd.f32 0.0, %v3083
        %v3085 = vpop.f32.mrb[0].mxu0
        %v3086 = vpop.f32.mrb[0].mxu0
        %v3087 = vadd.f32 0.0, %v3086
        %v3088 = vpop.f32.mrb[0].mxu0
        %3089 = vmatprep.mubr.bf16.mxu0 0
        %3090 = vmatmul.mubr.bf16.gmra.mrb[0].mxu0 %v2838
        %v3091 = vpop.f32.mrb[0].mxu0
        %v3092 = vadd.f32 0.0, %v3091
        %v3093 = vpop.f32.mrb[0].mxu0
        %v3094 = vpop.f32.mrb[0].mxu0
        %v3095 = vadd.f32 0.0, %v3094
        %v3096 = vpop.f32.mrb[0].mxu0
        %3097 = vmatprep.mubr.bf16.mxu0 0
        %3098 = vmatmul.mubr.bf16.gmra.mrb[0].mxu0 %v2839
        %v3099 = vpop.f32.mrb[0].mxu0
        %v3100 = vadd.f32 0.0, %v3099
        %v3101 = vpop.f32.mrb[0].mxu0
        %v3102 = vpop.f32.mrb[0].mxu0
        %v3103 = vadd.f32 0.0, %v3102
        %v3104 = vpop.f32.mrb[0].mxu0
        %3105 = vdwg.mxu0
        %v3106 = vld [vmem:[%s37] sm:$0xf]
        %v3107 = vld [vmem:[%s37 + $0x4] sm:$0xf]
        %v3108 = vld [vmem:[%s37 + $0x8] sm:$0xf]
        %v3109 = vld [vmem:[%s37 + $0xc] sm:$0xf]
        %v3110 = vld [vmem:[%s37 + $0x10] sm:$0xf]
        %v3111 = vld [vmem:[%s37 + $0x14] sm:$0xf]
        %v3112 = vld [vmem:[%s37 + $0x18] sm:$0xf]
        %v3113 = vld [vmem:[%s37 + $0x1c] sm:$0xf]
        %v3114 = vld [vmem:[%s37 + $0x20] sm:$0xf]
        %v3115 = vld [vmem:[%s37 + $0x24] sm:$0xf]
        %v3116 = vld [vmem:[%s37 + $0x28] sm:$0xf]
        %v3117 = vld [vmem:[%s37 + $0x2c] sm:$0xf]
        %v3118 = vld [vmem:[%s37 + $0x30] sm:$0xf]
        %v3119 = vld [vmem:[%s37 + $0x34] sm:$0xf]
        %v3120 = vld [vmem:[%s37 + $0x38] sm:$0xf]
        %v3121 = vld [vmem:[%s37 + $0x3c] sm:$0xf]
        %v3138 = vunpack.c.l.b16 %v3106
        %v3139 = vunpack.c.l.b16 %v3107
        %v3140 = vunpack.c.l.b16 %v3108
        %v3141 = vunpack.c.l.b16 %v3109
        %v3142 = vunpack.c.l.b16 %v3110
        %v3143 = vunpack.c.l.b16 %v3111
        %v3144 = vunpack.c.l.b16 %v3112
        %v3145 = vunpack.c.l.b16 %v3113
        %v3146 = vunpack.c.l.b16 %v3114
        %v3147 = vunpack.c.l.b16 %v3115
        %v3148 = vunpack.c.l.b16 %v3116
        %v3149 = vunpack.c.l.b16 %v3117
        %v3150 = vunpack.c.l.b16 %v3118
        %v3151 = vunpack.c.l.b16 %v3119
        %v3152 = vunpack.c.l.b16 %v3120
        %v3153 = vunpack.c.l.b16 %v3121
        %v3154 = vpack.c.b16 %v3139, %v3138
        %v3155 = vpack.c.b16 %v3141, %v3140
        %v3156 = vpack.c.b16 %v3143, %v3142
        %v3157 = vpack.c.b16 %v3145, %v3144
        %v3158 = vpack.c.b16 %v3147, %v3146
        %v3159 = vpack.c.b16 %v3149, %v3148
        %v3160 = vpack.c.b16 %v3151, %v3150
        %v3161 = vpack.c.b16 %v3153, %v3152
        %3170 = vmatprep.subr.bf16.mxu0 0
        %3171 = vmatpush1.bf16.msra.mxu0 %v3154
        %3172 = vmatprep.subr.bf16.mxu0 0
        %3173 = vmatpush1.bf16.msra.mxu0 %v3155
        %3174 = vmatprep.subr.bf16.mxu0 0
        %3175 = vmatpush1.bf16.msra.mxu0 %v3156
        %3176 = vmatprep.subr.bf16.mxu0 0
        %3177 = vmatpush1.bf16.msra.mxu0 %v3157
        %3178 = vmatprep.subr.bf16.mxu0 0
        %3179 = vmatpush1.bf16.msra.mxu0 %v3158
        %3180 = vmatprep.subr.bf16.mxu0 0
        %3181 = vmatpush1.bf16.msra.mxu0 %v3159
        %3182 = vmatprep.subr.bf16.mxu0 0
        %3183 = vmatpush1.bf16.msra.mxu0 %v3160
        %3184 = vmatprep.subr.bf16.mxu0 0
        %3185 = vmatpush1.bf16.msra.mxu0 %v3161
        %3186 = vmatprep.subr.bf16.mxu0 0
        %3187 = vmatpush1.bf16.msra.mxu0 0
        %3188 = vmatprep.subr.bf16.mxu0 0
        %3189 = vmatpush1.bf16.msra.mxu0 0
        %3190 = vmatprep.subr.bf16.mxu0 0
        %3191 = vmatpush1.bf16.msra.mxu0 0
        %3192 = vmatprep.subr.bf16.mxu0 0
        %3193 = vmatpush1.bf16.msra.mxu0 0
        %3194 = vmatprep.subr.bf16.mxu0 0
        %3195 = vmatpush1.bf16.msra.mxu0 0
        %3196 = vmatprep.subr.bf16.mxu0 0
        %3197 = vmatpush1.bf16.msra.mxu0 0
        %3198 = vmatprep.subr.bf16.mxu0 0
        %3199 = vmatpush1.bf16.msra.mxu0 0
        %3200 = vmatprep.subr.bf16.mxu0 0
        %3201 = vmatpush1.bf16.msra.mxu0 0
        %3202 = vmatprep.mubr.bf16.mxu0 0
        %3203 = vmatmul.mubr.bf16.gmra.mrb[0].mxu0 %v2836
        %v3204 = vpop.f32.mrb[0].mxu0
        %v3205 = vadd.f32 0.0, %v3204
        %v3206 = vpop.f32.mrb[0].mxu0
        %v3207 = vpop.f32.mrb[0].mxu0
        %v3208 = vadd.f32 0.0, %v3207
        %v3209 = vpop.f32.mrb[0].mxu0
        %3210 = vmatprep.mubr.bf16.mxu0 0
        %3211 = vmatmul.mubr.bf16.gmra.mrb[0].mxu0 %v2837
        %v3212 = vpop.f32.mrb[0].mxu0
        %v3213 = vadd.f32 0.0, %v3212
        %v3214 = vpop.f32.mrb[0].mxu0
        %v3215 = vpop.f32.mrb[0].mxu0
        %v3216 = vadd.f32 0.0, %v3215
        %v3217 = vpop.f32.mrb[0].mxu0
        %3218 = vmatprep.mubr.bf16.mxu0 0
        %3219 = vmatmul.mubr.bf16.gmra.mrb[0].mxu0 %v2838
        %v3220 = vpop.f32.mrb[0].mxu0
        %v3221 = vadd.f32 0.0, %v3220
        %v3222 = vpop.f32.mrb[0].mxu0
        %v3223 = vpop.f32.mrb[0].mxu0
        %v3224 = vadd.f32 0.0, %v3223
        %v3225 = vpop.f32.mrb[0].mxu0
        %3226 = vmatprep.mubr.bf16.mxu0 0
        %3227 = vmatmul.mubr.bf16.gmra.mrb[0].mxu0 %v2839
        %v3228 = vpop.f32.mrb[0].mxu0
        %v3229 = vadd.f32 0.0, %v3228
        %v3230 = vpop.f32.mrb[0].mxu0
        %v3231 = vpop.f32.mrb[0].mxu0
        %v3232 = vadd.f32 0.0, %v3231
        %v3233 = vpop.f32.mrb[0].mxu0
        %3234 = vdwg.mxu0
        %v3235 = vpack.c.bf16 %v2970, %v2969
        %v3236 = vpack.c.bf16 %v2972, %v2971
        %v3237 = vpack.c.bf16 %v2974, %v2973
        %v3238 = vpack.c.bf16 %v2976, %v2975
        %v3239 = vpack.c.bf16 %v3079, %v3076
        %v3240 = vpack.c.bf16 %v3087, %v3084
        %v3241 = vpack.c.bf16 %v3095, %v3092
        %v3242 = vpack.c.bf16 %v3103, %v3100
        %v3244 = vsel %vm1976, %v3235, 0
        %v3247 = vsel %vm1976, %v3236, 0
        %v3250 = vsel %vm1976, %v3237, 0
        %v3253 = vsel %vm1976, %v3238, 0
        %v3256 = vsel %vm1976, %v3239, 0
        %v3259 = vsel %vm1976, %v3240, 0
        %v3262 = vsel %vm1976, %v3241, 0
        %v3265 = vsel %vm1976, %v3242, 0
        %3267 = vmatprep.subr.bf16.mxu0 0
        %3268 = vmatpush1.bf16.xpose.msra.mxu0 %v3256
        %3269 = vmatprep.subr.bf16.mxu0 0
        %3270 = vmatpush1.bf16.xpose.msra.mxu0 %v3259
        %3271 = vmatprep.subr.bf16.mxu0 0
        %3272 = vmatpush1.bf16.xpose.msra.mxu0 %v3262
        %3273 = vmatprep.subr.bf16.mxu0 0
        %3274 = vmatpush1.bf16.xpose.msra.mxu0 %v3265
        %3275 = vmatprep.subr.bf16.mxu0 0
        %3276 = vmatpush1.bf16.xpose.msra.mxu0 0
        %3277 = vmatprep.subr.bf16.mxu0 0
        %3278 = vmatpush1.bf16.xpose.msra.mxu0 0
        %3279 = vmatprep.subr.bf16.mxu0 0
        %3280 = vmatpush1.bf16.xpose.msra.mxu0 0
        %3281 = vmatprep.subr.bf16.mxu0 0
        %3282 = vmatpush1.bf16.xpose.msra.mxu0 0
        %3283 = vmatprep.subr.bf16.mxu0 0
        %3284 = vmatpush1.bf16.xpose.msra.mxu0 0
        %3285 = vmatprep.subr.bf16.mxu0 0
        %3286 = vmatpush1.bf16.xpose.msra.mxu0 0
        %3287 = vmatprep.subr.bf16.mxu0 0
        %3288 = vmatpush1.bf16.xpose.msra.mxu0 0
        %3289 = vmatprep.subr.bf16.mxu0 0
        %3290 = vmatpush1.bf16.xpose.msra.mxu0 0
        %3291 = vmatprep.subr.bf16.mxu0 0
        %3292 = vmatpush1.bf16.xpose.msra.mxu0 0
        %3293 = vmatprep.subr.bf16.mxu0 0
        %3294 = vmatpush1.bf16.xpose.msra.mxu0 0
        %3295 = vmatprep.subr.bf16.mxu0 0
        %3296 = vmatpush1.bf16.xpose.msra.mxu0 0
        %3297 = vmatprep.subr.bf16.mxu0 0
        %3298 = vmatpush1.bf16.xpose.msra.mxu0 0
        %3299 = vmatprep.mubr.bf16.mxu0 0
        %3300 = vmatmul.mubr.bf16.gmra.mrb[0].mxu0 %v3244
        %v3301 = vpop.f32.mrb[0].mxu0
        %v3302 = vadd.f32 0.0, %v3301
        %v3303 = vpop.f32.mrb[0].mxu0
        %v3304 = vpop.f32.mrb[0].mxu0
        %v3305 = vadd.f32 0.0, %v3304
        %v3306 = vpop.f32.mrb[0].mxu0
        %3307 = vmatprep.mubr.bf16.mxu0 0
        %3308 = vmatmul.mubr.bf16.gmra.mrb[0].mxu0 %v3247
        %v3309 = vpop.f32.mrb[0].mxu0
        %v3310 = vadd.f32 0.0, %v3309
        %v3311 = vpop.f32.mrb[0].mxu0
        %v3312 = vpop.f32.mrb[0].mxu0
        %v3313 = vadd.f32 0.0, %v3312
        %v3314 = vpop.f32.mrb[0].mxu0
        %3315 = vmatprep.mubr.bf16.mxu0 0
        %3316 = vmatmul.mubr.bf16.gmra.mrb[0].mxu0 %v3250
        %v3317 = vpop.f32.mrb[0].mxu0
        %v3318 = vadd.f32 0.0, %v3317
        %v3319 = vpop.f32.mrb[0].mxu0
        %v3320 = vpop.f32.mrb[0].mxu0
        %v3321 = vadd.f32 0.0, %v3320
        %v3322 = vpop.f32.mrb[0].mxu0
        %3323 = vmatprep.mubr.bf16.mxu0 0
        %3324 = vmatmul.mubr.bf16.gmra.mrb[0].mxu0 %v3253
        %v3325 = vpop.f32.mrb[0].mxu0
        %v3326 = vadd.f32 0.0, %v3325
        %v3327 = vpop.f32.mrb[0].mxu0
        %v3328 = vpop.f32.mrb[0].mxu0
        %v3329 = vadd.f32 0.0, %v3328
        %v3330 = vpop.f32.mrb[0].mxu0
        %3331 = vdwg.mxu0
        %v3332 = vsel %vm1976, %v3302, -inf
        %3333 = vmax.xlane.f32.xlu0 %v3332
        %v3334 = vpop.xlane.xlu0 %3333
        %v3335 = vsel %vm1976, %v3305, -inf
        %3336 = vmax.xlane.f32.xlu0 %v3335
        %v3337 = vpop.xlane.xlu0 %3336
        %v3338 = vsel %vm1976, %v3310, -inf
        %3339 = vmax.xlane.f32.xlu0 %v3338
        %v3340 = vpop.xlane.xlu0 %3339
        %v3341 = vsel %vm1976, %v3313, -inf
        %3342 = vmax.xlane.f32.xlu0 %v3341
        %v3343 = vpop.xlane.xlu0 %3342
        %v3344 = vsel %vm1976, %v3318, -inf
        %3345 = vmax.xlane.f32.xlu0 %v3344
        %v3346 = vpop.xlane.xlu0 %3345
        %v3347 = vsel %vm1976, %v3321, -inf
        %3348 = vmax.xlane.f32.xlu0 %v3347
        %v3349 = vpop.xlane.xlu0 %3348
        %v3350 = vsel %vm1976, %v3326, -inf
        %3351 = vmax.xlane.f32.xlu0 %v3350
        %v3352 = vpop.xlane.xlu0 %3351
        %v3353 = vsel %vm1976, %v3329, -inf
        %3354 = vmax.xlane.f32.xlu0 %v3353
        %v3355 = vpop.xlane.xlu0 %3354
        %v3356 = vsub.f32 %v3302, %v3334
        %v3357 = vsub.f32 %v3305, %v3337
        %v3358 = vsub.f32 %v3310, %v3340
        %v3359 = vsub.f32 %v3313, %v3343
        %v3360 = vsub.f32 %v3318, %v3346
        %v3361 = vsub.f32 %v3321, %v3349
        %v3362 = vsub.f32 %v3326, %v3352
        %v3363 = vsub.f32 %v3329, %v3355
        %v3364 = vmul.f32 %v3356, 1.442695
        %v3365 = vpow.pop %v3364
        %v3366 = vmul.f32 %v3357, 1.442695
        %v3367 = vpow.pop %v3366
        %v3368 = vmul.f32 %v3358, 1.442695
        %v3369 = vpow.pop %v3368
        %v3370 = vmul.f32 %v3359, 1.442695
        %v3371 = vpow.pop %v3370
        %v3372 = vmul.f32 %v3360, 1.442695
        %v3373 = vpow.pop %v3372
        %v3374 = vmul.f32 %v3361, 1.442695
        %v3375 = vpow.pop %v3374
        %v3376 = vmul.f32 %v3362, 1.442695
        %v3377 = vpow.pop %v3376
        %v3378 = vmul.f32 %v3363, 1.442695
        %v3379 = vpow.pop %v3378
        %v3380 = vsel %vm1976, %v3365, 0.0
        %3381 = vadd.xlane.f32.xlu0 %v3380
        %v3382 = vpop.xlane.xlu0 %3381
        %v3383 = vsel %vm1976, %v3367, 0.0
        %3384 = vadd.xlane.f32.xlu0 %v3383
        %v3385 = vpop.xlane.xlu0 %3384
        %v3386 = vsel %vm1976, %v3369, 0.0
        %3387 = vadd.xlane.f32.xlu0 %v3386
        %v3388 = vpop.xlane.xlu0 %3387
        %v3389 = vsel %vm1976, %v3371, 0.0
        %3390 = vadd.xlane.f32.xlu0 %v3389
        %v3391 = vpop.xlane.xlu0 %3390
        %v3392 = vsel %vm1976, %v3373, 0.0
        %3393 = vadd.xlane.f32.xlu0 %v3392
        %v3394 = vpop.xlane.xlu0 %3393
        %v3395 = vsel %vm1976, %v3375, 0.0
        %3396 = vadd.xlane.f32.xlu0 %v3395
        %v3397 = vpop.xlane.xlu0 %3396
        %v3398 = vsel %vm1976, %v3377, 0.0
        %3399 = vadd.xlane.f32.xlu0 %v3398
        %v3400 = vpop.xlane.xlu0 %3399
        %v3401 = vsel %vm1976, %v3379, 0.0
        %3402 = vadd.xlane.f32.xlu0 %v3401
        %v3403 = vpop.xlane.xlu0 %3402
        %v3404 = vrcp.pop %v3382
        %v3405 = vrcp.pop %v3385
        %v3406 = vrcp.pop %v3388
        %v3407 = vrcp.pop %v3391
        %v3408 = vrcp.pop %v3394
        %v3409 = vrcp.pop %v3397
        %v3410 = vrcp.pop %v3400
        %v3411 = vrcp.pop %v3403
        %v3412 = vmul.f32 %v3365, %v3404
        %v3413 = vmul.f32 %v3367, %v3405
        %v3414 = vmul.f32 %v3369, %v3406
        %v3415 = vmul.f32 %v3371, %v3407
        %v3416 = vmul.f32 %v3373, %v3408
        %v3417 = vmul.f32 %v3375, %v3409
        %v3418 = vmul.f32 %v3377, %v3410
        %v3419 = vmul.f32 %v3379, %v3411
        %v3420 = vpack.c.bf16 %v3413, %v3412
        %v3421 = vpack.c.bf16 %v3415, %v3414
        %v3422 = vpack.c.bf16 %v3417, %v3416
        %v3423 = vpack.c.bf16 %v3419, %v3418
        %v3424 = vpack.c.bf16 %v3208, %v3205
        %v3425 = vpack.c.bf16 %v3216, %v3213
        %v3426 = vpack.c.bf16 %v3224, %v3221
        %v3427 = vpack.c.bf16 %v3232, %v3229
        %v3429 = vsel %vm1976, %v3420, 0
        %v3432 = vsel %vm1976, %v3421, 0
        %v3435 = vsel %vm1976, %v3422, 0
        %v3438 = vsel %vm1976, %v3423, 0
        %3440 = vmatprep.subr.bf16.mxu0 0
        %3441 = vmatpush1.bf16.msra.mxu0 %v3424
        %3442 = vmatprep.subr.bf16.mxu0 0
        %3443 = vmatpush1.bf16.msra.mxu0 %v3425
        %3444 = vmatprep.subr.bf16.mxu0 0
        %3445 = vmatpush1.bf16.msra.mxu0 %v3426
        %3446 = vmatprep.subr.bf16.mxu0 0
        %3447 = vmatpush1.bf16.msra.mxu0 %v3427
        %3448 = vmatprep.subr.bf16.mxu0 0
        %3449 = vmatpush1.bf16.msra.mxu0 0
        %3450 = vmatprep.subr.bf16.mxu0 0
        %3451 = vmatpush1.bf16.msra.mxu0 0
        %3452 = vmatprep.subr.bf16.mxu0 0
        %3453 = vmatpush1.bf16.msra.mxu0 0
        %3454 = vmatprep.subr.bf16.mxu0 0
        %3455 = vmatpush1.bf16.msra.mxu0 0
        %3456 = vmatprep.subr.bf16.mxu0 0
        %3457 = vmatpush1.bf16.msra.mxu0 0
        %3458 = vmatprep.subr.bf16.mxu0 0
        %3459 = vmatpush1.bf16.msra.mxu0 0
        %3460 = vmatprep.subr.bf16.mxu0 0
        %3461 = vmatpush1.bf16.msra.mxu0 0
        %3462 = vmatprep.subr.bf16.mxu0 0
        %3463 = vmatpush1.bf16.msra.mxu0 0
        %3464 = vmatprep.subr.bf16.mxu0 0
        %3465 = vmatpush1.bf16.msra.mxu0 0
        %3466 = vmatprep.subr.bf16.mxu0 0
        %3467 = vmatpush1.bf16.msra.mxu0 0
        %3468 = vmatprep.subr.bf16.mxu0 0
        %3469 = vmatpush1.bf16.msra.mxu0 0
        %3470 = vmatprep.subr.bf16.mxu0 0
        %3471 = vmatpush1.bf16.msra.mxu0 0
        %3472 = vmatprep.mubr.bf16.mxu0 0
        %3473 = vmatmul.mubr.bf16.gmra.mrb[0].mxu0 %v3429
        %v3474 = vpop.f32.mrb[0].mxu0
        %v3475 = vadd.f32 0.0, %v3474
        %v3476 = vpop.f32.mrb[0].mxu0
        %v3477 = vpop.f32.mrb[0].mxu0
        %v3478 = vadd.f32 0.0, %v3477
        %v3479 = vpop.f32.mrb[0].mxu0
        %3480 = vmatprep.mubr.bf16.mxu0 0
        %3481 = vmatmul.mubr.bf16.gmra.mrb[0].mxu0 %v3432
        %v3482 = vpop.f32.mrb[0].mxu0
        %v3483 = vadd.f32 0.0, %v3482
        %v3484 = vpop.f32.mrb[0].mxu0
        %v3485 = vpop.f32.mrb[0].mxu0
        %v3486 = vadd.f32 0.0, %v3485
        %v3487 = vpop.f32.mrb[0].mxu0
        %3488 = vmatprep.mubr.bf16.mxu0 0
        %3489 = vmatmul.mubr.bf16.gmra.mrb[0].mxu0 %v3435
        %v3490 = vpop.f32.mrb[0].mxu0
        %v3491 = vadd.f32 0.0, %v3490
        %v3492 = vpop.f32.mrb[0].mxu0
        %v3493 = vpop.f32.mrb[0].mxu0
        %v3494 = vadd.f32 0.0, %v3493
        %v3495 = vpop.f32.mrb[0].mxu0
        %3496 = vmatprep.mubr.bf16.mxu0 0
        %3497 = vmatmul.mubr.bf16.gmra.mrb[0].mxu0 %v3438
        %v3498 = vpop.f32.mrb[0].mxu0
        %v3499 = vadd.f32 0.0, %v3498
        %v3500 = vpop.f32.mrb[0].mxu0
        %v3501 = vpop.f32.mrb[0].mxu0
        %v3502 = vadd.f32 0.0, %v3501
        %v3503 = vpop.f32.mrb[0].mxu0
        %3504 = vdwg.mxu0
        %v3505 = vpack.c.bf16 %v3478, %v3475
        %v3506 = vpack.c.bf16 %v3486, %v3483
        %v3507 = vpack.c.bf16 %v3494, %v3491
        %v3508 = vpack.c.bf16 %v3502, %v3499
        %3509 = vst.msk [vmem:[#allocation2] sm:$0xff] %vm1976, %v3505
        %3510 = vst.msk [vmem:[#allocation2 + $0x8] sm:$0xff] %vm1976, %v3506
        %3511 = vst.msk [vmem:[#allocation2 + $0x10] sm:$0xff] %vm1976, %v3507
        %3512 = vst.msk [vmem:[#allocation2 + $0x18] sm:$0xff] %vm1976, %v3508
        %3517 = vrot.lane.b32.xlu0 %v3235, 64
        %v3518 = vpop.permute.xlu0 %3517
        %3519 = vrot.lane.b32.xlu0 %v3236, 64
        %v3520 = vpop.permute.xlu0 %3519
        %3521 = vrot.lane.b32.xlu0 %v3237, 64
        %v3522 = vpop.permute.xlu0 %3521
        %3523 = vrot.lane.b32.xlu0 %v3238, 64
        %v3524 = vpop.permute.xlu0 %3523
        %3529 = vrot.lane.b32.xlu0 %v3239, 64
        %v3530 = vpop.permute.xlu0 %3529
        %3531 = vrot.lane.b32.xlu0 %v3240, 64
        %v3532 = vpop.permute.xlu0 %3531
        %3533 = vrot.lane.b32.xlu0 %v3241, 64
        %v3534 = vpop.permute.xlu0 %3533
        %3535 = vrot.lane.b32.xlu0 %v3242, 64
        %v3536 = vpop.permute.xlu0 %3535
        %v3538 = vsel %vm1976, %v3518, 0
        %v3541 = vsel %vm1976, %v3520, 0
        %v3544 = vsel %vm1976, %v3522, 0
        %v3547 = vsel %vm1976, %v3524, 0
        %v3550 = vsel %vm1976, %v3530, 0
        %v3553 = vsel %vm1976, %v3532, 0
        %v3556 = vsel %vm1976, %v3534, 0
        %v3559 = vsel %vm1976, %v3536, 0
        %3561 = vmatprep.subr.bf16.mxu0 0
        %3562 = vmatpush1.bf16.xpose.msra.mxu0 %v3550
        %3563 = vmatprep.subr.bf16.mxu0 0
        %3564 = vmatpush1.bf16.xpose.msra.mxu0 %v3553
        %3565 = vmatprep.subr.bf16.mxu0 0
        %3566 = vmatpush1.bf16.xpose.msra.mxu0 %v3556
        %3567 = vmatprep.subr.bf16.mxu0 0
        %3568 = vmatpush1.bf16.xpose.msra.mxu0 %v3559
        %3569 = vmatprep.subr.bf16.mxu0 0
        %3570 = vmatpush1.bf16.xpose.msra.mxu0 0
        %3571 = vmatprep.subr.bf16.mxu0 0
        %3572 = vmatpush1.bf16.xpose.msra.mxu0 0
        %3573 = vmatprep.subr.bf16.mxu0 0
        %3574 = vmatpush1.bf16.xpose.msra.mxu0 0
        %3575 = vmatprep.subr.bf16.mxu0 0
        %3576 = vmatpush1.bf16.xpose.msra.mxu0 0
        %3577 = vmatprep.subr.bf16.mxu0 0
        %3578 = vmatpush1.bf16.xpose.msra.mxu0 0
        %3579 = vmatprep.subr.bf16.mxu0 0
        %3580 = vmatpush1.bf16.xpose.msra.mxu0 0
        %3581 = vmatprep.subr.bf16.mxu0 0
        %3582 = vmatpush1.bf16.xpose.msra.mxu0 0
        %3583 = vmatprep.subr.bf16.mxu0 0
        %3584 = vmatpush1.bf16.xpose.msra.mxu0 0
        %3585 = vmatprep.subr.bf16.mxu0 0
        %3586 = vmatpush1.bf16.xpose.msra.mxu0 0
        %3587 = vmatprep.subr.bf16.mxu0 0
        %3588 = vmatpush1.bf16.xpose.msra.mxu0 0
        %3589 = vmatprep.subr.bf16.mxu0 0
        %3590 = vmatpush1.bf16.xpose.msra.mxu0 0
        %3591 = vmatprep.subr.bf16.mxu0 0
        %3592 = vmatpush1.bf16.xpose.msra.mxu0 0
        %3593 = vmatprep.mubr.bf16.mxu0 0
        %3594 = vmatmul.mubr.bf16.gmra.mrb[0].mxu0 %v3538
        %v3595 = vpop.f32.mrb[0].mxu0
        %v3596 = vadd.f32 0.0, %v3595
        %v3597 = vpop.f32.mrb[0].mxu0
        %v3598 = vpop.f32.mrb[0].mxu0
        %v3599 = vadd.f32 0.0, %v3598
        %v3600 = vpop.f32.mrb[0].mxu0
        %3601 = vmatprep.mubr.bf16.mxu0 0
        %3602 = vmatmul.mubr.bf16.gmra.mrb[0].mxu0 %v3541
        %v3603 = vpop.f32.mrb[0].mxu0
        %v3604 = vadd.f32 0.0, %v3603
        %v3605 = vpop.f32.mrb[0].mxu0
        %v3606 = vpop.f32.mrb[0].mxu0
        %v3607 = vadd.f32 0.0, %v3606
        %v3608 = vpop.f32.mrb[0].mxu0
        %3609 = vmatprep.mubr.bf16.mxu0 0
        %3610 = vmatmul.mubr.bf16.gmra.mrb[0].mxu0 %v3544
        %v3611 = vpop.f32.mrb[0].mxu0
        %v3612 = vadd.f32 0.0, %v3611
        %v3613 = vpop.f32.mrb[0].mxu0
        %v3614 = vpop.f32.mrb[0].mxu0
        %v3615 = vadd.f32 0.0, %v3614
        %v3616 = vpop.f32.mrb[0].mxu0
        %3617 = vmatprep.mubr.bf16.mxu0 0
        %3618 = vmatmul.mubr.bf16.gmra.mrb[0].mxu0 %v3547
        %v3619 = vpop.f32.mrb[0].mxu0
        %v3620 = vadd.f32 0.0, %v3619
        %v3621 = vpop.f32.mrb[0].mxu0
        %v3622 = vpop.f32.mrb[0].mxu0
        %v3623 = vadd.f32 0.0, %v3622
        %v3624 = vpop.f32.mrb[0].mxu0
        %3625 = vdwg.mxu0
        %v3626 = vsel %vm1976, %v3596, -inf
        %3627 = vmax.xlane.f32.xlu0 %v3626
        %v3628 = vpop.xlane.xlu0 %3627
        %v3629 = vsel %vm1976, %v3599, -inf
        %3630 = vmax.xlane.f32.xlu0 %v3629
        %v3631 = vpop.xlane.xlu0 %3630
        %v3632 = vsel %vm1976, %v3604, -inf
        %3633 = vmax.xlane.f32.xlu0 %v3632
        %v3634 = vpop.xlane.xlu0 %3633
        %v3635 = vsel %vm1976, %v3607, -inf
        %3636 = vmax.xlane.f32.xlu0 %v3635
        %v3637 = vpop.xlane.xlu0 %3636
        %v3638 = vsel %vm1976, %v3612, -inf
        %3639 = vmax.xlane.f32.xlu0 %v3638
        %v3640 = vpop.xlane.xlu0 %3639
        %v3641 = vsel %vm1976, %v3615, -inf
        %3642 = vmax.xlane.f32.xlu0 %v3641
        %v3643 = vpop.xlane.xlu0 %3642
        %v3644 = vsel %vm1976, %v3620, -inf
        %3645 = vmax.xlane.f32.xlu0 %v3644
        %v3646 = vpop.xlane.xlu0 %3645
        %v3647 = vsel %vm1976, %v3623, -inf
        %3648 = vmax.xlane.f32.xlu0 %v3647
        %v3649 = vpop.xlane.xlu0 %3648
        %v3650 = vsub.f32 %v3596, %v3628
        %v3651 = vsub.f32 %v3599, %v3631
        %v3652 = vsub.f32 %v3604, %v3634
        %v3653 = vsub.f32 %v3607, %v3637
        %v3654 = vsub.f32 %v3612, %v3640
        %v3655 = vsub.f32 %v3615, %v3643
        %v3656 = vsub.f32 %v3620, %v3646
        %v3657 = vsub.f32 %v3623, %v3649
        %v3658 = vmul.f32 %v3650, 1.442695
        %v3659 = vpow.pop %v3658
        %v3660 = vmul.f32 %v3651, 1.442695
        %v3661 = vpow.pop %v3660
        %v3662 = vmul.f32 %v3652, 1.442695
        %v3663 = vpow.pop %v3662
        %v3664 = vmul.f32 %v3653, 1.442695
        %v3665 = vpow.pop %v3664
        %v3666 = vmul.f32 %v3654, 1.442695
        %v3667 = vpow.pop %v3666
        %v3668 = vmul.f32 %v3655, 1.442695
        %v3669 = vpow.pop %v3668
        %v3670 = vmul.f32 %v3656, 1.442695
        %v3671 = vpow.pop %v3670
        %v3672 = vmul.f32 %v3657, 1.442695
        %v3673 = vpow.pop %v3672
        %v3674 = vsel %vm1976, %v3659, 0.0
        %3675 = vadd.xlane.f32.xlu0 %v3674
        %v3676 = vpop.xlane.xlu0 %3675
        %v3677 = vsel %vm1976, %v3661, 0.0
        %3678 = vadd.xlane.f32.xlu0 %v3677
        %v3679 = vpop.xlane.xlu0 %3678
        %v3680 = vsel %vm1976, %v3663, 0.0
        %3681 = vadd.xlane.f32.xlu0 %v3680
        %v3682 = vpop.xlane.xlu0 %3681
        %v3683 = vsel %vm1976, %v3665, 0.0
        %3684 = vadd.xlane.f32.xlu0 %v3683
        %v3685 = vpop.xlane.xlu0 %3684
        %v3686 = vsel %vm1976, %v3667, 0.0
        %3687 = vadd.xlane.f32.xlu0 %v3686
        %v3688 = vpop.xlane.xlu0 %3687
        %v3689 = vsel %vm1976, %v3669, 0.0
        %3690 = vadd.xlane.f32.xlu0 %v3689
        %v3691 = vpop.xlane.xlu0 %3690
        %v3692 = vsel %vm1976, %v3671, 0.0
        %3693 = vadd.xlane.f32.xlu0 %v3692
        %v3694 = vpop.xlane.xlu0 %3693
        %v3695 = vsel %vm1976, %v3673, 0.0
        %3696 = vadd.xlane.f32.xlu0 %v3695
        %v3697 = vpop.xlane.xlu0 %3696
        %v3698 = vrcp.pop %v3676
        %v3699 = vrcp.pop %v3679
        %v3700 = vrcp.pop %v3682
        %v3701 = vrcp.pop %v3685
        %v3702 = vrcp.pop %v3688
        %v3703 = vrcp.pop %v3691
        %v3704 = vrcp.pop %v3694
        %v3705 = vrcp.pop %v3697
        %v3706 = vmul.f32 %v3659, %v3698
        %v3707 = vmul.f32 %v3661, %v3699
        %v3708 = vmul.f32 %v3663, %v3700
        %v3709 = vmul.f32 %v3665, %v3701
        %v3710 = vmul.f32 %v3667, %v3702
        %v3711 = vmul.f32 %v3669, %v3703
        %v3712 = vmul.f32 %v3671, %v3704
        %v3713 = vmul.f32 %v3673, %v3705
        %v3714 = vpack.c.bf16 %v3707, %v3706
        %v3715 = vpack.c.bf16 %v3709, %v3708
        %v3716 = vpack.c.bf16 %v3711, %v3710
        %v3717 = vpack.c.bf16 %v3713, %v3712
        %3722 = vrot.lane.b32.xlu0 %v3424, 64
        %v3723 = vpop.permute.xlu0 %3722
        %3724 = vrot.lane.b32.xlu0 %v3425, 64
        %v3725 = vpop.permute.xlu0 %3724
        %3726 = vrot.lane.b32.xlu0 %v3426, 64
        %v3727 = vpop.permute.xlu0 %3726
        %3728 = vrot.lane.b32.xlu0 %v3427, 64
        %v3729 = vpop.permute.xlu0 %3728
        %v3735 = vsel %vm1976, %v3714, 0
        %v3738 = vsel %vm1976, %v3715, 0
        %v3741 = vsel %vm1976, %v3716, 0
        %v3744 = vsel %vm1976, %v3717, 0
        %3746 = vmatprep.subr.bf16.mxu0 0
        %3747 = vmatpush1.bf16.msra.mxu0 %v3723
        %3748 = vmatprep.subr.bf16.mxu0 0
        %3749 = vmatpush1.bf16.msra.mxu0 %v3725
        %3750 = vmatprep.subr.bf16.mxu0 0
        %3751 = vmatpush1.bf16.msra.mxu0 %v3727
        %3752 = vmatprep.subr.bf16.mxu0 0
        %3753 = vmatpush1.bf16.msra.mxu0 %v3729
        %3754 = vmatprep.subr.bf16.mxu0 0
        %3755 = vmatpush1.bf16.msra.mxu0 0
        %3756 = vmatprep.subr.bf16.mxu0 0
        %3757 = vmatpush1.bf16.msra.mxu0 0
        %3758 = vmatprep.subr.bf16.mxu0 0
        %3759 = vmatpush1.bf16.msra.mxu0 0
        %3760 = vmatprep.subr.bf16.mxu0 0
        %3761 = vmatpush1.bf16.msra.mxu0 0
        %3762 = vmatprep.subr.bf16.mxu0 0
        %3763 = vmatpush1.bf16.msra.mxu0 0
        %3764 = vmatprep.subr.bf16.mxu0 0
        %3765 = vmatpush1.bf16.msra.mxu0 0
        %3766 = vmatprep.subr.bf16.mxu0 0
        %3767 = vmatpush1.bf16.msra.mxu0 0
        %3768 = vmatprep.subr.bf16.mxu0 0
        %3769 = vmatpush1.bf16.msra.mxu0 0
        %3770 = vmatprep.subr.bf16.mxu0 0
        %3771 = vmatpush1.bf16.msra.mxu0 0
        %3772 = vmatprep.subr.bf16.mxu0 0
        %3773 = vmatpush1.bf16.msra.mxu0 0
        %3774 = vmatprep.subr.bf16.mxu0 0
        %3775 = vmatpush1.bf16.msra.mxu0 0
        %3776 = vmatprep.subr.bf16.mxu0 0
        %3777 = vmatpush1.bf16.msra.mxu0 0
        %3778 = vmatprep.mubr.bf16.mxu0 0
        %3779 = vmatmul.mubr.bf16.gmra.mrb[0].mxu0 %v3735
        %v3780 = vpop.f32.mrb[0].mxu0
        %v3781 = vadd.f32 0.0, %v3780
        %v3782 = vpop.f32.mrb[0].mxu0
        %v3783 = vpop.f32.mrb[0].mxu0
        %v3784 = vadd.f32 0.0, %v3783
        %v3785 = vpop.f32.mrb[0].mxu0
        %3786 = vmatprep.mubr.bf16.mxu0 0
        %3787 = vmatmul.mubr.bf16.gmra.mrb[0].mxu0 %v3738
        %v3788 = vpop.f32.mrb[0].mxu0
        %v3789 = vadd.f32 0.0, %v3788
        %v3790 = vpop.f32.mrb[0].mxu0
        %v3791 = vpop.f32.mrb[0].mxu0
        %v3792 = vadd.f32 0.0, %v3791
        %v3793 = vpop.f32.mrb[0].mxu0
        %3794 = vmatprep.mubr.bf16.mxu0 0
        %3795 = vmatmul.mubr.bf16.gmra.mrb[0].mxu0 %v3741
        %v3796 = vpop.f32.mrb[0].mxu0
        %v3797 = vadd.f32 0.0, %v3796
        %v3798 = vpop.f32.mrb[0].mxu0
        %v3799 = vpop.f32.mrb[0].mxu0
        %v3800 = vadd.f32 0.0, %v3799
        %v3801 = vpop.f32.mrb[0].mxu0
        %3802 = vmatprep.mubr.bf16.mxu0 0
        %3803 = vmatmul.mubr.bf16.gmra.mrb[0].mxu0 %v3744
        %v3804 = vpop.f32.mrb[0].mxu0
        %v3805 = vadd.f32 0.0, %v3804
        %v3806 = vpop.f32.mrb[0].mxu0
        %v3807 = vpop.f32.mrb[0].mxu0
        %v3808 = vadd.f32 0.0, %v3807
        %v3809 = vpop.f32.mrb[0].mxu0
        %3810 = vdwg.mxu0
        %v3811 = vpack.c.bf16 %v3784, %v3781
        %v3812 = vpack.c.bf16 %v3792, %v3789
        %v3813 = vpack.c.bf16 %v3800, %v3797
        %v3814 = vpack.c.bf16 %v3808, %v3805
        %3819 = vrot.lane.b32.xlu0 %v3811, 64
        %v3820 = vpop.permute.xlu0 %3819
        %3821 = vrot.lane.b32.xlu0 %v3812, 64
        %v3822 = vpop.permute.xlu0 %3821
        %3823 = vrot.lane.b32.xlu0 %v3813, 64
        %v3824 = vpop.permute.xlu0 %3823
        %3825 = vrot.lane.b32.xlu0 %v3814, 64
        %v3826 = vpop.permute.xlu0 %3825
        %3831 = vst.msk [vmem:[#allocation2] sm:$0xff] %vm2565, %v3820
        %3832 = vst.msk [vmem:[#allocation2 + $0x8] sm:$0xff] %vm2565, %v3822
        %3833 = vst.msk [vmem:[#allocation2 + $0x10] sm:$0xff] %vm2565, %v3824
        %3834 = vst.msk [vmem:[#allocation2 + $0x18] sm:$0xff] %vm2565, %v3826
        %v3835 = vld [vmem:[#allocation2] sm:$0xff]
        %v3836 = vld [vmem:[#allocation2 + $0x8] sm:$0xff]
        %v3837 = vld [vmem:[#allocation2 + $0x10] sm:$0xff]
        %v3838 = vld [vmem:[#allocation2 + $0x18] sm:$0xff]
        %v3839 = vld [vmem:[%s39] sm:$0xf]
        %v3840 = vld [vmem:[%s39 + $0x4] sm:$0xf]
        %v3841 = vld [vmem:[%s39 + $0x8] sm:$0xf]
        %v3842 = vld [vmem:[%s39 + $0xc] sm:$0xf]
        %v3843 = vld [vmem:[%s39 + $0x10] sm:$0xf]
        %v3844 = vld [vmem:[%s39 + $0x14] sm:$0xf]
        %v3845 = vld [vmem:[%s39 + $0x18] sm:$0xf]
        %v3846 = vld [vmem:[%s39 + $0x1c] sm:$0xf]
        %v3847 = vld [vmem:[%s39 + $0x20] sm:$0xf]
        %v3848 = vld [vmem:[%s39 + $0x24] sm:$0xf]
        %v3849 = vld [vmem:[%s39 + $0x28] sm:$0xf]
        %v3850 = vld [vmem:[%s39 + $0x2c] sm:$0xf]
        %v3851 = vld [vmem:[%s39 + $0x30] sm:$0xf]
        %v3852 = vld [vmem:[%s39 + $0x34] sm:$0xf]
        %v3853 = vld [vmem:[%s39 + $0x38] sm:$0xf]
        %v3854 = vld [vmem:[%s39 + $0x3c] sm:$0xf]
        %v3855 = vld [vmem:[%s41] sm:$0x1]
        %v3857 = vlaneseq
        %v3858 = vshrl.u32 %v3857, 7
        %v3859 = vsub.s32 0, %v3858
        %v3860 = vrot.slane %v3855, %v3859
        %v3878 = vunpack.c.l.b16 %v3839
        %v3879 = vunpack.c.l.b16 %v3840
        %v3880 = vunpack.c.l.b16 %v3841
        %v3881 = vunpack.c.l.b16 %v3842
        %v3882 = vunpack.c.l.b16 %v3843
        %v3883 = vunpack.c.l.b16 %v3844
        %v3884 = vunpack.c.l.b16 %v3845
        %v3885 = vunpack.c.l.b16 %v3846
        %v3886 = vunpack.c.l.b16 %v3847
        %v3887 = vunpack.c.l.b16 %v3848
        %v3888 = vunpack.c.l.b16 %v3849
        %v3889 = vunpack.c.l.b16 %v3850
        %v3890 = vunpack.c.l.b16 %v3851
        %v3891 = vunpack.c.l.b16 %v3852
        %v3892 = vunpack.c.l.b16 %v3853
        %v3893 = vunpack.c.l.b16 %v3854
        %v3894 = vpack.c.b16 %v3879, %v3878
        %v3895 = vpack.c.b16 %v3881, %v3880
        %v3896 = vpack.c.b16 %v3883, %v3882
        %v3897 = vpack.c.b16 %v3885, %v3884
        %v3898 = vpack.c.b16 %v3887, %v3886
        %v3899 = vpack.c.b16 %v3889, %v3888
        %v3900 = vpack.c.b16 %v3891, %v3890
        %v3901 = vpack.c.b16 %v3893, %v3892
        %3910 = vmatprep.subr.bf16.mxu0 0
        %3911 = vmatpush1.bf16.msra.mxu0 %v3894
        %3912 = vmatprep.subr.bf16.mxu0 0
        %3913 = vmatpush1.bf16.msra.mxu0 %v3895
        %3914 = vmatprep.subr.bf16.mxu0 0
        %3915 = vmatpush1.bf16.msra.mxu0 %v3896
        %3916 = vmatprep.subr.bf16.mxu0 0
        %3917 = vmatpush1.bf16.msra.mxu0 %v3897
        %3918 = vmatprep.subr.bf16.mxu0 0
        %3919 = vmatpush1.bf16.msra.mxu0 %v3898
        %3920 = vmatprep.subr.bf16.mxu0 0
        %3921 = vmatpush1.bf16.msra.mxu0 %v3899
        %3922 = vmatprep.subr.bf16.mxu0 0
        %3923 = vmatpush1.bf16.msra.mxu0 %v3900
        %3924 = vmatprep.subr.bf16.mxu0 0
        %3925 = vmatpush1.bf16.msra.mxu0 %v3901
        %3926 = vmatprep.subr.bf16.mxu0 0
        %3927 = vmatpush1.bf16.msra.mxu0 0
        %3928 = vmatprep.subr.bf16.mxu0 0
        %3929 = vmatpush1.bf16.msra.mxu0 0
        %3930 = vmatprep.subr.bf16.mxu0 0
        %3931 = vmatpush1.bf16.msra.mxu0 0
        %3932 = vmatprep.subr.bf16.mxu0 0
        %3933 = vmatpush1.bf16.msra.mxu0 0
        %3934 = vmatprep.subr.bf16.mxu0 0
        %3935 = vmatpush1.bf16.msra.mxu0 0
        %3936 = vmatprep.subr.bf16.mxu0 0
        %3937 = vmatpush1.bf16.msra.mxu0 0
        %3938 = vmatprep.subr.bf16.mxu0 0
        %3939 = vmatpush1.bf16.msra.mxu0 0
        %3940 = vmatprep.subr.bf16.mxu0 0
        %3941 = vmatpush1.bf16.msra.mxu0 0
        %3942 = vmatprep.mubr.bf16.mxu0 0
        %3943 = vmatmul.mubr.bf16.gmra.mrb[0].mxu0 %v3835
        %v3944 = vpop.f32.mrb[0].mxu0
        %v3945 = vadd.f32 %v3860, %v3944
        %v3946 = vpop.f32.mrb[0].mxu0
        %v3947 = vpop.f32.mrb[0].mxu0
        %v3948 = vadd.f32 %v3860, %v3947
        %v3949 = vpop.f32.mrb[0].mxu0
        %3950 = vmatprep.mubr.bf16.mxu0 0
        %3951 = vmatmul.mubr.bf16.gmra.mrb[0].mxu0 %v3836
        %v3952 = vpop.f32.mrb[0].mxu0
        %v3953 = vadd.f32 %v3860, %v3952
        %v3954 = vpop.f32.mrb[0].mxu0
        %v3955 = vpop.f32.mrb[0].mxu0
        %v3956 = vadd.f32 %v3860, %v3955
        %v3957 = vpop.f32.mrb[0].mxu0
        %3958 = vmatprep.mubr.bf16.mxu0 0
        %3959 = vmatmul.mubr.bf16.gmra.mrb[0].mxu0 %v3837
        %v3960 = vpop.f32.mrb[0].mxu0
        %v3961 = vadd.f32 %v3860, %v3960
        %v3962 = vpop.f32.mrb[0].mxu0
        %v3963 = vpop.f32.mrb[0].mxu0
        %v3964 = vadd.f32 %v3860, %v3963
        %v3965 = vpop.f32.mrb[0].mxu0
        %3966 = vmatprep.mubr.bf16.mxu0 0
        %3967 = vmatmul.mubr.bf16.gmra.mrb[0].mxu0 %v3838
        %v3968 = vpop.f32.mrb[0].mxu0
        %v3969 = vadd.f32 %v3860, %v3968
        %v3970 = vpop.f32.mrb[0].mxu0
        %v3971 = vpop.f32.mrb[0].mxu0
        %v3972 = vadd.f32 %v3860, %v3971
        %v3973 = vpop.f32.mrb[0].mxu0
        %3974 = vdwg.mxu0
        %v3975 = vadd.f32 %v3945, %v2710
        %v3976 = vadd.f32 %v3948, %v2711
        %v3977 = vadd.f32 %v3953, %v2712
        %v3978 = vadd.f32 %v3956, %v2713
        %v3979 = vadd.f32 %v3961, %v2714
        %v3980 = vadd.f32 %v3964, %v2715
        %v3981 = vadd.f32 %v3969, %v2716
        %v3982 = vadd.f32 %v3972, %v2717
        %3983 = vadd.xlane.f32.xlu0 %v3975
        %v3984 = vpop.xlane.xlu0 %3983
        %3985 = vadd.xlane.f32.xlu0 %v3976
        %v3986 = vpop.xlane.xlu0 %3985
        %3987 = vadd.xlane.f32.xlu0 %v3977
        %v3988 = vpop.xlane.xlu0 %3987
        %3989 = vadd.xlane.f32.xlu0 %v3978
        %v3990 = vpop.xlane.xlu0 %3989
        %3991 = vadd.xlane.f32.xlu0 %v3979
        %v3992 = vpop.xlane.xlu0 %3991
        %3993 = vadd.xlane.f32.xlu0 %v3980
        %v3994 = vpop.xlane.xlu0 %3993
        %3995 = vadd.xlane.f32.xlu0 %v3981
        %v3996 = vpop.xlane.xlu0 %3995
        %3997 = vadd.xlane.f32.xlu0 %v3982
        %v3998 = vpop.xlane.xlu0 %3997
        %v3999 = vmul.f32 %v3984, %v1466
        %v4000 = vmul.f32 %v3986, %v1466
        %v4001 = vmul.f32 %v3988, %v1466
        %v4002 = vmul.f32 %v3990, %v1466
        %v4003 = vmul.f32 %v3992, %v1466
        %v4004 = vmul.f32 %v3994, %v1466
        %v4005 = vmul.f32 %v3996, %v1466
        %v4006 = vmul.f32 %v3998, %v1466
        %v4007 = vsub.f32 %v3975, %v3999
        %v4008 = vsub.f32 %v3976, %v4000
        %v4009 = vsub.f32 %v3977, %v4001
        %v4010 = vsub.f32 %v3978, %v4002
        %v4011 = vsub.f32 %v3979, %v4003
        %v4012 = vsub.f32 %v3980, %v4004
        %v4013 = vsub.f32 %v3981, %v4005
        %v4014 = vsub.f32 %v3982, %v4006
        %v4015 = vmul.f32 %v4007, %v4007
        %v4016 = vmul.f32 %v4008, %v4008
        %v4017 = vmul.f32 %v4009, %v4009
        %v4018 = vmul.f32 %v4010, %v4010
        %v4019 = vmul.f32 %v4011, %v4011
        %v4020 = vmul.f32 %v4012, %v4012
        %v4021 = vmul.f32 %v4013, %v4013
        %v4022 = vmul.f32 %v4014, %v4014
        %4023 = vadd.xlane.f32.xlu0 %v4015
        %v4024 = vpop.xlane.xlu0 %4023
        %4025 = vadd.xlane.f32.xlu0 %v4016
        %v4026 = vpop.xlane.xlu0 %4025
        %4027 = vadd.xlane.f32.xlu0 %v4017
        %v4028 = vpop.xlane.xlu0 %4027
        %4029 = vadd.xlane.f32.xlu0 %v4018
        %v4030 = vpop.xlane.xlu0 %4029
        %4031 = vadd.xlane.f32.xlu0 %v4019
        %v4032 = vpop.xlane.xlu0 %4031
        %4033 = vadd.xlane.f32.xlu0 %v4020
        %v4034 = vpop.xlane.xlu0 %4033
        %4035 = vadd.xlane.f32.xlu0 %v4021
        %v4036 = vpop.xlane.xlu0 %4035
        %4037 = vadd.xlane.f32.xlu0 %v4022
        %v4038 = vpop.xlane.xlu0 %4037
        %v4039 = vmul.f32 %v4024, %v1466
        %v4040 = vmul.f32 %v4026, %v1466
        %v4041 = vmul.f32 %v4028, %v1466
        %v4042 = vmul.f32 %v4030, %v1466
        %v4043 = vmul.f32 %v4032, %v1466
        %v4044 = vmul.f32 %v4034, %v1466
        %v4045 = vmul.f32 %v4036, %v1466
        %v4046 = vmul.f32 %v4038, %v1466
        %v4047 = vadd.f32 %v4039, 1e-05
        %v4048 = vadd.f32 %v4040, 1e-05
        %v4049 = vadd.f32 %v4041, 1e-05
        %v4050 = vadd.f32 %v4042, 1e-05
        %v4051 = vadd.f32 %v4043, 1e-05
        %v4052 = vadd.f32 %v4044, 1e-05
        %v4053 = vadd.f32 %v4045, 1e-05
        %v4054 = vadd.f32 %v4046, 1e-05
        %v4055 = vrsqrt.pop %v4047
        %v4056 = vrsqrt.pop %v4048
        %v4057 = vrsqrt.pop %v4049
        %v4058 = vrsqrt.pop %v4050
        %v4059 = vrsqrt.pop %v4051
        %v4060 = vrsqrt.pop %v4052
        %v4061 = vrsqrt.pop %v4053
        %v4062 = vrsqrt.pop %v4054
        %v4063 = vmul.f32 %v4007, %v4055
        %v4064 = vmul.f32 %v4008, %v4056
        %v4065 = vmul.f32 %v4009, %v4057
        %v4066 = vmul.f32 %v4010, %v4058
        %v4067 = vmul.f32 %v4011, %v4059
        %v4068 = vmul.f32 %v4012, %v4060
        %v4069 = vmul.f32 %v4013, %v4061
        %v4070 = vmul.f32 %v4014, %v4062
        %v4071 = vld [vmem:[%s43] sm:$0x1]
        %v4073 = vlaneseq
        %v4074 = vshrl.u32 %v4073, 7
        %v4075 = vsub.s32 0, %v4074
        %v4076 = vrot.slane %v4071, %v4075
        %v4078 = vmul.f32 %v4063, %v4076
        %v4079 = vmul.f32 %v4064, %v4076
        %v4080 = vmul.f32 %v4065, %v4076
        %v4081 = vmul.f32 %v4066, %v4076
        %v4082 = vmul.f32 %v4067, %v4076
        %v4083 = vmul.f32 %v4068, %v4076
        %v4084 = vmul.f32 %v4069, %v4076
        %v4085 = vmul.f32 %v4070, %v4076
        %v4086 = vld [vmem:[%s45] sm:$0x1]
        %v4088 = vlaneseq
        %v4089 = vshrl.u32 %v4088, 7
        %v4090 = vsub.s32 0, %v4089
        %v4091 = vrot.slane %v4086, %v4090
        %v4093 = vadd.f32 %v4078, %v4091
        %v4094 = vadd.f32 %v4079, %v4091
        %v4095 = vadd.f32 %v4080, %v4091
        %v4096 = vadd.f32 %v4081, %v4091
        %v4097 = vadd.f32 %v4082, %v4091
        %v4098 = vadd.f32 %v4083, %v4091
        %v4099 = vadd.f32 %v4084, %v4091
        %v4100 = vadd.f32 %v4085, %v4091
        %v4101 = vpack.c.bf16 %v4094, %v4093
        %v4102 = vpack.c.bf16 %v4096, %v4095
        %v4103 = vpack.c.bf16 %v4098, %v4097
        %v4104 = vpack.c.bf16 %v4100, %v4099
        %v4105 = vld [vmem:[%s47] sm:$0xff]
        %v4106 = vld [vmem:[%s47 + $0x8] sm:$0xff]
        %v4107 = vld [vmem:[%s47 + $0x10] sm:$0xff]
        %v4108 = vld [vmem:[%s47 + $0x18] sm:$0xff]
        %v4109 = vld [vmem:[%s47 + $0x20] sm:$0xff]
        %v4110 = vld [vmem:[%s47 + $0x28] sm:$0xff]
        %v4111 = vld [vmem:[%s47 + $0x30] sm:$0xff]
        %v4112 = vld [vmem:[%s47 + $0x38] sm:$0xff]
        %v4113 = vld [vmem:[%s47 + $0x40] sm:$0xff]
        %v4114 = vld [vmem:[%s47 + $0x48] sm:$0xff]
        %v4115 = vld [vmem:[%s47 + $0x50] sm:$0xff]
        %v4116 = vld [vmem:[%s47 + $0x58] sm:$0xff]
        %v4117 = vld [vmem:[%s47 + $0x60] sm:$0xff]
        %v4118 = vld [vmem:[%s47 + $0x68] sm:$0xff]
        %v4119 = vld [vmem:[%s47 + $0x70] sm:$0xff]
        %v4120 = vld [vmem:[%s47 + $0x78] sm:$0xff]
        %v4121 = vld [vmem:[%s47 + $0x80] sm:$0xff]
        %v4122 = vld [vmem:[%s47 + $0x88] sm:$0xff]
        %v4123 = vld [vmem:[%s47 + $0x90] sm:$0xff]
        %v4124 = vld [vmem:[%s47 + $0x98] sm:$0xff]
        %v4125 = vld [vmem:[%s47 + $0xa0] sm:$0xff]
        %v4126 = vld [vmem:[%s47 + $0xa8] sm:$0xff]
        %v4127 = vld [vmem:[%s47 + $0xb0] sm:$0xff]
        %v4128 = vld [vmem:[%s47 + $0xb8] sm:$0xff]
        %v4129 = vld [vmem:[%s47 + $0xc0] sm:$0xff]
        %v4130 = vld [vmem:[%s47 + $0xc8] sm:$0xff]
        %v4131 = vld [vmem:[%s47 + $0xd0] sm:$0xff]
        %v4132 = vld [vmem:[%s47 + $0xd8] sm:$0xff]
        %v4133 = vld [vmem:[%s47 + $0xe0] sm:$0xff]
        %v4134 = vld [vmem:[%s47 + $0xe8] sm:$0xff]
        %v4135 = vld [vmem:[%s47 + $0xf0] sm:$0xff]
        %v4136 = vld [vmem:[%s47 + $0xf8] sm:$0xff]
        %v4137 = vld [vmem:[%s47 + $0x100] sm:$0xff]
        %v4138 = vld [vmem:[%s47 + $0x108] sm:$0xff]
        %v4139 = vld [vmem:[%s47 + $0x110] sm:$0xff]
        %v4140 = vld [vmem:[%s47 + $0x118] sm:$0xff]
        %v4141 = vld [vmem:[%s47 + $0x120] sm:$0xff]
        %v4142 = vld [vmem:[%s47 + $0x128] sm:$0xff]
        %v4143 = vld [vmem:[%s47 + $0x130] sm:$0xff]
        %v4144 = vld [vmem:[%s47 + $0x138] sm:$0xff]
        %v4145 = vld [vmem:[%s47 + $0x140] sm:$0xff]
        %v4146 = vld [vmem:[%s47 + $0x148] sm:$0xff]
        %v4147 = vld [vmem:[%s47 + $0x150] sm:$0xff]
        %v4148 = vld [vmem:[%s47 + $0x158] sm:$0xff]
        %v4149 = vld [vmem:[%s47 + $0x160] sm:$0xff]
        %v4150 = vld [vmem:[%s47 + $0x168] sm:$0xff]
        %v4151 = vld [vmem:[%s47 + $0x170] sm:$0xff]
        %v4152 = vld [vmem:[%s47 + $0x178] sm:$0xff]
        %v4153 = vld [vmem:[%s47 + $0x180] sm:$0xff]
        %v4154 = vld [vmem:[%s47 + $0x188] sm:$0xff]
        %v4155 = vld [vmem:[%s47 + $0x190] sm:$0xff]
        %v4156 = vld [vmem:[%s47 + $0x198] sm:$0xff]
        %v4157 = vld [vmem:[%s47 + $0x1a0] sm:$0xff]
        %v4158 = vld [vmem:[%s47 + $0x1a8] sm:$0xff]
        %v4159 = vld [vmem:[%s47 + $0x1b0] sm:$0xff]
        %v4160 = vld [vmem:[%s47 + $0x1b8] sm:$0xff]
        %v4161 = vld [vmem:[%s47 + $0x1c0] sm:$0xff]
        %v4162 = vld [vmem:[%s47 + $0x1c8] sm:$0xff]
        %v4163 = vld [vmem:[%s47 + $0x1d0] sm:$0xff]
        %v4164 = vld [vmem:[%s47 + $0x1d8] sm:$0xff]
        %v4165 = vld [vmem:[%s47 + $0x1e0] sm:$0xff]
        %v4166 = vld [vmem:[%s47 + $0x1e8] sm:$0xff]
        %v4167 = vld [vmem:[%s47 + $0x1f0] sm:$0xff]
        %v4168 = vld [vmem:[%s47 + $0x1f8] sm:$0xff]
        %v4169 = vld [vmem:[%s49] sm:$0xff]
        %v4171 = vlaneseq
        %v4172 = vshrl.u32 %v4171, 7
        %v4173 = vsub.s32 0, %v4172
        %v4174 = vrot.slane %v4169, %v4173
        %v4175 = vlaneseq
        %v4176 = vshrl.u32 %v4175, 7
        %v4177 = vsub.s32 1, %v4176
        %v4178 = vrot.slane %v4169, %v4177
        %v4179 = vlaneseq
        %v4180 = vshrl.u32 %v4179, 7
        %v4181 = vsub.s32 2, %v4180
        %v4182 = vrot.slane %v4169, %v4181
        %v4183 = vlaneseq
        %v4184 = vshrl.u32 %v4183, 7
        %v4185 = vsub.s32 3, %v4184
        %v4186 = vrot.slane %v4169, %v4185
        %v4187 = vlaneseq
        %v4188 = vshrl.u32 %v4187, 7
        %v4189 = vsub.s32 4, %v4188
        %v4190 = vrot.slane %v4169, %v4189
        %v4191 = vlaneseq
        %v4192 = vshrl.u32 %v4191, 7
        %v4193 = vsub.s32 5, %v4192
        %v4194 = vrot.slane %v4169, %v4193
        %v4195 = vlaneseq
        %v4196 = vshrl.u32 %v4195, 7
        %v4197 = vsub.s32 6, %v4196
        %v4198 = vrot.slane %v4169, %v4197
        %v4199 = vlaneseq
        %v4200 = vshrl.u32 %v4199, 7
        %v4201 = vsub.s32 7, %v4200
        %v4202 = vrot.slane %v4169, %v4201
        %v4275 = vunpack.c.l.b16 %v4105
        %v4276 = vunpack.c.h.b16 %v4105
        %v4277 = vunpack.c.l.b16 %v4106
        %v4278 = vunpack.c.h.b16 %v4106
        %v4279 = vunpack.c.l.b16 %v4107
        %v4280 = vunpack.c.h.b16 %v4107
        %v4281 = vunpack.c.l.b16 %v4108
        %v4282 = vunpack.c.h.b16 %v4108
        %v4283 = vunpack.c.l.b16 %v4109
        %v4284 = vunpack.c.h.b16 %v4109
        %v4285 = vunpack.c.l.b16 %v4110
        %v4286 = vunpack.c.h.b16 %v4110
        %v4287 = vunpack.c.l.b16 %v4111
        %v4288 = vunpack.c.h.b16 %v4111
        %v4289 = vunpack.c.l.b16 %v4112
        %v4290 = vunpack.c.h.b16 %v4112
        %v4291 = vunpack.c.l.b16 %v4113
        %v4292 = vunpack.c.h.b16 %v4113
        %v4293 = vunpack.c.l.b16 %v4114
        %v4294 = vunpack.c.h.b16 %v4114
        %v4295 = vunpack.c.l.b16 %v4115
        %v4296 = vunpack.c.h.b16 %v4115
        %v4297 = vunpack.c.l.b16 %v4116
        %v4298 = vunpack.c.h.b16 %v4116
        %v4299 = vunpack.c.l.b16 %v4117
        %v4300 = vunpack.c.h.b16 %v4117
        %v4301 = vunpack.c.l.b16 %v4118
        %v4302 = vunpack.c.h.b16 %v4118
        %v4303 = vunpack.c.l.b16 %v4119
        %v4304 = vunpack.c.h.b16 %v4119
        %v4305 = vunpack.c.l.b16 %v4120
        %v4306 = vunpack.c.h.b16 %v4120
        %v4307 = vunpack.c.l.b16 %v4121
        %v4308 = vunpack.c.h.b16 %v4121
        %v4309 = vunpack.c.l.b16 %v4122
        %v4310 = vunpack.c.h.b16 %v4122
        %v4311 = vunpack.c.l.b16 %v4123
        %v4312 = vunpack.c.h.b16 %v4123
        %v4313 = vunpack.c.l.b16 %v4124
        %v4314 = vunpack.c.h.b16 %v4124
        %v4315 = vunpack.c.l.b16 %v4125
        %v4316 = vunpack.c.h.b16 %v4125
        %v4317 = vunpack.c.l.b16 %v4126
        %v4318 = vunpack.c.h.b16 %v4126
        %v4319 = vunpack.c.l.b16 %v4127
        %v4320 = vunpack.c.h.b16 %v4127
        %v4321 = vunpack.c.l.b16 %v4128
        %v4322 = vunpack.c.h.b16 %v4128
        %v4323 = vunpack.c.l.b16 %v4129
        %v4324 = vunpack.c.h.b16 %v4129
        %v4325 = vunpack.c.l.b16 %v4130
        %v4326 = vunpack.c.h.b16 %v4130
        %v4327 = vunpack.c.l.b16 %v4131
        %v4328 = vunpack.c.h.b16 %v4131
        %v4329 = vunpack.c.l.b16 %v4132
        %v4330 = vunpack.c.h.b16 %v4132
        %v4331 = vunpack.c.l.b16 %v4133
        %v4332 = vunpack.c.h.b16 %v4133
        %v4333 = vunpack.c.l.b16 %v4134
        %v4334 = vunpack.c.h.b16 %v4134
        %v4335 = vunpack.c.l.b16 %v4135
        %v4336 = vunpack.c.h.b16 %v4135
        %v4337 = vunpack.c.l.b16 %v4136
        %v4338 = vunpack.c.h.b16 %v4136
        %v4339 = vunpack.c.l.b16 %v4137
        %v4340 = vunpack.c.h.b16 %v4137
        %v4341 = vunpack.c.l.b16 %v4138
        %v4342 = vunpack.c.h.b16 %v4138
        %v4343 = vunpack.c.l.b16 %v4139
        %v4344 = vunpack.c.h.b16 %v4139
        %v4345 = vunpack.c.l.b16 %v4140
        %v4346 = vunpack.c.h.b16 %v4140
        %v4347 = vunpack.c.l.b16 %v4141
        %v4348 = vunpack.c.h.b16 %v4141
        %v4349 = vunpack.c.l.b16 %v4142
        %v4350 = vunpack.c.h.b16 %v4142
        %v4351 = vunpack.c.l.b16 %v4143
        %v4352 = vunpack.c.h.b16 %v4143
        %v4353 = vunpack.c.l.b16 %v4144
        %v4354 = vunpack.c.h.b16 %v4144
        %v4355 = vunpack.c.l.b16 %v4145
        %v4356 = vunpack.c.h.b16 %v4145
        %v4357 = vunpack.c.l.b16 %v4146
        %v4358 = vunpack.c.h.b16 %v4146
        %v4359 = vunpack.c.l.b16 %v4147
        %v4360 = vunpack.c.h.b16 %v4147
        %v4361 = vunpack.c.l.b16 %v4148
        %v4362 = vunpack.c.h.b16 %v4148
        %v4363 = vunpack.c.l.b16 %v4149
        %v4364 = vunpack.c.h.b16 %v4149
        %v4365 = vunpack.c.l.b16 %v4150
        %v4366 = vunpack.c.h.b16 %v4150
        %v4367 = vunpack.c.l.b16 %v4151
        %v4368 = vunpack.c.h.b16 %v4151
        %v4369 = vunpack.c.l.b16 %v4152
        %v4370 = vunpack.c.h.b16 %v4152
        %v4371 = vunpack.c.l.b16 %v4153
        %v4372 = vunpack.c.h.b16 %v4153
        %v4373 = vunpack.c.l.b16 %v4154
        %v4374 = vunpack.c.h.b16 %v4154
        %v4375 = vunpack.c.l.b16 %v4155
        %v4376 = vunpack.c.h.b16 %v4155
        %v4377 = vunpack.c.l.b16 %v4156
        %v4378 = vunpack.c.h.b16 %v4156
        %v4379 = vunpack.c.l.b16 %v4157
        %v4380 = vunpack.c.h.b16 %v4157
        %v4381 = vunpack.c.l.b16 %v4158
        %v4382 = vunpack.c.h.b16 %v4158
        %v4383 = vunpack.c.l.b16 %v4159
        %v4384 = vunpack.c.h.b16 %v4159
        %v4385 = vunpack.c.l.b16 %v4160
        %v4386 = vunpack.c.h.b16 %v4160
        %v4387 = vunpack.c.l.b16 %v4161
        %v4388 = vunpack.c.h.b16 %v4161
        %v4389 = vunpack.c.l.b16 %v4162
        %v4390 = vunpack.c.h.b16 %v4162
        %v4391 = vunpack.c.l.b16 %v4163
        %v4392 = vunpack.c.h.b16 %v4163
        %v4393 = vunpack.c.l.b16 %v4164
        %v4394 = vunpack.c.h.b16 %v4164
        %v4395 = vunpack.c.l.b16 %v4165
        %v4396 = vunpack.c.h.b16 %v4165
        %v4397 = vunpack.c.l.b16 %v4166
        %v4398 = vunpack.c.h.b16 %v4166
        %v4399 = vunpack.c.l.b16 %v4167
        %v4400 = vunpack.c.h.b16 %v4167
        %v4401 = vunpack.c.l.b16 %v4168
        %v4402 = vunpack.c.h.b16 %v4168
        %v4403 = vpack.c.b16 %v4283, %v4275
        %v4404 = vpack.c.b16 %v4284, %v4276
        %v4405 = vpack.c.b16 %v4285, %v4277
        %v4406 = vpack.c.b16 %v4286, %v4278
        %v4407 = vpack.c.b16 %v4287, %v4279
        %v4408 = vpack.c.b16 %v4288, %v4280
        %v4409 = vpack.c.b16 %v4289, %v4281
        %v4410 = vpack.c.b16 %v4290, %v4282
        %v4411 = vpack.c.b16 %v4299, %v4291
        %v4412 = vpack.c.b16 %v4300, %v4292
        %v4413 = vpack.c.b16 %v4301, %v4293
        %v4414 = vpack.c.b16 %v4302, %v4294
        %v4415 = vpack.c.b16 %v4303, %v4295
        %v4416 = vpack.c.b16 %v4304, %v4296
        %v4417 = vpack.c.b16 %v4305, %v4297
        %v4418 = vpack.c.b16 %v4306, %v4298
        %v4419 = vpack.c.b16 %v4315, %v4307
        %v4420 = vpack.c.b16 %v4316, %v4308
        %v4421 = vpack.c.b16 %v4317, %v4309
        %v4422 = vpack.c.b16 %v4318, %v4310
        %v4423 = vpack.c.b16 %v4319, %v4311
        %v4424 = vpack.c.b16 %v4320, %v4312
        %v4425 = vpack.c.b16 %v4321, %v4313
        %v4426 = vpack.c.b16 %v4322, %v4314
        %v4427 = vpack.c.b16 %v4331, %v4323
        %v4428 = vpack.c.b16 %v4332, %v4324
        %v4429 = vpack.c.b16 %v4333, %v4325
        %v4430 = vpack.c.b16 %v4334, %v4326
        %v4431 = vpack.c.b16 %v4335, %v4327
        %v4432 = vpack.c.b16 %v4336, %v4328
        %v4433 = vpack.c.b16 %v4337, %v4329
        %v4434 = vpack.c.b16 %v4338, %v4330
        %v4435 = vpack.c.b16 %v4347, %v4339
        %v4436 = vpack.c.b16 %v4348, %v4340
        %v4437 = vpack.c.b16 %v4349, %v4341
        %v4438 = vpack.c.b16 %v4350, %v4342
        %v4439 = vpack.c.b16 %v4351, %v4343
        %v4440 = vpack.c.b16 %v4352, %v4344
        %v4441 = vpack.c.b16 %v4353, %v4345
        %v4442 = vpack.c.b16 %v4354, %v4346
        %v4443 = vpack.c.b16 %v4363, %v4355
        %v4444 = vpack.c.b16 %v4364, %v4356
        %v4445 = vpack.c.b16 %v4365, %v4357
        %v4446 = vpack.c.b16 %v4366, %v4358
        %v4447 = vpack.c.b16 %v4367, %v4359
        %v4448 = vpack.c.b16 %v4368, %v4360
        %v4449 = vpack.c.b16 %v4369, %v4361
        %v4450 = vpack.c.b16 %v4370, %v4362
        %v4451 = vpack.c.b16 %v4379, %v4371
        %v4452 = vpack.c.b16 %v4380, %v4372
        %v4453 = vpack.c.b16 %v4381, %v4373
        %v4454 = vpack.c.b16 %v4382, %v4374
        %v4455 = vpack.c.b16 %v4383, %v4375
        %v4456 = vpack.c.b16 %v4384, %v4376
        %v4457 = vpack.c.b16 %v4385, %v4377
        %v4458 = vpack.c.b16 %v4386, %v4378
        %v4459 = vpack.c.b16 %v4395, %v4387
        %v4460 = vpack.c.b16 %v4396, %v4388
        %v4461 = vpack.c.b16 %v4397, %v4389
        %v4462 = vpack.c.b16 %v4398, %v4390
        %v4463 = vpack.c.b16 %v4399, %v4391
        %v4464 = vpack.c.b16 %v4400, %v4392
        %v4465 = vpack.c.b16 %v4401, %v4393
        %v4466 = vpack.c.b16 %v4402, %v4394
        %4531 = vmatprep.subr.bf16.mxu0 %v4404
        %4532 = vmatpush1.bf16.msra.mxu0 %v4403
        %4533 = vmatprep.subr.bf16.mxu0 %v4412
        %4534 = vmatpush1.bf16.msra.mxu0 %v4411
        %4535 = vmatprep.subr.bf16.mxu0 %v4420
        %4536 = vmatpush1.bf16.msra.mxu0 %v4419
        %4537 = vmatprep.subr.bf16.mxu0 %v4428
        %4538 = vmatpush1.bf16.msra.mxu0 %v4427
        %4539 = vmatprep.subr.bf16.mxu0 %v4436
        %4540 = vmatpush1.bf16.msra.mxu0 %v4435
        %4541 = vmatprep.subr.bf16.mxu0 %v4444
        %4542 = vmatpush1.bf16.msra.mxu0 %v4443
        %4543 = vmatprep.subr.bf16.mxu0 %v4452
        %4544 = vmatpush1.bf16.msra.mxu0 %v4451
        %4545 = vmatprep.subr.bf16.mxu0 %v4460
        %4546 = vmatpush1.bf16.msra.mxu0 %v4459
        %4547 = vmatprep.subr.bf16.mxu0 0
        %4548 = vmatpush1.bf16.msra.mxu0 0
        %4549 = vmatprep.subr.bf16.mxu0 0
        %4550 = vmatpush1.bf16.msra.mxu0 0
        %4551 = vmatprep.subr.bf16.mxu0 0
        %4552 = vmatpush1.bf16.msra.mxu0 0
        %4553 = vmatprep.subr.bf16.mxu0 0
        %4554 = vmatpush1.bf16.msra.mxu0 0
        %4555 = vmatprep.subr.bf16.mxu0 0
        %4556 = vmatpush1.bf16.msra.mxu0 0
        %4557 = vmatprep.subr.bf16.mxu0 0
        %4558 = vmatpush1.bf16.msra.mxu0 0
        %4559 = vmatprep.subr.bf16.mxu0 0
        %4560 = vmatpush1.bf16.msra.mxu0 0
        %4561 = vmatprep.subr.bf16.mxu0 0
        %4562 = vmatpush1.bf16.msra.mxu0 0
        %4563 = vmatprep.mubr.bf16.mxu0 0
        %4564 = vmatmul.mubr.bf16.gmra.mrb[0].mxu0 %v4101
        %v4565 = vpop.f32.mrb[0].mxu0
        %v4566 = vadd.f32 %v4174, %v4565
        %v4567 = vpop.f32.mrb[0].mxu0
        %v4568 = vadd.f32 %v4178, %v4567
        %v4569 = vpop.f32.mrb[0].mxu0
        %v4570 = vadd.f32 %v4174, %v4569
        %v4571 = vpop.f32.mrb[0].mxu0
        %v4572 = vadd.f32 %v4178, %v4571
        %4573 = vmatprep.mubr.bf16.mxu0 0
        %4574 = vmatmul.mubr.bf16.gmra.mrb[0].mxu0 %v4102
        %v4575 = vpop.f32.mrb[0].mxu0
        %v4576 = vadd.f32 %v4174, %v4575
        %v4577 = vpop.f32.mrb[0].mxu0
        %v4578 = vadd.f32 %v4178, %v4577
        %v4579 = vpop.f32.mrb[0].mxu0
        %v4580 = vadd.f32 %v4174, %v4579
        %v4581 = vpop.f32.mrb[0].mxu0
        %v4582 = vadd.f32 %v4178, %v4581
        %4583 = vmatprep.mubr.bf16.mxu0 0
        %4584 = vmatmul.mubr.bf16.gmra.mrb[0].mxu0 %v4103
        %v4585 = vpop.f32.mrb[0].mxu0
        %v4586 = vadd.f32 %v4174, %v4585
        %v4587 = vpop.f32.mrb[0].mxu0
        %v4588 = vadd.f32 %v4178, %v4587
        %v4589 = vpop.f32.mrb[0].mxu0
        %v4590 = vadd.f32 %v4174, %v4589
        %v4591 = vpop.f32.mrb[0].mxu0
        %v4592 = vadd.f32 %v4178, %v4591
        %4593 = vmatprep.mubr.bf16.mxu0 0
        %4594 = vmatmul.mubr.bf16.gmra.mrb[0].mxu0 %v4104
        %v4595 = vpop.f32.mrb[0].mxu0
        %v4596 = vadd.f32 %v4174, %v4595
        %v4597 = vpop.f32.mrb[0].mxu0
        %v4598 = vadd.f32 %v4178, %v4597
        %v4599 = vpop.f32.mrb[0].mxu0
        %v4600 = vadd.f32 %v4174, %v4599
        %v4601 = vpop.f32.mrb[0].mxu0
        %v4602 = vadd.f32 %v4178, %v4601
        %4603 = vdwg.mxu0
        %4604 = vmatprep.subr.bf16.mxu0 %v4406
        %4605 = vmatpush1.bf16.msra.mxu0 %v4405
        %4606 = vmatprep.subr.bf16.mxu0 %v4414
        %4607 = vmatpush1.bf16.msra.mxu0 %v4413
        %4608 = vmatprep.subr.bf16.mxu0 %v4422
        %4609 = vmatpush1.bf16.msra.mxu0 %v4421
        %4610 = vmatprep.subr.bf16.mxu0 %v4430
        %4611 = vmatpush1.bf16.msra.mxu0 %v4429
        %4612 = vmatprep.subr.bf16.mxu0 %v4438
        %4613 = vmatpush1.bf16.msra.mxu0 %v4437
        %4614 = vmatprep.subr.bf16.mxu0 %v4446
        %4615 = vmatpush1.bf16.msra.mxu0 %v4445
        %4616 = vmatprep.subr.bf16.mxu0 %v4454
        %4617 = vmatpush1.bf16.msra.mxu0 %v4453
        %4618 = vmatprep.subr.bf16.mxu0 %v4462
        %4619 = vmatpush1.bf16.msra.mxu0 %v4461
        %4620 = vmatprep.subr.bf16.mxu0 0
        %4621 = vmatpush1.bf16.msra.mxu0 0
        %4622 = vmatprep.subr.bf16.mxu0 0
        %4623 = vmatpush1.bf16.msra.mxu0 0
        %4624 = vmatprep.subr.bf16.mxu0 0
        %4625 = vmatpush1.bf16.msra.mxu0 0
        %4626 = vmatprep.subr.bf16.mxu0 0
        %4627 = vmatpush1.bf16.msra.mxu0 0
        %4628 = vmatprep.subr.bf16.mxu0 0
        %4629 = vmatpush1.bf16.msra.mxu0 0
        %4630 = vmatprep.subr.bf16.mxu0 0
        %4631 = vmatpush1.bf16.msra.mxu0 0
        %4632 = vmatprep.subr.bf16.mxu0 0
        %4633 = vmatpush1.bf16.msra.mxu0 0
        %4634 = vmatprep.subr.bf16.mxu0 0
        %4635 = vmatpush1.bf16.msra.mxu0 0
        %4636 = vmatprep.mubr.bf16.mxu0 0
        %4637 = vmatmul.mubr.bf16.gmra.mrb[0].mxu0 %v4101
        %v4638 = vpop.f32.mrb[0].mxu0
        %v4639 = vadd.f32 %v4182, %v4638
        %v4640 = vpop.f32.mrb[0].mxu0
        %v4641 = vadd.f32 %v4186, %v4640
        %v4642 = vpop.f32.mrb[0].mxu0
        %v4643 = vadd.f32 %v4182, %v4642
        %v4644 = vpop.f32.mrb[0].mxu0
        %v4645 = vadd.f32 %v4186, %v4644
        %4646 = vmatprep.mubr.bf16.mxu0 0
        %4647 = vmatmul.mubr.bf16.gmra.mrb[0].mxu0 %v4102
        %v4648 = vpop.f32.mrb[0].mxu0
        %v4649 = vadd.f32 %v4182, %v4648
        %v4650 = vpop.f32.mrb[0].mxu0
        %v4651 = vadd.f32 %v4186, %v4650
        %v4652 = vpop.f32.mrb[0].mxu0
        %v4653 = vadd.f32 %v4182, %v4652
        %v4654 = vpop.f32.mrb[0].mxu0
        %v4655 = vadd.f32 %v4186, %v4654
        %4656 = vmatprep.mubr.bf16.mxu0 0
        %4657 = vmatmul.mubr.bf16.gmra.mrb[0].mxu0 %v4103
        %v4658 = vpop.f32.mrb[0].mxu0
        %v4659 = vadd.f32 %v4182, %v4658
        %v4660 = vpop.f32.mrb[0].mxu0
        %v4661 = vadd.f32 %v4186, %v4660
        %v4662 = vpop.f32.mrb[0].mxu0
        %v4663 = vadd.f32 %v4182, %v4662
        %v4664 = vpop.f32.mrb[0].mxu0
        %v4665 = vadd.f32 %v4186, %v4664
        %4666 = vmatprep.mubr.bf16.mxu0 0
        %4667 = vmatmul.mubr.bf16.gmra.mrb[0].mxu0 %v4104
        %v4668 = vpop.f32.mrb[0].mxu0
        %v4669 = vadd.f32 %v4182, %v4668
        %v4670 = vpop.f32.mrb[0].mxu0
        %v4671 = vadd.f32 %v4186, %v4670
        %v4672 = vpop.f32.mrb[0].mxu0
        %v4673 = vadd.f32 %v4182, %v4672
        %v4674 = vpop.f32.mrb[0].mxu0
        %v4675 = vadd.f32 %v4186, %v4674
        %4676 = vdwg.mxu0
        %4677 = vmatprep.subr.bf16.mxu0 %v4408
        %4678 = vmatpush1.bf16.msra.mxu0 %v4407
        %4679 = vmatprep.subr.bf16.mxu0 %v4416
        %4680 = vmatpush1.bf16.msra.mxu0 %v4415
        %4681 = vmatprep.subr.bf16.mxu0 %v4424
        %4682 = vmatpush1.bf16.msra.mxu0 %v4423
        %4683 = vmatprep.subr.bf16.mxu0 %v4432
        %4684 = vmatpush1.bf16.msra.mxu0 %v4431
        %4685 = vmatprep.subr.bf16.mxu0 %v4440
        %4686 = vmatpush1.bf16.msra.mxu0 %v4439
        %4687 = vmatprep.subr.bf16.mxu0 %v4448
        %4688 = vmatpush1.bf16.msra.mxu0 %v4447
        %4689 = vmatprep.subr.bf16.mxu0 %v4456
        %4690 = vmatpush1.bf16.msra.mxu0 %v4455
        %4691 = vmatprep.subr.bf16.mxu0 %v4464
        %4692 = vmatpush1.bf16.msra.mxu0 %v4463
        %4693 = vmatprep.subr.bf16.mxu0 0
        %4694 = vmatpush1.bf16.msra.mxu0 0
        %4695 = vmatprep.subr.bf16.mxu0 0
        %4696 = vmatpush1.bf16.msra.mxu0 0
        %4697 = vmatprep.subr.bf16.mxu0 0
        %4698 = vmatpush1.bf16.msra.mxu0 0
        %4699 = vmatprep.subr.bf16.mxu0 0
        %4700 = vmatpush1.bf16.msra.mxu0 0
        %4701 = vmatprep.subr.bf16.mxu0 0
        %4702 = vmatpush1.bf16.msra.mxu0 0
        %4703 = vmatprep.subr.bf16.mxu0 0
        %4704 = vmatpush1.bf16.msra.mxu0 0
        %4705 = vmatprep.subr.bf16.mxu0 0
        %4706 = vmatpush1.bf16.msra.mxu0 0
        %4707 = vmatprep.subr.bf16.mxu0 0
        %4708 = vmatpush1.bf16.msra.mxu0 0
        %4709 = vmatprep.mubr.bf16.mxu0 0
        %4710 = vmatmul.mubr.bf16.gmra.mrb[0].mxu0 %v4101
        %v4711 = vpop.f32.mrb[0].mxu0
        %v4712 = vadd.f32 %v4190, %v4711
        %v4713 = vpop.f32.mrb[0].mxu0
        %v4714 = vadd.f32 %v4194, %v4713
        %v4715 = vpop.f32.mrb[0].mxu0
        %v4716 = vadd.f32 %v4190, %v4715
        %v4717 = vpop.f32.mrb[0].mxu0
        %v4718 = vadd.f32 %v4194, %v4717
        %4719 = vmatprep.mubr.bf16.mxu0 0
        %4720 = vmatmul.mubr.bf16.gmra.mrb[0].mxu0 %v4102
        %v4721 = vpop.f32.mrb[0].mxu0
        %v4722 = vadd.f32 %v4190, %v4721
        %v4723 = vpop.f32.mrb[0].mxu0
        %v4724 = vadd.f32 %v4194, %v4723
        %v4725 = vpop.f32.mrb[0].mxu0
        %v4726 = vadd.f32 %v4190, %v4725
        %v4727 = vpop.f32.mrb[0].mxu0
        %v4728 = vadd.f32 %v4194, %v4727
        %4729 = vmatprep.mubr.bf16.mxu0 0
        %4730 = vmatmul.mubr.bf16.gmra.mrb[0].mxu0 %v4103
        %v4731 = vpop.f32.mrb[0].mxu0
        %v4732 = vadd.f32 %v4190, %v4731
        %v4733 = vpop.f32.mrb[0].mxu0
        %v4734 = vadd.f32 %v4194, %v4733
        %v4735 = vpop.f32.mrb[0].mxu0
        %v4736 = vadd.f32 %v4190, %v4735
        %v4737 = vpop.f32.mrb[0].mxu0
        %v4738 = vadd.f32 %v4194, %v4737
        %4739 = vmatprep.mubr.bf16.mxu0 0
        %4740 = vmatmul.mubr.bf16.gmra.mrb[0].mxu0 %v4104
        %v4741 = vpop.f32.mrb[0].mxu0
        %v4742 = vadd.f32 %v4190, %v4741
        %v4743 = vpop.f32.mrb[0].mxu0
        %v4744 = vadd.f32 %v4194, %v4743
        %v4745 = vpop.f32.mrb[0].mxu0
        %v4746 = vadd.f32 %v4190, %v4745
        %v4747 = vpop.f32.mrb[0].mxu0
        %v4748 = vadd.f32 %v4194, %v4747
        %4749 = vdwg.mxu0
        %4750 = vmatprep.subr.bf16.mxu0 %v4410
        %4751 = vmatpush1.bf16.msra.mxu0 %v4409
        %4752 = vmatprep.subr.bf16.mxu0 %v4418
        %4753 = vmatpush1.bf16.msra.mxu0 %v4417
        %4754 = vmatprep.subr.bf16.mxu0 %v4426
        %4755 = vmatpush1.bf16.msra.mxu0 %v4425
        %4756 = vmatprep.subr.bf16.mxu0 %v4434
        %4757 = vmatpush1.bf16.msra.mxu0 %v4433
        %4758 = vmatprep.subr.bf16.mxu0 %v4442
        %4759 = vmatpush1.bf16.msra.mxu0 %v4441
        %4760 = vmatprep.subr.bf16.mxu0 %v4450
        %4761 = vmatpush1.bf16.msra.mxu0 %v4449
        %4762 = vmatprep.subr.bf16.mxu0 %v4458
        %4763 = vmatpush1.bf16.msra.mxu0 %v4457
        %4764 = vmatprep.subr.bf16.mxu0 %v4466
        %4765 = vmatpush1.bf16.msra.mxu0 %v4465
        %4766 = vmatprep.subr.bf16.mxu0 0
        %4767 = vmatpush1.bf16.msra.mxu0 0
        %4768 = vmatprep.subr.bf16.mxu0 0
        %4769 = vmatpush1.bf16.msra.mxu0 0
        %4770 = vmatprep.subr.bf16.mxu0 0
        %4771 = vmatpush1.bf16.msra.mxu0 0
        %4772 = vmatprep.subr.bf16.mxu0 0
        %4773 = vmatpush1.bf16.msra.mxu0 0
        %4774 = vmatprep.subr.bf16.mxu0 0
        %4775 = vmatpush1.bf16.msra.mxu0 0
        %4776 = vmatprep.subr.bf16.mxu0 0
        %4777 = vmatpush1.bf16.msra.mxu0 0
        %4778 = vmatprep.subr.bf16.mxu0 0
        %4779 = vmatpush1.bf16.msra.mxu0 0
        %4780 = vmatprep.subr.bf16.mxu0 0
        %4781 = vmatpush1.bf16.msra.mxu0 0
        %4782 = vmatprep.mubr.bf16.mxu0 0
        %4783 = vmatmul.mubr.bf16.gmra.mrb[0].mxu0 %v4101
        %v4784 = vpop.f32.mrb[0].mxu0
        %v4785 = vadd.f32 %v4198, %v4784
        %v4786 = vpop.f32.mrb[0].mxu0
        %v4787 = vadd.f32 %v4202, %v4786
        %v4788 = vpop.f32.mrb[0].mxu0
        %v4789 = vadd.f32 %v4198, %v4788
        %v4790 = vpop.f32.mrb[0].mxu0
        %v4791 = vadd.f32 %v4202, %v4790
        %4792 = vmatprep.mubr.bf16.mxu0 0
        %4793 = vmatmul.mubr.bf16.gmra.mrb[0].mxu0 %v4102
        %v4794 = vpop.f32.mrb[0].mxu0
        %v4795 = vadd.f32 %v4198, %v4794
        %v4796 = vpop.f32.mrb[0].mxu0
        %v4797 = vadd.f32 %v4202, %v4796
        %v4798 = vpop.f32.mrb[0].mxu0
        %v4799 = vadd.f32 %v4198, %v4798
        %v4800 = vpop.f32.mrb[0].mxu0
        %v4801 = vadd.f32 %v4202, %v4800
        %4802 = vmatprep.mubr.bf16.mxu0 0
        %4803 = vmatmul.mubr.bf16.gmra.mrb[0].mxu0 %v4103
        %v4804 = vpop.f32.mrb[0].mxu0
        %v4805 = vadd.f32 %v4198, %v4804
        %v4806 = vpop.f32.mrb[0].mxu0
        %v4807 = vadd.f32 %v4202, %v4806
        %v4808 = vpop.f32.mrb[0].mxu0
        %v4809 = vadd.f32 %v4198, %v4808
        %v4810 = vpop.f32.mrb[0].mxu0
        %v4811 = vadd.f32 %v4202, %v4810
        %4812 = vmatprep.mubr.bf16.mxu0 0
        %4813 = vmatmul.mubr.bf16.gmra.mrb[0].mxu0 %v4104
        %v4814 = vpop.f32.mrb[0].mxu0
        %v4815 = vadd.f32 %v4198, %v4814
        %v4816 = vpop.f32.mrb[0].mxu0
        %v4817 = vadd.f32 %v4202, %v4816
        %v4818 = vpop.f32.mrb[0].mxu0
        %v4819 = vadd.f32 %v4198, %v4818
        %v4820 = vpop.f32.mrb[0].mxu0
        %v4821 = vadd.f32 %v4202, %v4820
        %4822 = vdwg.mxu0
        %v4823 = vmul.f32 %v4712, 0.5
        %v4824 = vmul.f32 %v4714, 0.5
        %v4825 = vmul.f32 %v4785, 0.5
        %v4826 = vmul.f32 %v4787, 0.5
        %v4827 = vmul.f32 %v4716, 0.5
        %v4828 = vmul.f32 %v4718, 0.5
        %v4829 = vmul.f32 %v4789, 0.5
        %v4830 = vmul.f32 %v4791, 0.5
        %v4831 = vmul.f32 %v4722, 0.5
        %v4832 = vmul.f32 %v4724, 0.5
        %v4833 = vmul.f32 %v4795, 0.5
        %v4834 = vmul.f32 %v4797, 0.5
        %v4835 = vmul.f32 %v4726, 0.5
        %v4836 = vmul.f32 %v4728, 0.5
        %v4837 = vmul.f32 %v4799, 0.5
        %v4838 = vmul.f32 %v4801, 0.5
        %v4839 = vmul.f32 %v4732, 0.5
        %v4840 = vmul.f32 %v4734, 0.5
        %v4841 = vmul.f32 %v4805, 0.5
        %v4842 = vmul.f32 %v4807, 0.5
        %v4843 = vmul.f32 %v4736, 0.5
        %v4844 = vmul.f32 %v4738, 0.5
        %v4845 = vmul.f32 %v4809, 0.5
        %v4846 = vmul.f32 %v4811, 0.5
        %v4847 = vmul.f32 %v4742, 0.5
        %v4848 = vmul.f32 %v4744, 0.5
        %v4849 = vmul.f32 %v4815, 0.5
        %v4850 = vmul.f32 %v4817, 0.5
        %v4851 = vmul.f32 %v4746, 0.5
        %v4852 = vmul.f32 %v4748, 0.5
        %v4853 = vmul.f32 %v4819, 0.5
        %v4854 = vmul.f32 %v4821, 0.5
        %v4855 = vmul.f32 %v4712, 0.044715
        %v4856 = vmul.f32 %v4714, 0.044715
        %v4857 = vmul.f32 %v4785, 0.044715
        %v4858 = vmul.f32 %v4787, 0.044715
        %v4859 = vmul.f32 %v4716, 0.044715
        %v4860 = vmul.f32 %v4718, 0.044715
        %v4861 = vmul.f32 %v4789, 0.044715
        %v4862 = vmul.f32 %v4791, 0.044715
        %v4863 = vmul.f32 %v4722, 0.044715
        %v4864 = vmul.f32 %v4724, 0.044715
        %v4865 = vmul.f32 %v4795, 0.044715
        %v4866 = vmul.f32 %v4797, 0.044715
        %v4867 = vmul.f32 %v4726, 0.044715
        %v4868 = vmul.f32 %v4728, 0.044715
        %v4869 = vmul.f32 %v4799, 0.044715
        %v4870 = vmul.f32 %v4801, 0.044715
        %v4871 = vmul.f32 %v4732, 0.044715
        %v4872 = vmul.f32 %v4734, 0.044715
        %v4873 = vmul.f32 %v4805, 0.044715
        %v4874 = vmul.f32 %v4807, 0.044715
        %v4875 = vmul.f32 %v4736, 0.044715
        %v4876 = vmul.f32 %v4738, 0.044715
        %v4877 = vmul.f32 %v4809, 0.044715
        %v4878 = vmul.f32 %v4811, 0.044715
        %v4879 = vmul.f32 %v4742, 0.044715
        %v4880 = vmul.f32 %v4744, 0.044715
        %v4881 = vmul.f32 %v4815, 0.044715
        %v4882 = vmul.f32 %v4817, 0.044715
        %v4883 = vmul.f32 %v4746, 0.044715
        %v4884 = vmul.f32 %v4748, 0.044715
        %v4885 = vmul.f32 %v4819, 0.044715
        %v4886 = vmul.f32 %v4821, 0.044715
        %v4887 = vmul.f32 %v4855, %v4712
        %v4888 = vmul.f32 %v4856, %v4714
        %v4889 = vmul.f32 %v4857, %v4785
        %v4890 = vmul.f32 %v4858, %v4787
        %v4891 = vmul.f32 %v4859, %v4716
        %v4892 = vmul.f32 %v4860, %v4718
        %v4893 = vmul.f32 %v4861, %v4789
        %v4894 = vmul.f32 %v4862, %v4791
        %v4895 = vmul.f32 %v4863, %v4722
        %v4896 = vmul.f32 %v4864, %v4724
        %v4897 = vmul.f32 %v4865, %v4795
        %v4898 = vmul.f32 %v4866, %v4797
        %v4899 = vmul.f32 %v4867, %v4726
        %v4900 = vmul.f32 %v4868, %v4728
        %v4901 = vmul.f32 %v4869, %v4799
        %v4902 = vmul.f32 %v4870, %v4801
        %v4903 = vmul.f32 %v4871, %v4732
        %v4904 = vmul.f32 %v4872, %v4734
        %v4905 = vmul.f32 %v4873, %v4805
        %v4906 = vmul.f32 %v4874, %v4807
        %v4907 = vmul.f32 %v4875, %v4736
        %v4908 = vmul.f32 %v4876, %v4738
        %v4909 = vmul.f32 %v4877, %v4809
        %v4910 = vmul.f32 %v4878, %v4811
        %v4911 = vmul.f32 %v4879, %v4742
        %v4912 = vmul.f32 %v4880, %v4744
        %v4913 = vmul.f32 %v4881, %v4815
        %v4914 = vmul.f32 %v4882, %v4817
        %v4915 = vmul.f32 %v4883, %v4746
        %v4916 = vmul.f32 %v4884, %v4748
        %v4917 = vmul.f32 %v4885, %v4819
        %v4918 = vmul.f32 %v4886, %v4821
        %v4919 = vmul.f32 %v4887, %v4712
        %v4920 = vmul.f32 %v4888, %v4714
        %v4921 = vmul.f32 %v4889, %v4785
        %v4922 = vmul.f32 %v4890, %v4787
        %v4923 = vmul.f32 %v4891, %v4716
        %v4924 = vmul.f32 %v4892, %v4718
        %v4925 = vmul.f32 %v4893, %v4789
        %v4926 = vmul.f32 %v4894, %v4791
        %v4927 = vmul.f32 %v4895, %v4722
        %v4928 = vmul.f32 %v4896, %v4724
        %v4929 = vmul.f32 %v4897, %v4795
        %v4930 = vmul.f32 %v4898, %v4797
        %v4931 = vmul.f32 %v4899, %v4726
        %v4932 = vmul.f32 %v4900, %v4728
        %v4933 = vmul.f32 %v4901, %v4799
        %v4934 = vmul.f32 %v4902, %v4801
        %v4935 = vmul.f32 %v4903, %v4732
        %v4936 = vmul.f32 %v4904, %v4734
        %v4937 = vmul.f32 %v4905, %v4805
        %v4938 = vmul.f32 %v4906, %v4807
        %v4939 = vmul.f32 %v4907, %v4736
        %v4940 = vmul.f32 %v4908, %v4738
        %v4941 = vmul.f32 %v4909, %v4809
        %v4942 = vmul.f32 %v4910, %v4811
        %v4943 = vmul.f32 %v4911, %v4742
        %v4944 = vmul.f32 %v4912, %v4744
        %v4945 = vmul.f32 %v4913, %v4815
        %v4946 = vmul.f32 %v4914, %v4817
        %v4947 = vmul.f32 %v4915, %v4746
        %v4948 = vmul.f32 %v4916, %v4748
        %v4949 = vmul.f32 %v4917, %v4819
        %v4950 = vmul.f32 %v4918, %v4821
        %v4951 = vadd.f32 %v4712, %v4919
        %v4952 = vadd.f32 %v4714, %v4920
        %v4953 = vadd.f32 %v4785, %v4921
        %v4954 = vadd.f32 %v4787, %v4922
        %v4955 = vadd.f32 %v4716, %v4923
        %v4956 = vadd.f32 %v4718, %v4924
        %v4957 = vadd.f32 %v4789, %v4925
        %v4958 = vadd.f32 %v4791, %v4926
        %v4959 = vadd.f32 %v4722, %v4927
        %v4960 = vadd.f32 %v4724, %v4928
        %v4961 = vadd.f32 %v4795, %v4929
        %v4962 = vadd.f32 %v4797, %v4930
        %v4963 = vadd.f32 %v4726, %v4931
        %v4964 = vadd.f32 %v4728, %v4932
        %v4965 = vadd.f32 %v4799, %v4933
        %v4966 = vadd.f32 %v4801, %v4934
        %v4967 = vadd.f32 %v4732, %v4935
        %v4968 = vadd.f32 %v4734, %v4936
        %v4969 = vadd.f32 %v4805, %v4937
        %v4970 = vadd.f32 %v4807, %v4938
        %v4971 = vadd.f32 %v4736, %v4939
        %v4972 = vadd.f32 %v4738, %v4940
        %v4973 = vadd.f32 %v4809, %v4941
        %v4974 = vadd.f32 %v4811, %v4942
        %v4975 = vadd.f32 %v4742, %v4943
        %v4976 = vadd.f32 %v4744, %v4944
        %v4977 = vadd.f32 %v4815, %v4945
        %v4978 = vadd.f32 %v4817, %v4946
        %v4979 = vadd.f32 %v4746, %v4947
        %v4980 = vadd.f32 %v4748, %v4948
        %v4981 = vadd.f32 %v4819, %v4949
        %v4982 = vadd.f32 %v4821, %v4950
        %v4983 = vmul.f32 %v4951, 0.7978846
        %v4984 = vmul.f32 %v4952, 0.7978846
        %v4985 = vmul.f32 %v4953, 0.7978846
        %v4986 = vmul.f32 %v4954, 0.7978846
        %v4987 = vmul.f32 %v4955, 0.7978846
        %v4988 = vmul.f32 %v4956, 0.7978846
        %v4989 = vmul.f32 %v4957, 0.7978846
        %v4990 = vmul.f32 %v4958, 0.7978846
        %v4991 = vmul.f32 %v4959, 0.7978846
        %v4992 = vmul.f32 %v4960, 0.7978846
        %v4993 = vmul.f32 %v4961, 0.7978846
        %v4994 = vmul.f32 %v4962, 0.7978846
        %v4995 = vmul.f32 %v4963, 0.7978846
        %v4996 = vmul.f32 %v4964, 0.7978846
        %v4997 = vmul.f32 %v4965, 0.7978846
        %v4998 = vmul.f32 %v4966, 0.7978846
        %v4999 = vmul.f32 %v4967, 0.7978846
        %v5000 = vmul.f32 %v4968, 0.7978846
        %v5001 = vmul.f32 %v4969, 0.7978846
        %v5002 = vmul.f32 %v4970, 0.7978846
        %v5003 = vmul.f32 %v4971, 0.7978846
        %v5004 = vmul.f32 %v4972, 0.7978846
        %v5005 = vmul.f32 %v4973, 0.7978846
        %v5006 = vmul.f32 %v4974, 0.7978846
        %v5007 = vmul.f32 %v4975, 0.7978846
        %v5008 = vmul.f32 %v4976, 0.7978846
        %v5009 = vmul.f32 %v4977, 0.7978846
        %v5010 = vmul.f32 %v4978, 0.7978846
        %v5011 = vmul.f32 %v4979, 0.7978846
        %v5012 = vmul.f32 %v4980, 0.7978846
        %v5013 = vmul.f32 %v4981, 0.7978846
        %v5014 = vmul.f32 %v4982, 0.7978846
        %v5015 = vtanh.pop %v4983
        %v5016 = vtanh.pop %v4984
        %v5017 = vtanh.pop %v4985
        %v5018 = vtanh.pop %v4986
        %v5019 = vtanh.pop %v4987
        %v5020 = vtanh.pop %v4988
        %v5021 = vtanh.pop %v4989
        %v5022 = vtanh.pop %v4990
        %v5023 = vtanh.pop %v4991
        %v5024 = vtanh.pop %v4992
        %v5025 = vtanh.pop %v4993
        %v5026 = vtanh.pop %v4994
        %v5027 = vtanh.pop %v4995
        %v5028 = vtanh.pop %v4996
        %v5029 = vtanh.pop %v4997
        %v5030 = vtanh.pop %v4998
        %v5031 = vtanh.pop %v4999
        %v5032 = vtanh.pop %v5000
        %v5033 = vtanh.pop %v5001
        %v5034 = vtanh.pop %v5002
        %v5035 = vtanh.pop %v5003
        %v5036 = vtanh.pop %v5004
        %v5037 = vtanh.pop %v5005
        %v5038 = vtanh.pop %v5006
        %v5039 = vtanh.pop %v5007
        %v5040 = vtanh.pop %v5008
        %v5041 = vtanh.pop %v5009
        %v5042 = vtanh.pop %v5010
        %v5043 = vtanh.pop %v5011
        %v5044 = vtanh.pop %v5012
        %v5045 = vtanh.pop %v5013
        %v5046 = vtanh.pop %v5014
        %v5047 = vadd.f32 %v5015, 1.0
        %v5048 = vadd.f32 %v5016, 1.0
        %v5049 = vadd.f32 %v5017, 1.0
        %v5050 = vadd.f32 %v5018, 1.0
        %v5051 = vadd.f32 %v5019, 1.0
        %v5052 = vadd.f32 %v5020, 1.0
        %v5053 = vadd.f32 %v5021, 1.0
        %v5054 = vadd.f32 %v5022, 1.0
        %v5055 = vadd.f32 %v5023, 1.0
        %v5056 = vadd.f32 %v5024, 1.0
        %v5057 = vadd.f32 %v5025, 1.0
        %v5058 = vadd.f32 %v5026, 1.0
        %v5059 = vadd.f32 %v5027, 1.0
        %v5060 = vadd.f32 %v5028, 1.0
        %v5061 = vadd.f32 %v5029, 1.0
        %v5062 = vadd.f32 %v5030, 1.0
        %v5063 = vadd.f32 %v5031, 1.0
        %v5064 = vadd.f32 %v5032, 1.0
        %v5065 = vadd.f32 %v5033, 1.0
        %v5066 = vadd.f32 %v5034, 1.0
        %v5067 = vadd.f32 %v5035, 1.0
        %v5068 = vadd.f32 %v5036, 1.0
        %v5069 = vadd.f32 %v5037, 1.0
        %v5070 = vadd.f32 %v5038, 1.0
        %v5071 = vadd.f32 %v5039, 1.0
        %v5072 = vadd.f32 %v5040, 1.0
        %v5073 = vadd.f32 %v5041, 1.0
        %v5074 = vadd.f32 %v5042, 1.0
        %v5075 = vadd.f32 %v5043, 1.0
        %v5076 = vadd.f32 %v5044, 1.0
        %v5077 = vadd.f32 %v5045, 1.0
        %v5078 = vadd.f32 %v5046, 1.0
        %v5079 = vmul.f32 %v4823, %v5047
        %v5080 = vmul.f32 %v4824, %v5048
        %v5081 = vmul.f32 %v4825, %v5049
        %v5082 = vmul.f32 %v4826, %v5050
        %v5083 = vmul.f32 %v4827, %v5051
        %v5084 = vmul.f32 %v4828, %v5052
        %v5085 = vmul.f32 %v4829, %v5053
        %v5086 = vmul.f32 %v4830, %v5054
        %v5087 = vmul.f32 %v4831, %v5055
        %v5088 = vmul.f32 %v4832, %v5056
        %v5089 = vmul.f32 %v4833, %v5057
        %v5090 = vmul.f32 %v4834, %v5058
        %v5091 = vmul.f32 %v4835, %v5059
        %v5092 = vmul.f32 %v4836, %v5060
        %v5093 = vmul.f32 %v4837, %v5061
        %v5094 = vmul.f32 %v4838, %v5062
        %v5095 = vmul.f32 %v4839, %v5063
        %v5096 = vmul.f32 %v4840, %v5064
        %v5097 = vmul.f32 %v4841, %v5065
        %v5098 = vmul.f32 %v4842, %v5066
        %v5099 = vmul.f32 %v4843, %v5067
        %v5100 = vmul.f32 %v4844, %v5068
        %v5101 = vmul.f32 %v4845, %v5069
        %v5102 = vmul.f32 %v4846, %v5070
        %v5103 = vmul.f32 %v4847, %v5071
        %v5104 = vmul.f32 %v4848, %v5072
        %v5105 = vmul.f32 %v4849, %v5073
        %v5106 = vmul.f32 %v4850, %v5074
        %v5107 = vmul.f32 %v4851, %v5075
        %v5108 = vmul.f32 %v4852, %v5076
        %v5109 = vmul.f32 %v4853, %v5077
        %v5110 = vmul.f32 %v4854, %v5078
        %v5111 = vmul.f32 %v4566, %v5079
        %v5112 = vmul.f32 %v4568, %v5080
        %v5113 = vmul.f32 %v4639, %v5081
        %v5114 = vmul.f32 %v4641, %v5082
        %v5115 = vmul.f32 %v4570, %v5083
        %v5116 = vmul.f32 %v4572, %v5084
        %v5117 = vmul.f32 %v4643, %v5085
        %v5118 = vmul.f32 %v4645, %v5086
        %v5119 = vmul.f32 %v4576, %v5087
        %v5120 = vmul.f32 %v4578, %v5088
        %v5121 = vmul.f32 %v4649, %v5089
        %v5122 = vmul.f32 %v4651, %v5090
        %v5123 = vmul.f32 %v4580, %v5091
        %v5124 = vmul.f32 %v4582, %v5092
        %v5125 = vmul.f32 %v4653, %v5093
        %v5126 = vmul.f32 %v4655, %v5094
        %v5127 = vmul.f32 %v4586, %v5095
        %v5128 = vmul.f32 %v4588, %v5096
        %v5129 = vmul.f32 %v4659, %v5097
        %v5130 = vmul.f32 %v4661, %v5098
        %v5131 = vmul.f32 %v4590, %v5099
        %v5132 = vmul.f32 %v4592, %v5100
        %v5133 = vmul.f32 %v4663, %v5101
        %v5134 = vmul.f32 %v4665, %v5102
        %v5135 = vmul.f32 %v4596, %v5103
        %v5136 = vmul.f32 %v4598, %v5104
        %v5137 = vmul.f32 %v4669, %v5105
        %v5138 = vmul.f32 %v4671, %v5106
        %v5139 = vmul.f32 %v4600, %v5107
        %v5140 = vmul.f32 %v4602, %v5108
        %v5141 = vmul.f32 %v4673, %v5109
        %v5142 = vmul.f32 %v4675, %v5110
        %v5143 = vpack.c.bf16 %v5115, %v5111
        %v5144 = vpack.c.bf16 %v5116, %v5112
        %v5145 = vpack.c.bf16 %v5117, %v5113
        %v5146 = vpack.c.bf16 %v5118, %v5114
        %v5147 = vpack.c.bf16 %v5123, %v5119
        %v5148 = vpack.c.bf16 %v5124, %v5120
        %v5149 = vpack.c.bf16 %v5125, %v5121
        %v5150 = vpack.c.bf16 %v5126, %v5122
        %v5151 = vpack.c.bf16 %v5131, %v5127
        %v5152 = vpack.c.bf16 %v5132, %v5128
        %v5153 = vpack.c.bf16 %v5133, %v5129
        %v5154 = vpack.c.bf16 %v5134, %v5130
        %v5155 = vpack.c.bf16 %v5139, %v5135
        %v5156 = vpack.c.bf16 %v5140, %v5136
        %v5157 = vpack.c.bf16 %v5141, %v5137
        %v5158 = vpack.c.bf16 %v5142, %v5138
        %v5159 = vld [vmem:[%s51] sm:$0xf]
        %v5160 = vld [vmem:[%s51 + $0x4] sm:$0xf]
        %v5161 = vld [vmem:[%s51 + $0x8] sm:$0xf]
        %v5162 = vld [vmem:[%s51 + $0xc] sm:$0xf]
        %v5163 = vld [vmem:[%s51 + $0x10] sm:$0xf]
        %v5164 = vld [vmem:[%s51 + $0x14] sm:$0xf]
        %v5165 = vld [vmem:[%s51 + $0x18] sm:$0xf]
        %v5166 = vld [vmem:[%s51 + $0x1c] sm:$0xf]
        %v5167 = vld [vmem:[%s51 + $0x20] sm:$0xf]
        %v5168 = vld [vmem:[%s51 + $0x24] sm:$0xf]
        %v5169 = vld [vmem:[%s51 + $0x28] sm:$0xf]
        %v5170 = vld [vmem:[%s51 + $0x2c] sm:$0xf]
        %v5171 = vld [vmem:[%s51 + $0x30] sm:$0xf]
        %v5172 = vld [vmem:[%s51 + $0x34] sm:$0xf]
        %v5173 = vld [vmem:[%s51 + $0x38] sm:$0xf]
        %v5174 = vld [vmem:[%s51 + $0x3c] sm:$0xf]
        %v5175 = vld [vmem:[%s51 + $0x40] sm:$0xf]
        %v5176 = vld [vmem:[%s51 + $0x44] sm:$0xf]
        %v5177 = vld [vmem:[%s51 + $0x48] sm:$0xf]
        %v5178 = vld [vmem:[%s51 + $0x4c] sm:$0xf]
        %v5179 = vld [vmem:[%s51 + $0x50] sm:$0xf]
        %v5180 = vld [vmem:[%s51 + $0x54] sm:$0xf]
        %v5181 = vld [vmem:[%s51 + $0x58] sm:$0xf]
        %v5182 = vld [vmem:[%s51 + $0x5c] sm:$0xf]
        %v5183 = vld [vmem:[%s51 + $0x60] sm:$0xf]
        %v5184 = vld [vmem:[%s51 + $0x64] sm:$0xf]
        %v5185 = vld [vmem:[%s51 + $0x68] sm:$0xf]
        %v5186 = vld [vmem:[%s51 + $0x6c] sm:$0xf]
        %v5187 = vld [vmem:[%s51 + $0x70] sm:$0xf]
        %v5188 = vld [vmem:[%s51 + $0x74] sm:$0xf]
        %v5189 = vld [vmem:[%s51 + $0x78] sm:$0xf]
        %v5190 = vld [vmem:[%s51 + $0x7c] sm:$0xf]
        %v5191 = vld [vmem:[%s51 + $0x80] sm:$0xf]
        %v5192 = vld [vmem:[%s51 + $0x84] sm:$0xf]
        %v5193 = vld [vmem:[%s51 + $0x88] sm:$0xf]
        %v5194 = vld [vmem:[%s51 + $0x8c] sm:$0xf]
        %v5195 = vld [vmem:[%s51 + $0x90] sm:$0xf]
        %v5196 = vld [vmem:[%s51 + $0x94] sm:$0xf]
        %v5197 = vld [vmem:[%s51 + $0x98] sm:$0xf]
        %v5198 = vld [vmem:[%s51 + $0x9c] sm:$0xf]
        %v5199 = vld [vmem:[%s51 + $0xa0] sm:$0xf]
        %v5200 = vld [vmem:[%s51 + $0xa4] sm:$0xf]
        %v5201 = vld [vmem:[%s51 + $0xa8] sm:$0xf]
        %v5202 = vld [vmem:[%s51 + $0xac] sm:$0xf]
        %v5203 = vld [vmem:[%s51 + $0xb0] sm:$0xf]
        %v5204 = vld [vmem:[%s51 + $0xb4] sm:$0xf]
        %v5205 = vld [vmem:[%s51 + $0xb8] sm:$0xf]
        %v5206 = vld [vmem:[%s51 + $0xbc] sm:$0xf]
        %v5207 = vld [vmem:[%s51 + $0xc0] sm:$0xf]
        %v5208 = vld [vmem:[%s51 + $0xc4] sm:$0xf]
        %v5209 = vld [vmem:[%s51 + $0xc8] sm:$0xf]
        %v5210 = vld [vmem:[%s51 + $0xcc] sm:$0xf]
        %v5211 = vld [vmem:[%s51 + $0xd0] sm:$0xf]
        %v5212 = vld [vmem:[%s51 + $0xd4] sm:$0xf]
        %v5213 = vld [vmem:[%s51 + $0xd8] sm:$0xf]
        %v5214 = vld [vmem:[%s51 + $0xdc] sm:$0xf]
        %v5215 = vld [vmem:[%s51 + $0xe0] sm:$0xf]
        %v5216 = vld [vmem:[%s51 + $0xe4] sm:$0xf]
        %v5217 = vld [vmem:[%s51 + $0xe8] sm:$0xf]
        %v5218 = vld [vmem:[%s51 + $0xec] sm:$0xf]
        %v5219 = vld [vmem:[%s51 + $0xf0] sm:$0xf]
        %v5220 = vld [vmem:[%s51 + $0xf4] sm:$0xf]
        %v5221 = vld [vmem:[%s51 + $0xf8] sm:$0xf]
        %v5222 = vld [vmem:[%s51 + $0xfc] sm:$0xf]
        %v5223 = vld [vmem:[%s53] sm:$0x1]
        %v5225 = vlaneseq
        %v5226 = vshrl.u32 %v5225, 7
        %v5227 = vsub.s32 0, %v5226
        %v5228 = vrot.slane %v5223, %v5227
        %v5294 = vunpack.c.l.b16 %v5159
        %v5295 = vunpack.c.l.b16 %v5160
        %v5296 = vunpack.c.l.b16 %v5161
        %v5297 = vunpack.c.l.b16 %v5162
        %v5298 = vunpack.c.l.b16 %v5163
        %v5299 = vunpack.c.l.b16 %v5164
        %v5300 = vunpack.c.l.b16 %v5165
        %v5301 = vunpack.c.l.b16 %v5166
        %v5302 = vunpack.c.l.b16 %v5167
        %v5303 = vunpack.c.l.b16 %v5168
        %v5304 = vunpack.c.l.b16 %v5169
        %v5305 = vunpack.c.l.b16 %v5170
        %v5306 = vunpack.c.l.b16 %v5171
        %v5307 = vunpack.c.l.b16 %v5172
        %v5308 = vunpack.c.l.b16 %v5173
        %v5309 = vunpack.c.l.b16 %v5174
        %v5310 = vunpack.c.l.b16 %v5175
        %v5311 = vunpack.c.l.b16 %v5176
        %v5312 = vunpack.c.l.b16 %v5177
        %v5313 = vunpack.c.l.b16 %v5178
        %v5314 = vunpack.c.l.b16 %v5179
        %v5315 = vunpack.c.l.b16 %v5180
        %v5316 = vunpack.c.l.b16 %v5181
        %v5317 = vunpack.c.l.b16 %v5182
        %v5318 = vunpack.c.l.b16 %v5183
        %v5319 = vunpack.c.l.b16 %v5184
        %v5320 = vunpack.c.l.b16 %v5185
        %v5321 = vunpack.c.l.b16 %v5186
        %v5322 = vunpack.c.l.b16 %v5187
        %v5323 = vunpack.c.l.b16 %v5188
        %v5324 = vunpack.c.l.b16 %v5189
        %v5325 = vunpack.c.l.b16 %v5190
        %v5326 = vunpack.c.l.b16 %v5191
        %v5327 = vunpack.c.l.b16 %v5192
        %v5328 = vunpack.c.l.b16 %v5193
        %v5329 = vunpack.c.l.b16 %v5194
        %v5330 = vunpack.c.l.b16 %v5195
        %v5331 = vunpack.c.l.b16 %v5196
        %v5332 = vunpack.c.l.b16 %v5197
        %v5333 = vunpack.c.l.b16 %v5198
        %v5334 = vunpack.c.l.b16 %v5199
        %v5335 = vunpack.c.l.b16 %v5200
        %v5336 = vunpack.c.l.b16 %v5201
        %v5337 = vunpack.c.l.b16 %v5202
        %v5338 = vunpack.c.l.b16 %v5203
        %v5339 = vunpack.c.l.b16 %v5204
        %v5340 = vunpack.c.l.b16 %v5205
        %v5341 = vunpack.c.l.b16 %v5206
        %v5342 = vunpack.c.l.b16 %v5207
        %v5343 = vunpack.c.l.b16 %v5208
        %v5344 = vunpack.c.l.b16 %v5209
        %v5345 = vunpack.c.l.b16 %v5210
        %v5346 = vunpack.c.l.b16 %v5211
        %v5347 = vunpack.c.l.b16 %v5212
        %v5348 = vunpack.c.l.b16 %v5213
        %v5349 = vunpack.c.l.b16 %v5214
        %v5350 = vunpack.c.l.b16 %v5215
        %v5351 = vunpack.c.l.b16 %v5216
        %v5352 = vunpack.c.l.b16 %v5217
        %v5353 = vunpack.c.l.b16 %v5218
        %v5354 = vunpack.c.l.b16 %v5219
        %v5355 = vunpack.c.l.b16 %v5220
        %v5356 = vunpack.c.l.b16 %v5221
        %v5357 = vunpack.c.l.b16 %v5222
        %v5358 = vpack.c.b16 %v5295, %v5294
        %v5359 = vpack.c.b16 %v5297, %v5296
        %v5360 = vpack.c.b16 %v5299, %v5298
        %v5361 = vpack.c.b16 %v5301, %v5300
        %v5362 = vpack.c.b16 %v5303, %v5302
        %v5363 = vpack.c.b16 %v5305, %v5304
        %v5364 = vpack.c.b16 %v5307, %v5306
        %v5365 = vpack.c.b16 %v5309, %v5308
        %v5366 = vpack.c.b16 %v5311, %v5310
        %v5367 = vpack.c.b16 %v5313, %v5312
        %v5368 = vpack.c.b16 %v5315, %v5314
        %v5369 = vpack.c.b16 %v5317, %v5316
        %v5370 = vpack.c.b16 %v5319, %v5318
        %v5371 = vpack.c.b16 %v5321, %v5320
        %v5372 = vpack.c.b16 %v5323, %v5322
        %v5373 = vpack.c.b16 %v5325, %v5324
        %v5374 = vpack.c.b16 %v5327, %v5326
        %v5375 = vpack.c.b16 %v5329, %v5328
        %v5376 = vpack.c.b16 %v5331, %v5330
        %v5377 = vpack.c.b16 %v5333, %v5332
        %v5378 = vpack.c.b16 %v5335, %v5334
        %v5379 = vpack.c.b16 %v5337, %v5336
        %v5380 = vpack.c.b16 %v5339, %v5338
        %v5381 = vpack.c.b16 %v5341, %v5340
        %v5382 = vpack.c.b16 %v5343, %v5342
        %v5383 = vpack.c.b16 %v5345, %v5344
        %v5384 = vpack.c.b16 %v5347, %v5346
        %v5385 = vpack.c.b16 %v5349, %v5348
        %v5386 = vpack.c.b16 %v5351, %v5350
        %v5387 = vpack.c.b16 %v5353, %v5352
        %v5388 = vpack.c.b16 %v5355, %v5354
        %v5389 = vpack.c.b16 %v5357, %v5356
        %5422 = vmatprep.subr.bf16.mxu0 0
        %5423 = vmatpush1.bf16.msra.mxu0 %v5358
        %5424 = vmatprep.subr.bf16.mxu0 0
        %5425 = vmatpush1.bf16.msra.mxu0 %v5359
        %5426 = vmatprep.subr.bf16.mxu0 0
        %5427 = vmatpush1.bf16.msra.mxu0 %v5360
        %5428 = vmatprep.subr.bf16.mxu0 0
        %5429 = vmatpush1.bf16.msra.mxu0 %v5361
        %5430 = vmatprep.subr.bf16.mxu0 0
        %5431 = vmatpush1.bf16.msra.mxu0 %v5362
        %5432 = vmatprep.subr.bf16.mxu0 0
        %5433 = vmatpush1.bf16.msra.mxu0 %v5363
        %5434 = vmatprep.subr.bf16.mxu0 0
        %5435 = vmatpush1.bf16.msra.mxu0 %v5364
        %5436 = vmatprep.subr.bf16.mxu0 0
        %5437 = vmatpush1.bf16.msra.mxu0 %v5365
        %5438 = vmatprep.subr.bf16.mxu0 0
        %5439 = vmatpush1.bf16.msra.mxu0 %v5366
        %5440 = vmatprep.subr.bf16.mxu0 0
        %5441 = vmatpush1.bf16.msra.mxu0 %v5367
        %5442 = vmatprep.subr.bf16.mxu0 0
        %5443 = vmatpush1.bf16.msra.mxu0 %v5368
        %5444 = vmatprep.subr.bf16.mxu0 0
        %5445 = vmatpush1.bf16.msra.mxu0 %v5369
        %5446 = vmatprep.subr.bf16.mxu0 0
        %5447 = vmatpush1.bf16.msra.mxu0 %v5370
        %5448 = vmatprep.subr.bf16.mxu0 0
        %5449 = vmatpush1.bf16.msra.mxu0 %v5371
        %5450 = vmatprep.subr.bf16.mxu0 0
        %5451 = vmatpush1.bf16.msra.mxu0 %v5372
        %5452 = vmatprep.subr.bf16.mxu0 0
        %5453 = vmatpush1.bf16.msra.mxu0 %v5373
        %5454 = vmatprep.mubr.bf16.mxu0 %v5144
        %5455 = vmatmul.mubr.bf16.gmra.mrb[0].mxu0 %v5143
        %v5456 = vpop.f32.mrb[0].mxu0
        %v5457 = vadd.f32 %v5228, %v5456
        %v5458 = vpop.f32.mrb[0].mxu0
        %v5459 = vpop.f32.mrb[0].mxu0
        %v5460 = vadd.f32 %v5228, %v5459
        %v5461 = vpop.f32.mrb[0].mxu0
        %5462 = vmatprep.mubr.bf16.mxu0 %v5148
        %5463 = vmatmul.mubr.bf16.gmra.mrb[0].mxu0 %v5147
        %v5464 = vpop.f32.mrb[0].mxu0
        %v5465 = vadd.f32 %v5228, %v5464
        %v5466 = vpop.f32.mrb[0].mxu0
        %v5467 = vpop.f32.mrb[0].mxu0
        %v5468 = vadd.f32 %v5228, %v5467
        %v5469 = vpop.f32.mrb[0].mxu0
        %5470 = vmatprep.mubr.bf16.mxu0 %v5152
        %5471 = vmatmul.mubr.bf16.gmra.mrb[0].mxu0 %v5151
        %v5472 = vpop.f32.mrb[0].mxu0
        %v5473 = vadd.f32 %v5228, %v5472
        %v5474 = vpop.f32.mrb[0].mxu0
        %v5475 = vpop.f32.mrb[0].mxu0
        %v5476 = vadd.f32 %v5228, %v5475
        %v5477 = vpop.f32.mrb[0].mxu0
        %5478 = vmatprep.mubr.bf16.mxu0 %v5156
        %5479 = vmatmul.mubr.bf16.gmra.mrb[0].mxu0 %v5155
        %v5480 = vpop.f32.mrb[0].mxu0
        %v5481 = vadd.f32 %v5228, %v5480
        %v5482 = vpop.f32.mrb[0].mxu0
        %v5483 = vpop.f32.mrb[0].mxu0
        %v5484 = vadd.f32 %v5228, %v5483
        %v5485 = vpop.f32.mrb[0].mxu0
        %5486 = vdwg.mxu0
        %5487 = vmatprep.subr.bf16.mxu0 0
        %5488 = vmatpush1.bf16.msra.mxu0 %v5374
        %5489 = vmatprep.subr.bf16.mxu0 0
        %5490 = vmatpush1.bf16.msra.mxu0 %v5375
        %5491 = vmatprep.subr.bf16.mxu0 0
        %5492 = vmatpush1.bf16.msra.mxu0 %v5376
        %5493 = vmatprep.subr.bf16.mxu0 0
        %5494 = vmatpush1.bf16.msra.mxu0 %v5377
        %5495 = vmatprep.subr.bf16.mxu0 0
        %5496 = vmatpush1.bf16.msra.mxu0 %v5378
        %5497 = vmatprep.subr.bf16.mxu0 0
        %5498 = vmatpush1.bf16.msra.mxu0 %v5379
        %5499 = vmatprep.subr.bf16.mxu0 0
        %5500 = vmatpush1.bf16.msra.mxu0 %v5380
        %5501 = vmatprep.subr.bf16.mxu0 0
        %5502 = vmatpush1.bf16.msra.mxu0 %v5381
        %5503 = vmatprep.subr.bf16.mxu0 0
        %5504 = vmatpush1.bf16.msra.mxu0 %v5382
        %5505 = vmatprep.subr.bf16.mxu0 0
        %5506 = vmatpush1.bf16.msra.mxu0 %v5383
        %5507 = vmatprep.subr.bf16.mxu0 0
        %5508 = vmatpush1.bf16.msra.mxu0 %v5384
        %5509 = vmatprep.subr.bf16.mxu0 0
        %5510 = vmatpush1.bf16.msra.mxu0 %v5385
        %5511 = vmatprep.subr.bf16.mxu0 0
        %5512 = vmatpush1.bf16.msra.mxu0 %v5386
        %5513 = vmatprep.subr.bf16.mxu0 0
        %5514 = vmatpush1.bf16.msra.mxu0 %v5387
        %5515 = vmatprep.subr.bf16.mxu0 0
        %5516 = vmatpush1.bf16.msra.mxu0 %v5388
        %5517 = vmatprep.subr.bf16.mxu0 0
        %5518 = vmatpush1.bf16.msra.mxu0 %v5389
        %5519 = vmatprep.mubr.bf16.mxu0 %v5146
        %5520 = vmatmul.mubr.bf16.gmra.mrb[0].mxu0 %v5145
        %v5521 = vpop.f32.mrb[0].mxu0
        %v5522 = vadd.f32 %v5457, %v5521
        %v5523 = vpop.f32.mrb[0].mxu0
        %v5524 = vpop.f32.mrb[0].mxu0
        %v5525 = vadd.f32 %v5460, %v5524
        %v5526 = vpop.f32.mrb[0].mxu0
        %5527 = vmatprep.mubr.bf16.mxu0 %v5150
        %5528 = vmatmul.mubr.bf16.gmra.mrb[0].mxu0 %v5149
        %v5529 = vpop.f32.mrb[0].mxu0
        %v5530 = vadd.f32 %v5465, %v5529
        %v5531 = vpop.f32.mrb[0].mxu0
        %v5532 = vpop.f32.mrb[0].mxu0
        %v5533 = vadd.f32 %v5468, %v5532
        %v5534 = vpop.f32.mrb[0].mxu0
        %5535 = vmatprep.mubr.bf16.mxu0 %v5154
        %5536 = vmatmul.mubr.bf16.gmra.mrb[0].mxu0 %v5153
        %v5537 = vpop.f32.mrb[0].mxu0
        %v5538 = vadd.f32 %v5473, %v5537
        %v5539 = vpop.f32.mrb[0].mxu0
        %v5540 = vpop.f32.mrb[0].mxu0
        %v5541 = vadd.f32 %v5476, %v5540
        %v5542 = vpop.f32.mrb[0].mxu0
        %5543 = vmatprep.mubr.bf16.mxu0 %v5158
        %5544 = vmatmul.mubr.bf16.gmra.mrb[0].mxu0 %v5157
        %v5545 = vpop.f32.mrb[0].mxu0
        %v5546 = vadd.f32 %v5481, %v5545
        %v5547 = vpop.f32.mrb[0].mxu0
        %v5548 = vpop.f32.mrb[0].mxu0
        %v5549 = vadd.f32 %v5484, %v5548
        %v5550 = vpop.f32.mrb[0].mxu0
        %5551 = vdwg.mxu0
        %v5552 = vadd.f32 %v5522, %v3975
        %v5553 = vadd.f32 %v5525, %v3976
        %v5554 = vadd.f32 %v5530, %v3977
        %v5555 = vadd.f32 %v5533, %v3978
        %v5556 = vadd.f32 %v5538, %v3979
        %v5557 = vadd.f32 %v5541, %v3980
        %v5558 = vadd.f32 %v5546, %v3981
        %v5559 = vadd.f32 %v5549, %v3982
        %v5560 = vpack.c.bf16 %v5553, %v5552
        %v5561 = vpack.c.bf16 %v5555, %v5554
        %v5562 = vpack.c.bf16 %v5557, %v5556
        %v5563 = vpack.c.bf16 %v5559, %v5558
        %v5564 = vld [vmem:[%s55] sm:$0xf]
        %v5565 = vld [vmem:[%s55 + $0x4] sm:$0xf]
        %v5566 = vld [vmem:[%s55 + $0x8] sm:$0xf]
        %v5567 = vld [vmem:[%s55 + $0xc] sm:$0xf]
        %v5568 = vld [vmem:[%s55 + $0x10] sm:$0xf]
        %v5569 = vld [vmem:[%s55 + $0x14] sm:$0xf]
        %v5570 = vld [vmem:[%s55 + $0x18] sm:$0xf]
        %v5571 = vld [vmem:[%s55 + $0x1c] sm:$0xf]
        %v5572 = vld [vmem:[%s55 + $0x20] sm:$0xf]
        %v5573 = vld [vmem:[%s55 + $0x24] sm:$0xf]
        %v5574 = vld [vmem:[%s55 + $0x28] sm:$0xf]
        %v5575 = vld [vmem:[%s55 + $0x2c] sm:$0xf]
        %v5576 = vld [vmem:[%s55 + $0x30] sm:$0xf]
        %v5577 = vld [vmem:[%s55 + $0x34] sm:$0xf]
        %v5578 = vld [vmem:[%s55 + $0x38] sm:$0xf]
        %v5579 = vld [vmem:[%s55 + $0x3c] sm:$0xf]
        %v5580 = vld [vmem:[%s57] sm:$0x1]
        %v5582 = vlaneseq
        %v5583 = vshrl.u32 %v5582, 7
        %v5584 = vsub.s32 0, %v5583
        %v5585 = vrot.slane %v5580, %v5584
        %v5603 = vunpack.c.l.b16 %v5564
        %v5604 = vunpack.c.l.b16 %v5565
        %v5605 = vunpack.c.l.b16 %v5566
        %v5606 = vunpack.c.l.b16 %v5567
        %v5607 = vunpack.c.l.b16 %v5568
        %v5608 = vunpack.c.l.b16 %v5569
        %v5609 = vunpack.c.l.b16 %v5570
        %v5610 = vunpack.c.l.b16 %v5571
        %v5611 = vunpack.c.l.b16 %v5572
        %v5612 = vunpack.c.l.b16 %v5573
        %v5613 = vunpack.c.l.b16 %v5574
        %v5614 = vunpack.c.l.b16 %v5575
        %v5615 = vunpack.c.l.b16 %v5576
        %v5616 = vunpack.c.l.b16 %v5577
        %v5617 = vunpack.c.l.b16 %v5578
        %v5618 = vunpack.c.l.b16 %v5579
        %v5619 = vpack.c.b16 %v5604, %v5603
        %v5620 = vpack.c.b16 %v5606, %v5605
        %v5621 = vpack.c.b16 %v5608, %v5607
        %v5622 = vpack.c.b16 %v5610, %v5609
        %v5623 = vpack.c.b16 %v5612, %v5611
        %v5624 = vpack.c.b16 %v5614, %v5613
        %v5625 = vpack.c.b16 %v5616, %v5615
        %v5626 = vpack.c.b16 %v5618, %v5617
        %5635 = vmatprep.subr.bf16.mxu0 0
        %5636 = vmatpush1.bf16.msra.mxu0 %v5619
        %5637 = vmatprep.subr.bf16.mxu0 0
        %5638 = vmatpush1.bf16.msra.mxu0 %v5620
        %5639 = vmatprep.subr.bf16.mxu0 0
        %5640 = vmatpush1.bf16.msra.mxu0 %v5621
        %5641 = vmatprep.subr.bf16.mxu0 0
        %5642 = vmatpush1.bf16.msra.mxu0 %v5622
        %5643 = vmatprep.subr.bf16.mxu0 0
        %5644 = vmatpush1.bf16.msra.mxu0 %v5623
        %5645 = vmatprep.subr.bf16.mxu0 0
        %5646 = vmatpush1.bf16.msra.mxu0 %v5624
        %5647 = vmatprep.subr.bf16.mxu0 0
        %5648 = vmatpush1.bf16.msra.mxu0 %v5625
        %5649 = vmatprep.subr.bf16.mxu0 0
        %5650 = vmatpush1.bf16.msra.mxu0 %v5626
        %5651 = vmatprep.subr.bf16.mxu0 0
        %5652 = vmatpush1.bf16.msra.mxu0 0
        %5653 = vmatprep.subr.bf16.mxu0 0
        %5654 = vmatpush1.bf16.msra.mxu0 0
        %5655 = vmatprep.subr.bf16.mxu0 0
        %5656 = vmatpush1.bf16.msra.mxu0 0
        %5657 = vmatprep.subr.bf16.mxu0 0
        %5658 = vmatpush1.bf16.msra.mxu0 0
        %5659 = vmatprep.subr.bf16.mxu0 0
        %5660 = vmatpush1.bf16.msra.mxu0 0
        %5661 = vmatprep.subr.bf16.mxu0 0
        %5662 = vmatpush1.bf16.msra.mxu0 0
        %5663 = vmatprep.subr.bf16.mxu0 0
        %5664 = vmatpush1.bf16.msra.mxu0 0
        %5665 = vmatprep.subr.bf16.mxu0 0
        %5666 = vmatpush1.bf16.msra.mxu0 0
        %5667 = vmatprep.mubr.bf16.mxu0 0
        %5668 = vmatmul.mubr.bf16.gmra.mrb[0].mxu0 %v5560
        %v5669 = vpop.f32.mrb[0].mxu0
        %v5670 = vadd.f32 %v5585, %v5669
        %v5671 = vpop.f32.mrb[0].mxu0
        %v5672 = vpop.f32.mrb[0].mxu0
        %v5673 = vadd.f32 %v5585, %v5672
        %v5674 = vpop.f32.mrb[0].mxu0
        %5675 = vmatprep.mubr.bf16.mxu0 0
        %5676 = vmatmul.mubr.bf16.gmra.mrb[0].mxu0 %v5561
        %v5677 = vpop.f32.mrb[0].mxu0
        %v5678 = vadd.f32 %v5585, %v5677
        %v5679 = vpop.f32.mrb[0].mxu0
        %v5680 = vpop.f32.mrb[0].mxu0
        %v5681 = vadd.f32 %v5585, %v5680
        %v5682 = vpop.f32.mrb[0].mxu0
        %5683 = vmatprep.mubr.bf16.mxu0 0
        %5684 = vmatmul.mubr.bf16.gmra.mrb[0].mxu0 %v5562
        %v5685 = vpop.f32.mrb[0].mxu0
        %v5686 = vadd.f32 %v5585, %v5685
        %v5687 = vpop.f32.mrb[0].mxu0
        %v5688 = vpop.f32.mrb[0].mxu0
        %v5689 = vadd.f32 %v5585, %v5688
        %v5690 = vpop.f32.mrb[0].mxu0
        %5691 = vmatprep.mubr.bf16.mxu0 0
        %5692 = vmatmul.mubr.bf16.gmra.mrb[0].mxu0 %v5563
        %v5693 = vpop.f32.mrb[0].mxu0
        %v5694 = vadd.f32 %v5585, %v5693
        %v5695 = vpop.f32.mrb[0].mxu0
        %v5696 = vpop.f32.mrb[0].mxu0
        %v5697 = vadd.f32 %v5585, %v5696
        %v5698 = vpop.f32.mrb[0].mxu0
        %5699 = vdwg.mxu0
        %v5700 = vadd.f32 %v5670, %v902
        %v5701 = vadd.f32 %v5673, %v903
        %v5702 = vadd.f32 %v5678, %v904
        %v5703 = vadd.f32 %v5681, %v905
        %v5704 = vadd.f32 %v5686, %v906
        %v5705 = vadd.f32 %v5689, %v907
        %v5706 = vadd.f32 %v5694, %v908
        %v5707 = vadd.f32 %v5697, %v909
        %5708 = vst [vmem:[%s895] sm:$0xff] %v5700
        %5709 = vst [vmem:[%s895 + $0x8] sm:$0xff] %v5701
        %5710 = vst [vmem:[%s895 + $0x10] sm:$0xff] %v5702
        %5711 = vst [vmem:[%s895 + $0x18] sm:$0xff] %v5703
        %5712 = vst [vmem:[%s895 + $0x20] sm:$0xff] %v5704
        %5713 = vst [vmem:[%s895 + $0x28] sm:$0xff] %v5705
        %5714 = vst [vmem:[%s895 + $0x30] sm:$0xff] %v5706
        %5715 = vst [vmem:[%s895 + $0x38] sm:$0xff] %v5707
        %s5716 = sand.u32 %s695, 1
        %s5717 = scalar_lea.sflag [#allocation4], %s5716
        %s5718 = sand.u32 %s695, 1
        %s5719 = smul.addr %s5718, 64
        %s5720 = scalar_lea.vmem [#allocation3], %s5719
        // Predicated region
        $region137: #{spatial_transformer.1} parent=135 // pred_check
          %p5721 = pneg %p705
        $region138: #{spatial_transformer.1} parent=135 // pred_check_branch
          %5723 = sbr.rel (%p5721) target = $region140
        $region139: #{spatial_transformer.1} parent=135 // pred_region
          %s5725 = ssub.s32 1024, 1024
          %5726 = vsyncadd %s5717, %s5725
          %s5727 = smul.addr %s73, 8
          %s5728 = smul.addr %s5727, 128
          %s5729 = scalar_lea.hbm %s59, %s5728
          %s5730 = sshll.u32 %s5720, 4
          %s5731 = int_to_ptr.vmem [resolvable:$true] %s5730
          %5736 = dma.vmem_to_hbm [thread:$0]  %s5731, 1024, %s5729, %s5717, 128, 128, 8
        $region140: #{spatial_transformer.1} parent=135 // pred_fallthru
          _
      $region136: #{spatial_transformer.1} parent=5 // pred_fallthru
        _
      %p5737 = scmp.le.s32.totalorder 2, %s68
      // Predicated region
      $region141: #{spatial_transformer.1} parent=5 // pred_check
        %p5738 = pneg %p5737
      $region142: #{spatial_transformer.1} parent=5 // pred_check_branch
        %5740 = sbr.rel (%p5738) target = $region144
      $region143: #{spatial_transformer.1} parent=5 // pred_region
        %s5741 = ssub.s32 %s68, 2
        // Predicated region
        $region145: #{spatial_transformer.1} parent=143 // pred_check
          %p5742 = pneg %p711
        $region146: #{spatial_transformer.1} parent=143 // pred_check_branch
          %5744 = sbr.rel (%p5742) target = $region148
        $region147: #{spatial_transformer.1} parent=143 // pred_region
          %s5745 = sand.u32 %s696, 1
          %s5746 = scalar_lea.sflag [#allocation4], %s5745
          %s5747 = sand.u32 %s696, 1
          %s5748 = smul.addr %s5747, 64
          %s5749 = scalar_lea.vmem [#allocation3], %s5748
          %5750 = dma.done %s5746, 1024
        $region148: #{spatial_transformer.1} parent=143 // pred_fallthru
          _
      $region144: #{spatial_transformer.1} parent=5 // pred_fallthru
        _
    $region6: #{spatial_transformer.1} parent=1 // loop_footer
      %s72 = sadd.s32 1, %s68
    $region7: #{spatial_transformer.1} parent=1 // loop_footer_branch
      %67 = sbr.rel target = $region3
    $region8: #{spatial_transformer.1} parent=1 // loop_exit
      _
    %5751 = vsyncpa [#allocation4], 1
    %s5752 = scalar_lea.sflag [#allocation4], 1
    %5753 = vsyncpa %s5752, 1

</llo_original>
